<compile_context>
chip_gen: v6e
topology: v6e:2x2x1
jax: 0.10.0
libtpu: 0.0.40
codegen_flags: <defaults>
</compile_context>

<pallas_src>
import functools

import jax
import jax.numpy as jnp
from jax.experimental import pallas as pl
from jax.experimental.pallas import tpu as pltpu

LN_EPS = 1e-5


def _layernorm(x, gamma, beta):
    # gamma/beta broadcast against (..., C); biased variance like PyTorch LN.
    mu = jnp.mean(x, axis=-1, keepdims=True)
    var = jnp.mean((x - mu) ** 2, axis=-1, keepdims=True)
    return (x - mu) * jax.lax.rsqrt(var + LN_EPS) * gamma + beta


def block_kernel(x_ref,
                 g1_ref, b1_ref,
                 wq_ref, wk_ref, wv_ref,
                 wp_ref, bp_ref,
                 g2_ref, b2_ref,
                 w1_ref, b1f_ref,
                 w2_ref, b2f_ref,
                 out_ref,
                 *, n_head, mxu_dtype):
    """One grid step = one batch element: (T, C) block fully resident."""

    def mm(a, b):
        # MXU matmul: narrow operands, f32 accumulation.
        return jnp.dot(a.astype(mxu_dtype), b.astype(mxu_dtype),
                       preferred_element_type=jnp.float32)

    def mm_nt(a, b):
        # a @ b.T without materializing the transpose (dot_general dims).
        return jax.lax.dot_general(
            a.astype(mxu_dtype), b.astype(mxu_dtype),
            (((1,), (1,)), ((), ())),
            preferred_element_type=jnp.float32)

    x = x_ref[...].astype(jnp.float32)                       # (T, C)

    # ---- LayerNorm 1 (f32) ----
    xn = _layernorm(x, g1_ref[...], b1_ref[...])

    # ---- Multi-head self-attention (non-causal, per the torch source) ----
    # n_head == 2 in the module, so a 2-iteration static unroll is fine; the
    # 1/sqrt(hs) scale is already folded into wq, and each Q/K/V projection is
    # a full-depth-C matmul indexed on the leading (head) axis of the weights.
    heads = []
    for h in range(n_head):
        q_h = mm(xn, wq_ref[h])                              # (T, hs), scaled
        k_h = mm(xn, wk_ref[h])                              # (T, hs)
        v_h = mm(xn, wv_ref[h])                              # (T, hs)

        wei = mm_nt(q_h, k_h)                                # (T, T) scores
        wei = wei - jnp.max(wei, axis=-1, keepdims=True)
        p = jnp.exp(wei)                                     # unnormalized
        denom = jnp.sum(p, axis=-1, keepdims=True)           # (T, 1)
        # Normalize AFTER the PV matmul: (T, hs) elements instead of (T, T),
        # and exact (matches PyTorch softmax numerics).
        o_h = mm(p, v_h) / denom                             # (T, hs)
        heads.append(o_h)

    heads_cat = heads[0] if n_head == 1 else jnp.concatenate(heads, axis=-1)
    # Single dense output projection (full contraction depth C).
    sa = mm(heads_cat, wp_ref[...]) + bp_ref[...]            # (T, C)

    x1 = x + sa                                              # residual 1 (f32)

    # ---- LayerNorm 2 + FeedForward: Linear -> ReLU -> Linear ----
    xn2 = _layernorm(x1, g2_ref[...], b2_ref[...])
    h1 = jnp.maximum(mm(xn2, w1_ref[...]) + b1f_ref[...], 0.0)   # (T, 4C)
    ff = mm(h1, w2_ref[...]) + b2f_ref[...]                      # (T, C)

    out_ref[...] = (x1 + ff).astype(out_ref.dtype)           # residual 2


def _vmem_limit_bytes(T, C, n_head, w_itemsize):
    hs = C // n_head
    weights = (3 * n_head * C * hs + 9 * C * C) * w_itemsize + 16 * C * 4
    acts = 4 * (8 * T * C + 2 * T * T + 8 * T * hs + 2 * T * 4 * C)
    io = 4 * 4 * T * C                      # double-buffered x/out blocks
    est = weights + acts + io
    return int(min(max(2 * est, 8 * 1024 * 1024), 64 * 1024 * 1024))


def transformer_block(x, params, *, n_head, mxu_dtype=jnp.bfloat16):
    B, T, C = x.shape
    assert C % n_head == 0
    hs = C // n_head
    f32 = jnp.float32

    # Weights stored in the MXU operand dtype (halves their VMEM/DMA bytes in
    # the default bf16 path); the attention scale is folded into W_q so it
    # costs nothing at runtime.  LN/bias params stay f32.
    wq = (params["wq"].astype(f32) * hs ** (-0.5)).astype(mxu_dtype)
    wk = params["wk"].astype(mxu_dtype)
    wv = params["wv"].astype(mxu_dtype)
    wp = params["wp"].astype(mxu_dtype)
    w1 = params["w1"].astype(mxu_dtype)
    w2 = params["w2"].astype(mxu_dtype)
    row = lambda v: v.reshape(1, -1).astype(f32)

    operands = [
        x.astype(f32),
        row(params["g1"]), row(params["b1"]),
        wq, wk, wv,
        wp, row(params["bp"]),
        row(params["g2"]), row(params["b2"]),
        w1, row(params["b1f"]),
        w2, row(params["b2f"]),
    ]

    # Batch dim squeezed out; trailing block dims equal the full array dims,
    # so the (8, 128) block-shape constraint cannot reject arbitrary T/C.
    x_spec = pl.BlockSpec((None, T, C), lambda b: (b, 0, 0))

    def weight_specs(single_buffer):
        specs = []
        for op in operands[1:]:
            imap = (lambda nd: (lambda b: (0,) * nd))(op.ndim)
            if single_buffer:
                # Constant block index -> no pipelining benefit; keep a single
                # VMEM buffer instead of the default double-buffer.
                specs.append(pl.BlockSpec(op.shape, imap,
                                          pipeline_mode=pl.Buffered(1)))
            else:
                specs.append(pl.BlockSpec(op.shape, imap))
        return specs

    kernel = functools.partial(block_kernel, n_head=n_head, mxu_dtype=mxu_dtype)
    vmem_limit = _vmem_limit_bytes(T, C, n_head, jnp.dtype(mxu_dtype).itemsize)

    def call(single_buffer_weights):
        return pl.pallas_call(
            kernel,
            out_shape=jax.ShapeDtypeStruct((B, T, C), f32),
            grid=(B,),
            in_specs=[x_spec] + weight_specs(single_buffer_weights),
            out_specs=x_spec,
            compiler_params=pltpu.CompilerParams(
                dimension_semantics=("parallel",),
                vmem_limit_bytes=vmem_limit),
        )(*operands)

    try:
        return call(True)
    except Exception:
        # TODO(synk): drop this fallback once pipeline_mode=pl.Buffered(1) is
        # guaranteed on the deployed JAX/Mosaic version.
        return call(False)


def reference_block(x, params, *, n_head):
    """Plain-JAX f32 reference for sanity checking."""
    B, T, C = x.shape
    hs = C // n_head
    xn = _layernorm(x, params["g1"], params["b1"])
    outs = []
    for h in range(n_head):
        k = xn @ params["wk"][h]
        q = xn @ params["wq"][h]
        v = xn @ params["wv"][h]
        wei = jax.nn.softmax((q @ jnp.swapaxes(k, -1, -2)) * hs ** (-0.5), axis=-1)
        outs.append(wei @ v)
    sa = jnp.concatenate(outs, axis=-1) @ params["wp"] + params["bp"]
    x1 = x + sa
    xn2 = _layernorm(x1, params["g2"], params["b2"])
    ff = jnp.maximum(xn2 @ params["w1"] + params["b1f"], 0.0) @ params["w2"] + params["b2f"]
    return x1 + ff


def init_params(key, C, n_head):
    hs = C // n_head
    keys = jax.random.split(key, 10)
    s = lambda fan_in: 1.0 / jnp.sqrt(fan_in)
    return {
        "g1": jnp.ones((C,), jnp.float32),
        "b1": jnp.zeros((C,), jnp.float32),
        "wk": jax.random.uniform(keys[0], (n_head, C, hs), jnp.float32, -s(C), s(C)),
        "wq": jax.random.uniform(keys[1], (n_head, C, hs), jnp.float32, -s(C), s(C)),
        "wv": jax.random.uniform(keys[2], (n_head, C, hs), jnp.float32, -s(C), s(C)),
        "wp": jax.random.uniform(keys[3], (C, C), jnp.float32, -s(C), s(C)),
        "bp": jax.random.uniform(keys[4], (C,), jnp.float32, -s(C), s(C)),
        "g2": jnp.ones((C,), jnp.float32),
        "b2": jnp.zeros((C,), jnp.float32),
        "w1": jax.random.uniform(keys[5], (C, 4 * C), jnp.float32, -s(C), s(C)),
        "b1f": jax.random.uniform(keys[6], (4 * C,), jnp.float32, -s(C), s(C)),
        "w2": jax.random.uniform(keys[7], (4 * C, C), jnp.float32, -s(4 * C), s(4 * C)),
        "b2f": jax.random.uniform(keys[8], (C,), jnp.float32, -s(4 * C), s(4 * C)),
    }


if __name__ == "__main__":
    # Small shapes consistent with the module (n_head = 2); C kept a multiple
    # of 128 so the output store path is lane-dense.
    B, T, C, n_head = 2, 16, 128, 2

    key = jax.random.PRNGKey(0)
    k_x, k_p = jax.random.split(key)
    x = jax.random.normal(k_x, (B, T, C), jnp.float32)
    params = init_params(k_p, C, n_head)

    ref = reference_block(x, params, n_head=n_head)

    # Default path: bf16 MXU operands, f32 accumulation / LN / softmax / residuals.
    out = jax.block_until_ready(transformer_block(x, params, n_head=n_head))
    assert out.shape == (B, T, C)
    assert bool(jnp.allclose(out, ref, atol=1.5e-1, rtol=2e-2)), "bf16-path mismatch"

    # f32 MXU path (parity knob) — same structure, wider operands.
    out_f32 = jax.block_until_ready(
        transformer_block(x, params, n_head=n_head, mxu_dtype=jnp.float32))
    assert bool(jnp.allclose(out_f32, ref, atol=1.5e-1, rtol=2e-2)), "f32-path mismatch"

    print("KERNEL_OK")
</pallas_src>

<mosaic_0001>
module attributes {stable_mosaic.version = 11 : i64} {
  func.func @block_kernel(%arg0: i32, %arg1: memref<1x16x128xf32, #tpu.memory_space<vmem>>, %arg2: memref<1x128xf32, #tpu.memory_space<vmem>>, %arg3: memref<1x128xf32, #tpu.memory_space<vmem>>, %arg4: memref<2x128x64xbf16, #tpu.memory_space<vmem>>, %arg5: memref<2x128x64xbf16, #tpu.memory_space<vmem>>, %arg6: memref<2x128x64xbf16, #tpu.memory_space<vmem>>, %arg7: memref<128x128xbf16, #tpu.memory_space<vmem>>, %arg8: memref<1x128xf32, #tpu.memory_space<vmem>>, %arg9: memref<1x128xf32, #tpu.memory_space<vmem>>, %arg10: memref<1x128xf32, #tpu.memory_space<vmem>>, %arg11: memref<128x512xbf16, #tpu.memory_space<vmem>>, %arg12: memref<1x512xf32, #tpu.memory_space<vmem>>, %arg13: memref<512x128xbf16, #tpu.memory_space<vmem>>, %arg14: memref<1x128xf32, #tpu.memory_space<vmem>>, %arg15: memref<1x16x128xf32, #tpu.memory_space<vmem>>) attributes {dimension_semantics = [#tpu.dimension_semantics<parallel>], iteration_bounds = array<i64: 2>, scalar_prefetch = 0 : i64, scratch_operands = 0 : i64, tpu.core_type = #tpu.core_type<tc>, window_params = [{transform_indices = @transform_0, window_bounds = array<i64: 1, 16, 128>}, {pipeline_mode = #tpu.pipeline_mode<synchronous>, transform_indices = @transform_1, window_bounds = array<i64: 1, 128>}, {pipeline_mode = #tpu.pipeline_mode<synchronous>, transform_indices = @transform_2, window_bounds = array<i64: 1, 128>}, {pipeline_mode = #tpu.pipeline_mode<synchronous>, transform_indices = @transform_3, window_bounds = array<i64: 2, 128, 64>}, {pipeline_mode = #tpu.pipeline_mode<synchronous>, transform_indices = @transform_4, window_bounds = array<i64: 2, 128, 64>}, {pipeline_mode = #tpu.pipeline_mode<synchronous>, transform_indices = @transform_5, window_bounds = array<i64: 2, 128, 64>}, {pipeline_mode = #tpu.pipeline_mode<synchronous>, transform_indices = @transform_6, window_bounds = array<i64: 128, 128>}, {pipeline_mode = #tpu.pipeline_mode<synchronous>, transform_indices = @transform_7, window_bounds = array<i64: 1, 128>}, {pipeline_mode = #tpu.pipeline_mode<synchronous>, transform_indices = @transform_8, window_bounds = array<i64: 1, 128>}, {pipeline_mode = #tpu.pipeline_mode<synchronous>, transform_indices = @transform_9, window_bounds = array<i64: 1, 128>}, {pipeline_mode = #tpu.pipeline_mode<synchronous>, transform_indices = @transform_10, window_bounds = array<i64: 128, 512>}, {pipeline_mode = #tpu.pipeline_mode<synchronous>, transform_indices = @transform_11, window_bounds = array<i64: 1, 512>}, {pipeline_mode = #tpu.pipeline_mode<synchronous>, transform_indices = @transform_12, window_bounds = array<i64: 512, 128>}, {pipeline_mode = #tpu.pipeline_mode<synchronous>, transform_indices = @transform_13, window_bounds = array<i64: 1, 128>}, {transform_indices = @transform_14, window_bounds = array<i64: 1, 16, 128>}]} {
    %c0 = arith.constant 0 : index
    %c0_0 = arith.constant 0 : index
    %c0_1 = arith.constant 0 : index
    %0 = vector.load %arg1[%c0, %c0_0, %c0_1] : memref<1x16x128xf32, #tpu.memory_space<vmem>>, vector<1x16x128xf32>
    %1 = vector.shape_cast %0 : vector<1x16x128xf32> to vector<16x128xf32>
    %c0_2 = arith.constant 0 : index
    %c0_3 = arith.constant 0 : index
    %2 = vector.load %arg2[%c0_2, %c0_3] : memref<1x128xf32, #tpu.memory_space<vmem>>, vector<1x128xf32>
    %c0_4 = arith.constant 0 : index
    %c0_5 = arith.constant 0 : index
    %3 = vector.load %arg3[%c0_4, %c0_5] : memref<1x128xf32, #tpu.memory_space<vmem>>, vector<1x128xf32>
    %cst = arith.constant dense<0.000000e+00> : vector<16xf32>
    %4 = vector.multi_reduction <add>, %1, %cst [1] : vector<16x128xf32> to vector<16xf32>
    %5 = vector.shape_cast %4 : vector<16xf32> to vector<16x1xf32>
    %cst_6 = arith.constant 1.280000e+02 : f32
    %6 = vector.broadcast %cst_6 : f32 to vector<16x1xf32>
    %7 = arith.divf %5, %6 : vector<16x1xf32>
    %8 = vector.broadcast %7 : vector<16x1xf32> to vector<16x128xf32>
    %9 = arith.subf %1, %8 : vector<16x128xf32>
    %10 = arith.mulf %9, %9 : vector<16x128xf32>
    %cst_7 = arith.constant dense<0.000000e+00> : vector<16xf32>
    %11 = vector.multi_reduction <add>, %10, %cst_7 [1] : vector<16x128xf32> to vector<16xf32>
    %12 = vector.shape_cast %11 : vector<16xf32> to vector<16x1xf32>
    %cst_8 = arith.constant 1.280000e+02 : f32
    %13 = vector.broadcast %cst_8 : f32 to vector<16x1xf32>
    %14 = arith.divf %12, %13 : vector<16x1xf32>
    %15 = vector.broadcast %7 : vector<16x1xf32> to vector<16x128xf32>
    %16 = arith.subf %1, %15 : vector<16x128xf32>
    %cst_9 = arith.constant 9.99999974E-6 : f32
    %17 = vector.broadcast %cst_9 : f32 to vector<16x1xf32>
    %18 = arith.addf %14, %17 : vector<16x1xf32>
    %19 = math.rsqrt %18 : vector<16x1xf32>
    %20 = vector.broadcast %19 : vector<16x1xf32> to vector<16x128xf32>
    %21 = arith.mulf %16, %20 : vector<16x128xf32>
    %22 = vector.broadcast %2 : vector<1x128xf32> to vector<16x128xf32>
    %23 = arith.mulf %21, %22 : vector<16x128xf32>
    %24 = vector.broadcast %3 : vector<1x128xf32> to vector<16x128xf32>
    %25 = arith.addf %23, %24 : vector<16x128xf32>
    %c0_10 = arith.constant 0 : index
    %c0_11 = arith.constant 0 : index
    %c0_12 = arith.constant 0 : index
    %26 = vector.load %arg4[%c0_10, %c0_11, %c0_12] : memref<2x128x64xbf16, #tpu.memory_space<vmem>>, vector<1x128x64xbf16>
    %27 = vector.shape_cast %26 : vector<1x128x64xbf16> to vector<128x64xbf16>
    %28 = arith.truncf %25 : vector<16x128xf32> to vector<16x128xbf16>
    %cst_13 = arith.constant dense<0.000000e+00> : vector<16x64xf32>
    %29 = tpu.matmul %28, %27, %cst_13 {dimension_numbers = #tpu.dot_dimension_numbers<[1], [0], [0], [1], [0, 0, 1, 1], [], []>} : vector<16x128xbf16>, vector<128x64xbf16>, vector<16x64xf32> -> vector<16x64xf32>
    %c0_14 = arith.constant 0 : index
    %c0_15 = arith.constant 0 : index
    %c0_16 = arith.constant 0 : index
    %30 = vector.load %arg5[%c0_14, %c0_15, %c0_16] : memref<2x128x64xbf16, #tpu.memory_space<vmem>>, vector<1x128x64xbf16>
    %31 = vector.shape_cast %30 : vector<1x128x64xbf16> to vector<128x64xbf16>
    %32 = arith.truncf %25 : vector<16x128xf32> to vector<16x128xbf16>
    %cst_17 = arith.constant dense<0.000000e+00> : vector<16x64xf32>
    %33 = tpu.matmul %32, %31, %cst_17 {dimension_numbers = #tpu.dot_dimension_numbers<[1], [0], [0], [1], [0, 0, 1, 1], [], []>} : vector<16x128xbf16>, vector<128x64xbf16>, vector<16x64xf32> -> vector<16x64xf32>
    %c0_18 = arith.constant 0 : index
    %c0_19 = arith.constant 0 : index
    %c0_20 = arith.constant 0 : index
    %34 = vector.load %arg6[%c0_18, %c0_19, %c0_20] : memref<2x128x64xbf16, #tpu.memory_space<vmem>>, vector<1x128x64xbf16>
    %35 = vector.shape_cast %34 : vector<1x128x64xbf16> to vector<128x64xbf16>
    %36 = arith.truncf %25 : vector<16x128xf32> to vector<16x128xbf16>
    %cst_21 = arith.constant dense<0.000000e+00> : vector<16x64xf32>
    %37 = tpu.matmul %36, %35, %cst_21 {dimension_numbers = #tpu.dot_dimension_numbers<[1], [0], [0], [1], [0, 0, 1, 1], [], []>} : vector<16x128xbf16>, vector<128x64xbf16>, vector<16x64xf32> -> vector<16x64xf32>
    %38 = arith.truncf %29 : vector<16x64xf32> to vector<16x64xbf16>
    %39 = arith.truncf %33 : vector<16x64xf32> to vector<16x64xbf16>
    %cst_22 = arith.constant dense<0.000000e+00> : vector<16x16xf32>
    %40 = tpu.matmul %38, %39, %cst_22 {dimension_numbers = #tpu.dot_dimension_numbers<[1], [1], [0], [0], [0, 0, 1, 0], [], []>} : vector<16x64xbf16>, vector<16x64xbf16>, vector<16x16xf32> -> vector<16x16xf32>
    %cst_23 = arith.constant dense<0xFF800000> : vector<16xf32>
    %41 = vector.multi_reduction <maximumf>, %40, %cst_23 [1] : vector<16x16xf32> to vector<16xf32>
    %42 = vector.shape_cast %41 : vector<16xf32> to vector<16x1xf32>
    %43 = vector.broadcast %42 : vector<16x1xf32> to vector<16x16xf32>
    %44 = arith.subf %40, %43 : vector<16x16xf32>
    %45 = math.exp %44 : vector<16x16xf32>
    %cst_24 = arith.constant dense<0.000000e+00> : vector<16xf32>
    %46 = vector.multi_reduction <add>, %45, %cst_24 [1] : vector<16x16xf32> to vector<16xf32>
    %47 = vector.shape_cast %46 : vector<16xf32> to vector<16x1xf32>
    %48 = arith.truncf %45 : vector<16x16xf32> to vector<16x16xbf16>
    %49 = arith.truncf %37 : vector<16x64xf32> to vector<16x64xbf16>
    %cst_25 = arith.constant dense<0.000000e+00> : vector<16x64xf32>
    %50 = tpu.matmul %48, %49, %cst_25 {dimension_numbers = #tpu.dot_dimension_numbers<[1], [0], [0], [1], [0, 0, 1, 1], [], []>} : vector<16x16xbf16>, vector<16x64xbf16>, vector<16x64xf32> -> vector<16x64xf32>
    %51 = vector.broadcast %47 : vector<16x1xf32> to vector<16x64xf32>
    %52 = arith.divf %50, %51 : vector<16x64xf32>
    %c1 = arith.constant 1 : index
    %c0_26 = arith.constant 0 : index
    %c0_27 = arith.constant 0 : index
    %53 = vector.load %arg4[%c1, %c0_26, %c0_27] : memref<2x128x64xbf16, #tpu.memory_space<vmem>>, vector<1x128x64xbf16>
    %54 = vector.shape_cast %53 : vector<1x128x64xbf16> to vector<128x64xbf16>
    %55 = arith.truncf %25 : vector<16x128xf32> to vector<16x128xbf16>
    %cst_28 = arith.constant dense<0.000000e+00> : vector<16x64xf32>
    %56 = tpu.matmul %55, %54, %cst_28 {dimension_numbers = #tpu.dot_dimension_numbers<[1], [0], [0], [1], [0, 0, 1, 1], [], []>} : vector<16x128xbf16>, vector<128x64xbf16>, vector<16x64xf32> -> vector<16x64xf32>
    %c1_29 = arith.constant 1 : index
    %c0_30 = arith.constant 0 : index
    %c0_31 = arith.constant 0 : index
    %57 = vector.load %arg5[%c1_29, %c0_30, %c0_31] : memref<2x128x64xbf16, #tpu.memory_space<vmem>>, vector<1x128x64xbf16>
    %58 = vector.shape_cast %57 : vector<1x128x64xbf16> to vector<128x64xbf16>
    %59 = arith.truncf %25 : vector<16x128xf32> to vector<16x128xbf16>
    %cst_32 = arith.constant dense<0.000000e+00> : vector<16x64xf32>
    %60 = tpu.matmul %59, %58, %cst_32 {dimension_numbers = #tpu.dot_dimension_numbers<[1], [0], [0], [1], [0, 0, 1, 1], [], []>} : vector<16x128xbf16>, vector<128x64xbf16>, vector<16x64xf32> -> vector<16x64xf32>
    %c1_33 = arith.constant 1 : index
    %c0_34 = arith.constant 0 : index
    %c0_35 = arith.constant 0 : index
    %61 = vector.load %arg6[%c1_33, %c0_34, %c0_35] : memref<2x128x64xbf16, #tpu.memory_space<vmem>>, vector<1x128x64xbf16>
    %62 = vector.shape_cast %61 : vector<1x128x64xbf16> to vector<128x64xbf16>
    %63 = arith.truncf %25 : vector<16x128xf32> to vector<16x128xbf16>
    %cst_36 = arith.constant dense<0.000000e+00> : vector<16x64xf32>
    %64 = tpu.matmul %63, %62, %cst_36 {dimension_numbers = #tpu.dot_dimension_numbers<[1], [0], [0], [1], [0, 0, 1, 1], [], []>} : vector<16x128xbf16>, vector<128x64xbf16>, vector<16x64xf32> -> vector<16x64xf32>
    %65 = arith.truncf %56 : vector<16x64xf32> to vector<16x64xbf16>
    %66 = arith.truncf %60 : vector<16x64xf32> to vector<16x64xbf16>
    %cst_37 = arith.constant dense<0.000000e+00> : vector<16x16xf32>
    %67 = tpu.matmul %65, %66, %cst_37 {dimension_numbers = #tpu.dot_dimension_numbers<[1], [1], [0], [0], [0, 0, 1, 0], [], []>} : vector<16x64xbf16>, vector<16x64xbf16>, vector<16x16xf32> -> vector<16x16xf32>
    %cst_38 = arith.constant dense<0xFF800000> : vector<16xf32>
    %68 = vector.multi_reduction <maximumf>, %67, %cst_38 [1] : vector<16x16xf32> to vector<16xf32>
    %69 = vector.shape_cast %68 : vector<16xf32> to vector<16x1xf32>
    %70 = vector.broadcast %69 : vector<16x1xf32> to vector<16x16xf32>
    %71 = arith.subf %67, %70 : vector<16x16xf32>
    %72 = math.exp %71 : vector<16x16xf32>
    %cst_39 = arith.constant dense<0.000000e+00> : vector<16xf32>
    %73 = vector.multi_reduction <add>, %72, %cst_39 [1] : vector<16x16xf32> to vector<16xf32>
    %74 = vector.shape_cast %73 : vector<16xf32> to vector<16x1xf32>
    %75 = arith.truncf %72 : vector<16x16xf32> to vector<16x16xbf16>
    %76 = arith.truncf %64 : vector<16x64xf32> to vector<16x64xbf16>
    %cst_40 = arith.constant dense<0.000000e+00> : vector<16x64xf32>
    %77 = tpu.matmul %75, %76, %cst_40 {dimension_numbers = #tpu.dot_dimension_numbers<[1], [0], [0], [1], [0, 0, 1, 1], [], []>} : vector<16x16xbf16>, vector<16x64xbf16>, vector<16x64xf32> -> vector<16x64xf32>
    %78 = vector.broadcast %74 : vector<16x1xf32> to vector<16x64xf32>
    %79 = arith.divf %77, %78 : vector<16x64xf32>
    %80 = tpu.concatenate %52, %79 in 1 : vector<16x64xf32>, vector<16x64xf32> -> vector<16x128xf32>
    %c0_41 = arith.constant 0 : index
    %c0_42 = arith.constant 0 : index
    %81 = vector.load %arg7[%c0_41, %c0_42] : memref<128x128xbf16, #tpu.memory_space<vmem>>, vector<128x128xbf16>
    %82 = arith.truncf %80 : vector<16x128xf32> to vector<16x128xbf16>
    %cst_43 = arith.constant dense<0.000000e+00> : vector<16x128xf32>
    %83 = tpu.matmul %82, %81, %cst_43 {dimension_numbers = #tpu.dot_dimension_numbers<[1], [0], [0], [1], [0, 0, 1, 1], [], []>} : vector<16x128xbf16>, vector<128x128xbf16>, vector<16x128xf32> -> vector<16x128xf32>
    %c0_44 = arith.constant 0 : index
    %c0_45 = arith.constant 0 : index
    %84 = vector.load %arg8[%c0_44, %c0_45] : memref<1x128xf32, #tpu.memory_space<vmem>>, vector<1x128xf32>
    %85 = vector.broadcast %84 : vector<1x128xf32> to vector<16x128xf32>
    %86 = arith.addf %83, %85 : vector<16x128xf32>
    %87 = arith.addf %1, %86 : vector<16x128xf32>
    %c0_46 = arith.constant 0 : index
    %c0_47 = arith.constant 0 : index
    %88 = vector.load %arg9[%c0_46, %c0_47] : memref<1x128xf32, #tpu.memory_space<vmem>>, vector<1x128xf32>
    %c0_48 = arith.constant 0 : index
    %c0_49 = arith.constant 0 : index
    %89 = vector.load %arg10[%c0_48, %c0_49] : memref<1x128xf32, #tpu.memory_space<vmem>>, vector<1x128xf32>
    %cst_50 = arith.constant dense<0.000000e+00> : vector<16xf32>
    %90 = vector.multi_reduction <add>, %87, %cst_50 [1] : vector<16x128xf32> to vector<16xf32>
    %91 = vector.shape_cast %90 : vector<16xf32> to vector<16x1xf32>
    %cst_51 = arith.constant 1.280000e+02 : f32
    %92 = vector.broadcast %cst_51 : f32 to vector<16x1xf32>
    %93 = arith.divf %91, %92 : vector<16x1xf32>
    %94 = vector.broadcast %93 : vector<16x1xf32> to vector<16x128xf32>
    %95 = arith.subf %87, %94 : vector<16x128xf32>
    %96 = arith.mulf %95, %95 : vector<16x128xf32>
    %cst_52 = arith.constant dense<0.000000e+00> : vector<16xf32>
    %97 = vector.multi_reduction <add>, %96, %cst_52 [1] : vector<16x128xf32> to vector<16xf32>
    %98 = vector.shape_cast %97 : vector<16xf32> to vector<16x1xf32>
    %cst_53 = arith.constant 1.280000e+02 : f32
    %99 = vector.broadcast %cst_53 : f32 to vector<16x1xf32>
    %100 = arith.divf %98, %99 : vector<16x1xf32>
    %101 = vector.broadcast %93 : vector<16x1xf32> to vector<16x128xf32>
    %102 = arith.subf %87, %101 : vector<16x128xf32>
    %cst_54 = arith.constant 9.99999974E-6 : f32
    %103 = vector.broadcast %cst_54 : f32 to vector<16x1xf32>
    %104 = arith.addf %100, %103 : vector<16x1xf32>
    %105 = math.rsqrt %104 : vector<16x1xf32>
    %106 = vector.broadcast %105 : vector<16x1xf32> to vector<16x128xf32>
    %107 = arith.mulf %102, %106 : vector<16x128xf32>
    %108 = vector.broadcast %88 : vector<1x128xf32> to vector<16x128xf32>
    %109 = arith.mulf %107, %108 : vector<16x128xf32>
    %110 = vector.broadcast %89 : vector<1x128xf32> to vector<16x128xf32>
    %111 = arith.addf %109, %110 : vector<16x128xf32>
    %c0_55 = arith.constant 0 : index
    %c0_56 = arith.constant 0 : index
    %112 = vector.load %arg11[%c0_55, %c0_56] : memref<128x512xbf16, #tpu.memory_space<vmem>>, vector<128x512xbf16>
    %113 = arith.truncf %111 : vector<16x128xf32> to vector<16x128xbf16>
    %cst_57 = arith.constant dense<0.000000e+00> : vector<16x512xf32>
    %114 = tpu.matmul %113, %112, %cst_57 {dimension_numbers = #tpu.dot_dimension_numbers<[1], [0], [0], [1], [0, 0, 1, 1], [], []>} : vector<16x128xbf16>, vector<128x512xbf16>, vector<16x512xf32> -> vector<16x512xf32>
    %c0_58 = arith.constant 0 : index
    %c0_59 = arith.constant 0 : index
    %115 = vector.load %arg12[%c0_58, %c0_59] : memref<1x512xf32, #tpu.memory_space<vmem>>, vector<1x512xf32>
    %116 = vector.broadcast %115 : vector<1x512xf32> to vector<16x512xf32>
    %117 = arith.addf %114, %116 : vector<16x512xf32>
    %cst_60 = arith.constant 0.000000e+00 : f32
    %118 = vector.broadcast %cst_60 : f32 to vector<16x512xf32>
    %119 = arith.maximumf %117, %118 : vector<16x512xf32>
    %c0_61 = arith.constant 0 : index
    %c0_62 = arith.constant 0 : index
    %120 = vector.load %arg13[%c0_61, %c0_62] : memref<512x128xbf16, #tpu.memory_space<vmem>>, vector<512x128xbf16>
    %121 = arith.truncf %119 : vector<16x512xf32> to vector<16x512xbf16>
    %cst_63 = arith.constant dense<0.000000e+00> : vector<16x128xf32>
    %122 = tpu.matmul %121, %120, %cst_63 {dimension_numbers = #tpu.dot_dimension_numbers<[1], [0], [0], [1], [0, 0, 1, 1], [], []>} : vector<16x512xbf16>, vector<512x128xbf16>, vector<16x128xf32> -> vector<16x128xf32>
    %c0_64 = arith.constant 0 : index
    %c0_65 = arith.constant 0 : index
    %123 = vector.load %arg14[%c0_64, %c0_65] : memref<1x128xf32, #tpu.memory_space<vmem>>, vector<1x128xf32>
    %124 = vector.broadcast %123 : vector<1x128xf32> to vector<16x128xf32>
    %125 = arith.addf %122, %124 : vector<16x128xf32>
    %126 = arith.addf %87, %125 : vector<16x128xf32>
    %c0_66 = arith.constant 0 : index
    %c0_67 = arith.constant 0 : index
    %c0_68 = arith.constant 0 : index
    %127 = vector.load %arg15[%c0_66, %c0_67, %c0_68] : memref<1x16x128xf32, #tpu.memory_space<vmem>>, vector<1x16x128xf32>
    %128 = vector.shape_cast %127 : vector<1x16x128xf32> to vector<16x128xf32>
    %129 = vector.shape_cast %126 : vector<16x128xf32> to vector<1x16x128xf32>
    tpu.vector_store %arg15[%c0_66, %c0_67, %c0_68], %129 {strides = array<i32>} : memref<1x16x128xf32, #tpu.memory_space<vmem>>, vector<1x16x128xf32>,
    return
  }
  func.func @transform_0(%arg0: i32) -> (i32, i32, i32) {
    %c0_i32 = arith.constant 0 : i32
    %c0_i32_0 = arith.constant 0 : i32
    %c0_i32_1 = arith.constant 0 : i32
    return %arg0, %c0_i32, %c0_i32_0 : i32, i32, i32
  }
  func.func @transform_1(%arg0: i32) -> (i32, i32) {
    %c0_i32 = arith.constant 0 : i32
    %c0_i32_0 = arith.constant 0 : i32
    %c0_i32_1 = arith.constant 0 : i32
    return %c0_i32, %c0_i32_0 : i32, i32
  }
  func.func @transform_2(%arg0: i32) -> (i32, i32) {
    %c0_i32 = arith.constant 0 : i32
    %c0_i32_0 = arith.constant 0 : i32
    %c0_i32_1 = arith.constant 0 : i32
    return %c0_i32, %c0_i32_0 : i32, i32
  }
  func.func @transform_3(%arg0: i32) -> (i32, i32, i32) {
    %c0_i32 = arith.constant 0 : i32
    %c0_i32_0 = arith.constant 0 : i32
    %c0_i32_1 = arith.constant 0 : i32
    %c0_i32_2 = arith.constant 0 : i32
    return %c0_i32, %c0_i32_0, %c0_i32_1 : i32, i32, i32
  }
  func.func @transform_4(%arg0: i32) -> (i32, i32, i32) {
    %c0_i32 = arith.constant 0 : i32
    %c0_i32_0 = arith.constant 0 : i32
    %c0_i32_1 = arith.constant 0 : i32
    %c0_i32_2 = arith.constant 0 : i32
    return %c0_i32, %c0_i32_0, %c0_i32_1 : i32, i32, i32
  }
  func.func @transform_5(%arg0: i32) -> (i32, i32, i32) {
    %c0_i32 = arith.constant 0 : i32
    %c0_i32_0 = arith.constant 0 : i32
    %c0_i32_1 = arith.constant 0 : i32
    %c0_i32_2 = arith.constant 0 : i32
    return %c0_i32, %c0_i32_0, %c0_i32_1 : i32, i32, i32
  }
  func.func @transform_6(%arg0: i32) -> (i32, i32) {
    %c0_i32 = arith.constant 0 : i32
    %c0_i32_0 = arith.constant 0 : i32
    %c0_i32_1 = arith.constant 0 : i32
    return %c0_i32, %c0_i32_0 : i32, i32
  }
  func.func @transform_7(%arg0: i32) -> (i32, i32) {
    %c0_i32 = arith.constant 0 : i32
    %c0_i32_0 = arith.constant 0 : i32
    %c0_i32_1 = arith.constant 0 : i32
    return %c0_i32, %c0_i32_0 : i32, i32
  }
  func.func @transform_8(%arg0: i32) -> (i32, i32) {
    %c0_i32 = arith.constant 0 : i32
    %c0_i32_0 = arith.constant 0 : i32
    %c0_i32_1 = arith.constant 0 : i32
    return %c0_i32, %c0_i32_0 : i32, i32
  }
  func.func @transform_9(%arg0: i32) -> (i32, i32) {
    %c0_i32 = arith.constant 0 : i32
    %c0_i32_0 = arith.constant 0 : i32
    %c0_i32_1 = arith.constant 0 : i32
    return %c0_i32, %c0_i32_0 : i32, i32
  }
  func.func @transform_10(%arg0: i32) -> (i32, i32) {
    %c0_i32 = arith.constant 0 : i32
    %c0_i32_0 = arith.constant 0 : i32
    %c0_i32_1 = arith.constant 0 : i32
    return %c0_i32, %c0_i32_0 : i32, i32
  }
  func.func @transform_11(%arg0: i32) -> (i32, i32) {
    %c0_i32 = arith.constant 0 : i32
    %c0_i32_0 = arith.constant 0 : i32
    %c0_i32_1 = arith.constant 0 : i32
    return %c0_i32, %c0_i32_0 : i32, i32
  }
  func.func @transform_12(%arg0: i32) -> (i32, i32) {
    %c0_i32 = arith.constant 0 : i32
    %c0_i32_0 = arith.constant 0 : i32
    %c0_i32_1 = arith.constant 0 : i32
    return %c0_i32, %c0_i32_0 : i32, i32
  }
  func.func @transform_13(%arg0: i32) -> (i32, i32) {
    %c0_i32 = arith.constant 0 : i32
    %c0_i32_0 = arith.constant 0 : i32
    %c0_i32_1 = arith.constant 0 : i32
    return %c0_i32, %c0_i32_0 : i32, i32
  }
  func.func @transform_14(%arg0: i32) -> (i32, i32, i32) {
    %c0_i32 = arith.constant 0 : i32
    %c0_i32_0 = arith.constant 0 : i32
    %c0_i32_1 = arith.constant 0 : i32
    return %arg0, %c0_i32, %c0_i32_0 : i32, i32, i32
  }
}

module attributes {stable_mosaic.version = 11 : i64} {
  func.func @block_kernel(%arg0: i32, %arg1: memref<1x16x128xf32, #tpu.memory_space<vmem>>, %arg2: memref<1x128xf32, #tpu.memory_space<vmem>>, %arg3: memref<1x128xf32, #tpu.memory_space<vmem>>, %arg4: memref<2x128x64xbf16, #tpu.memory_space<vmem>>, %arg5: memref<2x128x64xbf16, #tpu.memory_space<vmem>>, %arg6: memref<2x128x64xbf16, #tpu.memory_space<vmem>>, %arg7: memref<128x128xbf16, #tpu.memory_space<vmem>>, %arg8: memref<1x128xf32, #tpu.memory_space<vmem>>, %arg9: memref<1x128xf32, #tpu.memory_space<vmem>>, %arg10: memref<1x128xf32, #tpu.memory_space<vmem>>, %arg11: memref<128x512xbf16, #tpu.memory_space<vmem>>, %arg12: memref<1x512xf32, #tpu.memory_space<vmem>>, %arg13: memref<512x128xbf16, #tpu.memory_space<vmem>>, %arg14: memref<1x128xf32, #tpu.memory_space<vmem>>, %arg15: memref<1x16x128xf32, #tpu.memory_space<vmem>>) attributes {dimension_semantics = [#tpu.dimension_semantics<parallel>], iteration_bounds = array<i64: 2>, scalar_prefetch = 0 : i64, scratch_operands = 0 : i64, tpu.core_type = #tpu.core_type<tc>, window_params = [{transform_indices = @transform_0, window_bounds = array<i64: 1, 16, 128>}, {pipeline_mode = #tpu.pipeline_mode<synchronous>, transform_indices = @transform_1, window_bounds = array<i64: 1, 128>}, {pipeline_mode = #tpu.pipeline_mode<synchronous>, transform_indices = @transform_2, window_bounds = array<i64: 1, 128>}, {pipeline_mode = #tpu.pipeline_mode<synchronous>, transform_indices = @transform_3, window_bounds = array<i64: 2, 128, 64>}, {pipeline_mode = #tpu.pipeline_mode<synchronous>, transform_indices = @transform_4, window_bounds = array<i64: 2, 128, 64>}, {pipeline_mode = #tpu.pipeline_mode<synchronous>, transform_indices = @transform_5, window_bounds = array<i64: 2, 128, 64>}, {pipeline_mode = #tpu.pipeline_mode<synchronous>, transform_indices = @transform_6, window_bounds = array<i64: 128, 128>}, {pipeline_mode = #tpu.pipeline_mode<synchronous>, transform_indices = @transform_7, window_bounds = array<i64: 1, 128>}, {pipeline_mode = #tpu.pipeline_mode<synchronous>, transform_indices = @transform_8, window_bounds = array<i64: 1, 128>}, {pipeline_mode = #tpu.pipeline_mode<synchronous>, transform_indices = @transform_9, window_bounds = array<i64: 1, 128>}, {pipeline_mode = #tpu.pipeline_mode<synchronous>, transform_indices = @transform_10, window_bounds = array<i64: 128, 512>}, {pipeline_mode = #tpu.pipeline_mode<synchronous>, transform_indices = @transform_11, window_bounds = array<i64: 1, 512>}, {pipeline_mode = #tpu.pipeline_mode<synchronous>, transform_indices = @transform_12, window_bounds = array<i64: 512, 128>}, {pipeline_mode = #tpu.pipeline_mode<synchronous>, transform_indices = @transform_13, window_bounds = array<i64: 1, 128>}, {transform_indices = @transform_14, window_bounds = array<i64: 1, 16, 128>}]} {
    %c0 = arith.constant 0 : index
    %c0_0 = arith.constant 0 : index
    %c0_1 = arith.constant 0 : index
    %0 = vector.load %arg1[%c0, %c0_0, %c0_1] : memref<1x16x128xf32, #tpu.memory_space<vmem>>, vector<1x16x128xf32>
    %1 = vector.shape_cast %0 : vector<1x16x128xf32> to vector<16x128xf32>
    %c0_2 = arith.constant 0 : index
    %c0_3 = arith.constant 0 : index
    %2 = vector.load %arg2[%c0_2, %c0_3] : memref<1x128xf32, #tpu.memory_space<vmem>>, vector<1x128xf32>
    %c0_4 = arith.constant 0 : index
    %c0_5 = arith.constant 0 : index
    %3 = vector.load %arg3[%c0_4, %c0_5] : memref<1x128xf32, #tpu.memory_space<vmem>>, vector<1x128xf32>
    %cst = arith.constant dense<0.000000e+00> : vector<16xf32>
    %4 = vector.multi_reduction <add>, %1, %cst [1] : vector<16x128xf32> to vector<16xf32>
    %5 = vector.shape_cast %4 : vector<16xf32> to vector<16x1xf32>
    %cst_6 = arith.constant 1.280000e+02 : f32
    %6 = vector.broadcast %cst_6 : f32 to vector<16x1xf32>
    %7 = arith.divf %5, %6 : vector<16x1xf32>
    %8 = vector.broadcast %7 : vector<16x1xf32> to vector<16x128xf32>
    %9 = arith.subf %1, %8 : vector<16x128xf32>
    %10 = arith.mulf %9, %9 : vector<16x128xf32>
    %cst_7 = arith.constant dense<0.000000e+00> : vector<16xf32>
    %11 = vector.multi_reduction <add>, %10, %cst_7 [1] : vector<16x128xf32> to vector<16xf32>
    %12 = vector.shape_cast %11 : vector<16xf32> to vector<16x1xf32>
    %cst_8 = arith.constant 1.280000e+02 : f32
    %13 = vector.broadcast %cst_8 : f32 to vector<16x1xf32>
    %14 = arith.divf %12, %13 : vector<16x1xf32>
    %15 = vector.broadcast %7 : vector<16x1xf32> to vector<16x128xf32>
    %16 = arith.subf %1, %15 : vector<16x128xf32>
    %cst_9 = arith.constant 9.99999974E-6 : f32
    %17 = vector.broadcast %cst_9 : f32 to vector<16x1xf32>
    %18 = arith.addf %14, %17 : vector<16x1xf32>
    %19 = math.rsqrt %18 : vector<16x1xf32>
    %20 = vector.broadcast %19 : vector<16x1xf32> to vector<16x128xf32>
    %21 = arith.mulf %16, %20 : vector<16x128xf32>
    %22 = vector.broadcast %2 : vector<1x128xf32> to vector<16x128xf32>
    %23 = arith.mulf %21, %22 : vector<16x128xf32>
    %24 = vector.broadcast %3 : vector<1x128xf32> to vector<16x128xf32>
    %25 = arith.addf %23, %24 : vector<16x128xf32>
    %c0_10 = arith.constant 0 : index
    %c0_11 = arith.constant 0 : index
    %c0_12 = arith.constant 0 : index
    %26 = vector.load %arg4[%c0_10, %c0_11, %c0_12] : memref<2x128x64xbf16, #tpu.memory_space<vmem>>, vector<1x128x64xbf16>
    %27 = vector.shape_cast %26 : vector<1x128x64xbf16> to vector<128x64xbf16>
    %28 = arith.truncf %25 : vector<16x128xf32> to vector<16x128xbf16>
    %cst_13 = arith.constant dense<0.000000e+00> : vector<16x64xf32>
    %29 = tpu.matmul %28, %27, %cst_13 {dimension_numbers = #tpu.dot_dimension_numbers<[1], [0], [0], [1], [0, 0, 1, 1], [], []>} : vector<16x128xbf16>, vector<128x64xbf16>, vector<16x64xf32> -> vector<16x64xf32>
    %c0_14 = arith.constant 0 : index
    %c0_15 = arith.constant 0 : index
    %c0_16 = arith.constant 0 : index
    %30 = vector.load %arg5[%c0_14, %c0_15, %c0_16] : memref<2x128x64xbf16, #tpu.memory_space<vmem>>, vector<1x128x64xbf16>
    %31 = vector.shape_cast %30 : vector<1x128x64xbf16> to vector<128x64xbf16>
    %32 = arith.truncf %25 : vector<16x128xf32> to vector<16x128xbf16>
    %cst_17 = arith.constant dense<0.000000e+00> : vector<16x64xf32>
    %33 = tpu.matmul %32, %31, %cst_17 {dimension_numbers = #tpu.dot_dimension_numbers<[1], [0], [0], [1], [0, 0, 1, 1], [], []>} : vector<16x128xbf16>, vector<128x64xbf16>, vector<16x64xf32> -> vector<16x64xf32>
    %c0_18 = arith.constant 0 : index
    %c0_19 = arith.constant 0 : index
    %c0_20 = arith.constant 0 : index
    %34 = vector.load %arg6[%c0_18, %c0_19, %c0_20] : memref<2x128x64xbf16, #tpu.memory_space<vmem>>, vector<1x128x64xbf16>
    %35 = vector.shape_cast %34 : vector<1x128x64xbf16> to vector<128x64xbf16>
    %36 = arith.truncf %25 : vector<16x128xf32> to vector<16x128xbf16>
    %cst_21 = arith.constant dense<0.000000e+00> : vector<16x64xf32>
    %37 = tpu.matmul %36, %35, %cst_21 {dimension_numbers = #tpu.dot_dimension_numbers<[1], [0], [0], [1], [0, 0, 1, 1], [], []>} : vector<16x128xbf16>, vector<128x64xbf16>, vector<16x64xf32> -> vector<16x64xf32>
    %38 = arith.truncf %29 : vector<16x64xf32> to vector<16x64xbf16>
    %39 = arith.truncf %33 : vector<16x64xf32> to vector<16x64xbf16>
    %cst_22 = arith.constant dense<0.000000e+00> : vector<16x16xf32>
    %40 = tpu.matmul %38, %39, %cst_22 {dimension_numbers = #tpu.dot_dimension_numbers<[1], [1], [0], [0], [0, 0, 1, 0], [], []>} : vector<16x64xbf16>, vector<16x64xbf16>, vector<16x16xf32> -> vector<16x16xf32>
    %cst_23 = arith.constant dense<0xFF800000> : vector<16xf32>
    %41 = vector.multi_reduction <maximumf>, %40, %cst_23 [1] : vector<16x16xf32> to vector<16xf32>
    %42 = vector.shape_cast %41 : vector<16xf32> to vector<16x1xf32>
    %43 = vector.broadcast %42 : vector<16x1xf32> to vector<16x16xf32>
    %44 = arith.subf %40, %43 : vector<16x16xf32>
    %45 = math.exp %44 : vector<16x16xf32>
    %cst_24 = arith.constant dense<0.000000e+00> : vector<16xf32>
    %46 = vector.multi_reduction <add>, %45, %cst_24 [1] : vector<16x16xf32> to vector<16xf32>
    %47 = vector.shape_cast %46 : vector<16xf32> to vector<16x1xf32>
    %48 = arith.truncf %45 : vector<16x16xf32> to vector<16x16xbf16>
    %49 = arith.truncf %37 : vector<16x64xf32> to vector<16x64xbf16>
    %cst_25 = arith.constant dense<0.000000e+00> : vector<16x64xf32>
    %50 = tpu.matmul %48, %49, %cst_25 {dimension_numbers = #tpu.dot_dimension_numbers<[1], [0], [0], [1], [0, 0, 1, 1], [], []>} : vector<16x16xbf16>, vector<16x64xbf16>, vector<16x64xf32> -> vector<16x64xf32>
    %51 = vector.broadcast %47 : vector<16x1xf32> to vector<16x64xf32>
    %52 = arith.divf %50, %51 : vector<16x64xf32>
    %c1 = arith.constant 1 : index
    %c0_26 = arith.constant 0 : index
    %c0_27 = arith.constant 0 : index
    %53 = vector.load %arg4[%c1, %c0_26, %c0_27] : memref<2x128x64xbf16, #tpu.memory_space<vmem>>, vector<1x128x64xbf16>
    %54 = vector.shape_cast %53 : vector<1x128x64xbf16> to vector<128x64xbf16>
    %55 = arith.truncf %25 : vector<16x128xf32> to vector<16x128xbf16>
    %cst_28 = arith.constant dense<0.000000e+00> : vector<16x64xf32>
    %56 = tpu.matmul %55, %54, %cst_28 {dimension_numbers = #tpu.dot_dimension_numbers<[1], [0], [0], [1], [0, 0, 1, 1], [], []>} : vector<16x128xbf16>, vector<128x64xbf16>, vector<16x64xf32> -> vector<16x64xf32>
    %c1_29 = arith.constant 1 : index
    %c0_30 = arith.constant 0 : index
    %c0_31 = arith.constant 0 : index
    %57 = vector.load %arg5[%c1_29, %c0_30, %c0_31] : memref<2x128x64xbf16, #tpu.memory_space<vmem>>, vector<1x128x64xbf16>
    %58 = vector.shape_cast %57 : vector<1x128x64xbf16> to vector<128x64xbf16>
    %59 = arith.truncf %25 : vector<16x128xf32> to vector<16x128xbf16>
    %cst_32 = arith.constant dense<0.000000e+00> : vector<16x64xf32>
    %60 = tpu.matmul %59, %58, %cst_32 {dimension_numbers = #tpu.dot_dimension_numbers<[1], [0], [0], [1], [0, 0, 1, 1], [], []>} : vector<16x128xbf16>, vector<128x64xbf16>, vector<16x64xf32> -> vector<16x64xf32>
    %c1_33 = arith.constant 1 : index
    %c0_34 = arith.constant 0 : index
    %c0_35 = arith.constant 0 : index
    %61 = vector.load %arg6[%c1_33, %c0_34, %c0_35] : memref<2x128x64xbf16, #tpu.memory_space<vmem>>, vector<1x128x64xbf16>
    %62 = vector.shape_cast %61 : vector<1x128x64xbf16> to vector<128x64xbf16>
    %63 = arith.truncf %25 : vector<16x128xf32> to vector<16x128xbf16>
    %cst_36 = arith.constant dense<0.000000e+00> : vector<16x64xf32>
    %64 = tpu.matmul %63, %62, %cst_36 {dimension_numbers = #tpu.dot_dimension_numbers<[1], [0], [0], [1], [0, 0, 1, 1], [], []>} : vector<16x128xbf16>, vector<128x64xbf16>, vector<16x64xf32> -> vector<16x64xf32>
    %65 = arith.truncf %56 : vector<16x64xf32> to vector<16x64xbf16>
    %66 = arith.truncf %60 : vector<16x64xf32> to vector<16x64xbf16>
    %cst_37 = arith.constant dense<0.000000e+00> : vector<16x16xf32>
    %67 = tpu.matmul %65, %66, %cst_37 {dimension_numbers = #tpu.dot_dimension_numbers<[1], [1], [0], [0], [0, 0, 1, 0], [], []>} : vector<16x64xbf16>, vector<16x64xbf16>, vector<16x16xf32> -> vector<16x16xf32>
    %cst_38 = arith.constant dense<0xFF800000> : vector<16xf32>
    %68 = vector.multi_reduction <maximumf>, %67, %cst_38 [1] : vector<16x16xf32> to vector<16xf32>
    %69 = vector.shape_cast %68 : vector<16xf32> to vector<16x1xf32>
    %70 = vector.broadcast %69 : vector<16x1xf32> to vector<16x16xf32>
    %71 = arith.subf %67, %70 : vector<16x16xf32>
    %72 = math.exp %71 : vector<16x16xf32>
    %cst_39 = arith.constant dense<0.000000e+00> : vector<16xf32>
    %73 = vector.multi_reduction <add>, %72, %cst_39 [1] : vector<16x16xf32> to vector<16xf32>
    %74 = vector.shape_cast %73 : vector<16xf32> to vector<16x1xf32>
    %75 = arith.truncf %72 : vector<16x16xf32> to vector<16x16xbf16>
    %76 = arith.truncf %64 : vector<16x64xf32> to vector<16x64xbf16>
    %cst_40 = arith.constant dense<0.000000e+00> : vector<16x64xf32>
    %77 = tpu.matmul %75, %76, %cst_40 {dimension_numbers = #tpu.dot_dimension_numbers<[1], [0], [0], [1], [0, 0, 1, 1], [], []>} : vector<16x16xbf16>, vector<16x64xbf16>, vector<16x64xf32> -> vector<16x64xf32>
    %78 = vector.broadcast %74 : vector<16x1xf32> to vector<16x64xf32>
    %79 = arith.divf %77, %78 : vector<16x64xf32>
    %80 = tpu.concatenate %52, %79 in 1 : vector<16x64xf32>, vector<16x64xf32> -> vector<16x128xf32>
    %c0_41 = arith.constant 0 : index
    %c0_42 = arith.constant 0 : index
    %81 = vector.load %arg7[%c0_41, %c0_42] : memref<128x128xbf16, #tpu.memory_space<vmem>>, vector<128x128xbf16>
    %82 = arith.truncf %80 : vector<16x128xf32> to vector<16x128xbf16>
    %cst_43 = arith.constant dense<0.000000e+00> : vector<16x128xf32>
    %83 = tpu.matmul %82, %81, %cst_43 {dimension_numbers = #tpu.dot_dimension_numbers<[1], [0], [0], [1], [0, 0, 1, 1], [], []>} : vector<16x128xbf16>, vector<128x128xbf16>, vector<16x128xf32> -> vector<16x128xf32>
    %c0_44 = arith.constant 0 : index
    %c0_45 = arith.constant 0 : index
    %84 = vector.load %arg8[%c0_44, %c0_45] : memref<1x128xf32, #tpu.memory_space<vmem>>, vector<1x128xf32>
    %85 = vector.broadcast %84 : vector<1x128xf32> to vector<16x128xf32>
    %86 = arith.addf %83, %85 : vector<16x128xf32>
    %87 = arith.addf %1, %86 : vector<16x128xf32>
    %c0_46 = arith.constant 0 : index
    %c0_47 = arith.constant 0 : index
    %88 = vector.load %arg9[%c0_46, %c0_47] : memref<1x128xf32, #tpu.memory_space<vmem>>, vector<1x128xf32>
    %c0_48 = arith.constant 0 : index
    %c0_49 = arith.constant 0 : index
    %89 = vector.load %arg10[%c0_48, %c0_49] : memref<1x128xf32, #tpu.memory_space<vmem>>, vector<1x128xf32>
    %cst_50 = arith.constant dense<0.000000e+00> : vector<16xf32>
    %90 = vector.multi_reduction <add>, %87, %cst_50 [1] : vector<16x128xf32> to vector<16xf32>
    %91 = vector.shape_cast %90 : vector<16xf32> to vector<16x1xf32>
    %cst_51 = arith.constant 1.280000e+02 : f32
    %92 = vector.broadcast %cst_51 : f32 to vector<16x1xf32>
    %93 = arith.divf %91, %92 : vector<16x1xf32>
    %94 = vector.broadcast %93 : vector<16x1xf32> to vector<16x128xf32>
    %95 = arith.subf %87, %94 : vector<16x128xf32>
    %96 = arith.mulf %95, %95 : vector<16x128xf32>
    %cst_52 = arith.constant dense<0.000000e+00> : vector<16xf32>
    %97 = vector.multi_reduction <add>, %96, %cst_52 [1] : vector<16x128xf32> to vector<16xf32>
    %98 = vector.shape_cast %97 : vector<16xf32> to vector<16x1xf32>
    %cst_53 = arith.constant 1.280000e+02 : f32
    %99 = vector.broadcast %cst_53 : f32 to vector<16x1xf32>
    %100 = arith.divf %98, %99 : vector<16x1xf32>
    %101 = vector.broadcast %93 : vector<16x1xf32> to vector<16x128xf32>
    %102 = arith.subf %87, %101 : vector<16x128xf32>
    %cst_54 = arith.constant 9.99999974E-6 : f32
    %103 = vector.broadcast %cst_54 : f32 to vector<16x1xf32>
    %104 = arith.addf %100, %103 : vector<16x1xf32>
    %105 = math.rsqrt %104 : vector<16x1xf32>
    %106 = vector.broadcast %105 : vector<16x1xf32> to vector<16x128xf32>
    %107 = arith.mulf %102, %106 : vector<16x128xf32>
    %108 = vector.broadcast %88 : vector<1x128xf32> to vector<16x128xf32>
    %109 = arith.mulf %107, %108 : vector<16x128xf32>
    %110 = vector.broadcast %89 : vector<1x128xf32> to vector<16x128xf32>
    %111 = arith.addf %109, %110 : vector<16x128xf32>
    %c0_55 = arith.constant 0 : index
    %c0_56 = arith.constant 0 : index
    %112 = vector.load %arg11[%c0_55, %c0_56] : memref<128x512xbf16, #tpu.memory_space<vmem>>, vector<128x512xbf16>
    %113 = arith.truncf %111 : vector<16x128xf32> to vector<16x128xbf16>
    %cst_57 = arith.constant dense<0.000000e+00> : vector<16x512xf32>
    %114 = tpu.matmul %113, %112, %cst_57 {dimension_numbers = #tpu.dot_dimension_numbers<[1], [0], [0], [1], [0, 0, 1, 1], [], []>} : vector<16x128xbf16>, vector<128x512xbf16>, vector<16x512xf32> -> vector<16x512xf32>
    %c0_58 = arith.constant 0 : index
    %c0_59 = arith.constant 0 : index
    %115 = vector.load %arg12[%c0_58, %c0_59] : memref<1x512xf32, #tpu.memory_space<vmem>>, vector<1x512xf32>
    %116 = vector.broadcast %115 : vector<1x512xf32> to vector<16x512xf32>
    %117 = arith.addf %114, %116 : vector<16x512xf32>
    %cst_60 = arith.constant 0.000000e+00 : f32
    %118 = vector.broadcast %cst_60 : f32 to vector<16x512xf32>
    %119 = arith.maximumf %117, %118 : vector<16x512xf32>
    %c0_61 = arith.constant 0 : index
    %c0_62 = arith.constant 0 : index
    %120 = vector.load %arg13[%c0_61, %c0_62] : memref<512x128xbf16, #tpu.memory_space<vmem>>, vector<512x128xbf16>
    %121 = arith.truncf %119 : vector<16x512xf32> to vector<16x512xbf16>
    %cst_63 = arith.constant dense<0.000000e+00> : vector<16x128xf32>
    %122 = tpu.matmul %121, %120, %cst_63 {dimension_numbers = #tpu.dot_dimension_numbers<[1], [0], [0], [1], [0, 0, 1, 1], [], []>} : vector<16x512xbf16>, vector<512x128xbf16>, vector<16x128xf32> -> vector<16x128xf32>
    %c0_64 = arith.constant 0 : index
    %c0_65 = arith.constant 0 : index
    %123 = vector.load %arg14[%c0_64, %c0_65] : memref<1x128xf32, #tpu.memory_space<vmem>>, vector<1x128xf32>
    %124 = vector.broadcast %123 : vector<1x128xf32> to vector<16x128xf32>
    %125 = arith.addf %122, %124 : vector<16x128xf32>
    %126 = arith.addf %87, %125 : vector<16x128xf32>
    %c0_66 = arith.constant 0 : index
    %c0_67 = arith.constant 0 : index
    %c0_68 = arith.constant 0 : index
    %127 = vector.load %arg15[%c0_66, %c0_67, %c0_68] : memref<1x16x128xf32, #tpu.memory_space<vmem>>, vector<1x16x128xf32>
    %128 = vector.shape_cast %127 : vector<1x16x128xf32> to vector<16x128xf32>
    %129 = vector.shape_cast %126 : vector<16x128xf32> to vector<1x16x128xf32>
    tpu.vector_store %arg15[%c0_66, %c0_67, %c0_68], %129 {strides = array<i32>} : memref<1x16x128xf32, #tpu.memory_space<vmem>>, vector<1x16x128xf32>,
    return
  }
  func.func @transform_0(%arg0: i32) -> (i32, i32, i32) {
    %c0_i32 = arith.constant 0 : i32
    %c0_i32_0 = arith.constant 0 : i32
    %c0_i32_1 = arith.constant 0 : i32
    return %arg0, %c0_i32, %c0_i32_0 : i32, i32, i32
  }
  func.func @transform_1(%arg0: i32) -> (i32, i32) {
    %c0_i32 = arith.constant 0 : i32
    %c0_i32_0 = arith.constant 0 : i32
    %c0_i32_1 = arith.constant 0 : i32
    return %c0_i32, %c0_i32_0 : i32, i32
  }
  func.func @transform_2(%arg0: i32) -> (i32, i32) {
    %c0_i32 = arith.constant 0 : i32
    %c0_i32_0 = arith.constant 0 : i32
    %c0_i32_1 = arith.constant 0 : i32
    return %c0_i32, %c0_i32_0 : i32, i32
  }
  func.func @transform_3(%arg0: i32) -> (i32, i32, i32) {
    %c0_i32 = arith.constant 0 : i32
    %c0_i32_0 = arith.constant 0 : i32
    %c0_i32_1 = arith.constant 0 : i32
    %c0_i32_2 = arith.constant 0 : i32
    return %c0_i32, %c0_i32_0, %c0_i32_1 : i32, i32, i32
  }
  func.func @transform_4(%arg0: i32) -> (i32, i32, i32) {
    %c0_i32 = arith.constant 0 : i32
    %c0_i32_0 = arith.constant 0 : i32
    %c0_i32_1 = arith.constant 0 : i32
    %c0_i32_2 = arith.constant 0 : i32
    return %c0_i32, %c0_i32_0, %c0_i32_1 : i32, i32, i32
  }
  func.func @transform_5(%arg0: i32) -> (i32, i32, i32) {
    %c0_i32 = arith.constant 0 : i32
    %c0_i32_0 = arith.constant 0 : i32
    %c0_i32_1 = arith.constant 0 : i32
    %c0_i32_2 = arith.constant 0 : i32
    return %c0_i32, %c0_i32_0, %c0_i32_1 : i32, i32, i32
  }
  func.func @transform_6(%arg0: i32) -> (i32, i32) {
    %c0_i32 = arith.constant 0 : i32
    %c0_i32_0 = arith.constant 0 : i32
    %c0_i32_1 = arith.constant 0 : i32
    return %c0_i32, %c0_i32_0 : i32, i32
  }
  func.func @transform_7(%arg0: i32) -> (i32, i32) {
    %c0_i32 = arith.constant 0 : i32
    %c0_i32_0 = arith.constant 0 : i32
    %c0_i32_1 = arith.constant 0 : i32
    return %c0_i32, %c0_i32_0 : i32, i32
  }
  func.func @transform_8(%arg0: i32) -> (i32, i32) {
    %c0_i32 = arith.constant 0 : i32
    %c0_i32_0 = arith.constant 0 : i32
    %c0_i32_1 = arith.constant 0 : i32
    return %c0_i32, %c0_i32_0 : i32, i32
  }
  func.func @transform_9(%arg0: i32) -> (i32, i32) {
    %c0_i32 = arith.constant 0 : i32
    %c0_i32_0 = arith.constant 0 : i32
    %c0_i32_1 = arith.constant 0 : i32
    return %c0_i32, %c0_i32_0 : i32, i32
  }
  func.func @transform_10(%arg0: i32) -> (i32, i32) {
    %c0_i32 = arith.constant 0 : i32
    %c0_i32_0 = arith.constant 0 : i32
    %c0_i32_1 = arith.constant 0 : i32
    return %c0_i32, %c0_i32_0 : i32, i32
  }
  func.func @transform_11(%arg0: i32) -> (i32, i32) {
    %c0_i32 = arith.constant 0 : i32
    %c0_i32_0 = arith.constant 0 : i32
    %c0_i32_1 = arith.constant 0 : i32
    return %c0_i32, %c0_i32_0 : i32, i32
  }
  func.func @transform_12(%arg0: i32) -> (i32, i32) {
    %c0_i32 = arith.constant 0 : i32
    %c0_i32_0 = arith.constant 0 : i32
    %c0_i32_1 = arith.constant 0 : i32
    return %c0_i32, %c0_i32_0 : i32, i32
  }
  func.func @transform_13(%arg0: i32) -> (i32, i32) {
    %c0_i32 = arith.constant 0 : i32
    %c0_i32_0 = arith.constant 0 : i32
    %c0_i32_1 = arith.constant 0 : i32
    return %c0_i32, %c0_i32_0 : i32, i32
  }
  func.func @transform_14(%arg0: i32) -> (i32, i32, i32) {
    %c0_i32 = arith.constant 0 : i32
    %c0_i32_0 = arith.constant 0 : i32
    %c0_i32_1 = arith.constant 0 : i32
    return %arg0, %c0_i32, %c0_i32_0 : i32, i32, i32
  }
}

</mosaic_0001>

<llo_original>
// kernel: tpu_custom_call.1
$region0: #{tpu_custom_call.1}
  #allocation0 [shape = 'u32[]', space=smem, size = 0x4, offset = 0x4, fixed_abs, tag = 'smem constant byte address 0x4 - core index']
  #allocation1 [shape = 'u32[144,128]{1,0:T(1,128)}', space=vmem, size = 0x12000, scoped, tag = 'internal scratch']
  %s0 = inlined_call_operand.hbm [shape: f32[2,16,128], index: 0, kind: input, shape index: {}]
  %s1 = inlined_call_operand.vmem [shape: f32[1,128], index: 1, kind: input, shape index: {}]
  %s2 = inlined_call_operand.vmem [shape: f32[1,128], index: 2, kind: input, shape index: {}]
  %s3 = inlined_call_operand.vmem [shape: bf16[2,128,64], index: 3, kind: input, shape index: {}]
  %s4 = inlined_call_operand.vmem [shape: bf16[2,128,64], index: 4, kind: input, shape index: {}]
  %s5 = inlined_call_operand.vmem [shape: bf16[2,128,64], index: 5, kind: input, shape index: {}]
  %s6 = inlined_call_operand.vmem [shape: bf16[128,128], index: 6, kind: input, shape index: {}]
  %s7 = inlined_call_operand.vmem [shape: f32[1,128], index: 7, kind: input, shape index: {}]
  %s8 = inlined_call_operand.vmem [shape: f32[1,128], index: 8, kind: input, shape index: {}]
  %s9 = inlined_call_operand.vmem [shape: f32[1,128], index: 9, kind: input, shape index: {}]
  %s10 = inlined_call_operand.vmem [shape: bf16[128,512], index: 10, kind: input, shape index: {}]
  %s11 = inlined_call_operand.vmem [shape: f32[1,512], index: 11, kind: input, shape index: {}]
  %s12 = inlined_call_operand.vmem [shape: bf16[512,128], index: 12, kind: input, shape index: {}]
  %s13 = inlined_call_operand.vmem [shape: f32[1,128], index: 13, kind: input, shape index: {}]
  %s14 = inlined_call_operand.hbm [shape: f32[2,16,128], index: 14, kind: output, shape index: {}]
  %s15 = sld [smem:[#allocation0]]
  $region93: #{tpu_custom_call.1} parent=0
    _
  %s17 = ssub.s32 1, %s15
  %s18 = scalar_select 0, %s17, %s15
  $region1: #{tpu_custom_call.1} parent=0
    #allocation2 [shape = 'u8[16384]{0}', space=vmem, size = 0x4000, scoped, tag = 'input window, operand 0']
    #allocation3 [shape = 's32[2]{0}', space=sflag, size = 0x8, scoped, tag = 'scoped memory for tpu_custom_call.1']
    #allocation4 [shape = 's32[2]{0}', space=sflag, size = 0x8, scoped, tag = 'scoped memory for tpu_custom_call.1']
    #allocation5 [shape = 'u8[16384]{0}', space=vmem, size = 0x4000, scoped, tag = 'output window, operand 0']
    %19 = vsyncpa [#allocation3], 0
    %s20 = scalar_lea.sflag [#allocation3], 1
    %21 = vsyncpa %s20, 0
    %22 = vsyncpa [#allocation4], 0
    %s23 = scalar_lea.sflag [#allocation4], 1
    %24 = vsyncpa %s23, 0
    loop: start=0, step=1, limit=4
    $region2: #{tpu_custom_call.1} parent=1 // loop_pre_header
      _
    $region3: #{tpu_custom_call.1} parent=1 // loop_header
      %s26 = sphi 0, %s30
      %p27 = scmp.ge.s32.totalorder %s26, 4
      %s36 = sphi 0, %s38
      %s39 = sphi 0, %s36
      %s40 = sphi 0, %s39
      %s56 = sphi 0, %s40
      %s60 = sphi 0, %s60
      %s62 = sphi 0, %s60
      %s63 = sphi 0, %s62
      %s77 = sphi 0, %s63
      %s81 = sphi 0, %s81
      %s83 = sphi 0, %s81
      %s84 = sphi 0, %s83
      %s98 = sphi 0, %s84
      %s102 = sphi 0, %s102
      %s104 = sphi 0, %s102
      %s105 = sphi 0, %s104
      %s119 = sphi 0, %s105
      %s123 = sphi 0, %s123
      %s125 = sphi 0, %s123
      %s126 = sphi 0, %s125
      %s140 = sphi 0, %s126
      %s144 = sphi 0, %s144
      %s146 = sphi 0, %s144
      %s147 = sphi 0, %s146
      %s161 = sphi 0, %s147
      %s165 = sphi 0, %s165
      %s167 = sphi 0, %s165
      %s168 = sphi 0, %s167
      %s182 = sphi 0, %s168
      %s186 = sphi 0, %s186
      %s188 = sphi 0, %s186
      %s189 = sphi 0, %s188
      %s203 = sphi 0, %s189
      %s207 = sphi 0, %s207
      %s209 = sphi 0, %s207
      %s210 = sphi 0, %s209
      %s224 = sphi 0, %s210
      %s228 = sphi 0, %s228
      %s230 = sphi 0, %s228
      %s231 = sphi 0, %s230
      %s245 = sphi 0, %s231
      %s249 = sphi 0, %s249
      %s251 = sphi 0, %s249
      %s252 = sphi 0, %s251
      %s266 = sphi 0, %s252
      %s270 = sphi 0, %s270
      %s272 = sphi 0, %s270
      %s273 = sphi 0, %s272
      %s287 = sphi 0, %s273
      %s291 = sphi 0, %s291
      %s293 = sphi 0, %s291
      %s294 = sphi 0, %s293
      %s308 = sphi 0, %s294
      %s312 = sphi 0, %s312
      %s314 = sphi 0, %s312
      %s315 = sphi 0, %s314
      %s329 = sphi 0, %s315
      %s335 = sphi 0, %s337
      %s338 = sphi 0, %s335
      %s339 = sphi 0, %s338
      %s355 = sphi 0, %s339
    $region4: #{tpu_custom_call.1} parent=1 // loop_header_branch
      %29 = sbr.rel (%p27) target = $region8
    $region5: #{tpu_custom_call.1} parent=1 // loop_body
      %s31 = ssub.s32 %s26, 1
      %s32 = ssub.s32 %s26, 2
      %s33 = sadd.s32 %s26, 1
      %s34 = ssub.s32 %s26, %s33
      %p35 = scmp.eq.s32.totalorder %s34, 0
      %s37 = sadd.s32 %s36, 1
      %s38 = scalar_select %p35, %s36, %s37
      %p41 = pneg %p35
      %p42 = scmp.eq.s32.totalorder %s26, 1
      %p43 = por %p41, %p42
      %p44 = scmp.ne.s32.totalorder %s36, %s39
      %p45 = scmp.eq.s32.totalorder %s26, 0
      %p46 = por %p44, %p45
      %p47 = scmp.ne.s32.totalorder %s36, %s39
      %p48 = scmp.eq.s32.totalorder %s31, 1
      %p49 = por %p47, %p48
      %p50 = scmp.ne.s32.totalorder %s39, %s40
      %p51 = scmp.eq.s32.totalorder %s31, 0
      %p52 = por %p50, %p51
      %p53 = scmp.ne.s32.totalorder %s39, %s40
      %p54 = scmp.eq.s32.totalorder %s32, 1
      %p55 = por %p53, %p54
      %p57 = scmp.ne.s32.totalorder %s40, %s56
      %p58 = scmp.eq.s32.totalorder %s32, 0
      %p59 = por %p57, %p58
      %s61 = sadd.s32 %s60, 1
      %p64 = scmp.eq.s32.totalorder %s26, 1
      %p65 = scmp.ne.s32.totalorder %s60, %s62
      %p66 = scmp.eq.s32.totalorder %s26, 0
      %p67 = por %p65, %p66
      %p68 = scmp.ne.s32.totalorder %s60, %s62
      %p69 = scmp.eq.s32.totalorder %s31, 1
      %p70 = por %p68, %p69
      %p71 = scmp.ne.s32.totalorder %s62, %s63
      %p72 = scmp.eq.s32.totalorder %s31, 0
      %p73 = por %p71, %p72
      %p74 = scmp.ne.s32.totalorder %s62, %s63
      %p75 = scmp.eq.s32.totalorder %s32, 1
      %p76 = por %p74, %p75
      %p78 = scmp.ne.s32.totalorder %s63, %s77
      %p79 = scmp.eq.s32.totalorder %s32, 0
      %p80 = por %p78, %p79
      %s82 = sadd.s32 %s81, 1
      %p85 = scmp.eq.s32.totalorder %s26, 1
      %p86 = scmp.ne.s32.totalorder %s81, %s83
      %p87 = scmp.eq.s32.totalorder %s26, 0
      %p88 = por %p86, %p87
      %p89 = scmp.ne.s32.totalorder %s81, %s83
      %p90 = scmp.eq.s32.totalorder %s31, 1
      %p91 = por %p89, %p90
      %p92 = scmp.ne.s32.totalorder %s83, %s84
      %p93 = scmp.eq.s32.totalorder %s31, 0
      %p94 = por %p92, %p93
      %p95 = scmp.ne.s32.totalorder %s83, %s84
      %p96 = scmp.eq.s32.totalorder %s32, 1
      %p97 = por %p95, %p96
      %p99 = scmp.ne.s32.totalorder %s84, %s98
      %p100 = scmp.eq.s32.totalorder %s32, 0
      %p101 = por %p99, %p100
      %s103 = sadd.s32 %s102, 1
      %p106 = scmp.eq.s32.totalorder %s26, 1
      %p107 = scmp.ne.s32.totalorder %s102, %s104
      %p108 = scmp.eq.s32.totalorder %s26, 0
      %p109 = por %p107, %p108
      %p110 = scmp.ne.s32.totalorder %s102, %s104
      %p111 = scmp.eq.s32.totalorder %s31, 1
      %p112 = por %p110, %p111
      %p113 = scmp.ne.s32.totalorder %s104, %s105
      %p114 = scmp.eq.s32.totalorder %s31, 0
      %p115 = por %p113, %p114
      %p116 = scmp.ne.s32.totalorder %s104, %s105
      %p117 = scmp.eq.s32.totalorder %s32, 1
      %p118 = por %p116, %p117
      %p120 = scmp.ne.s32.totalorder %s105, %s119
      %p121 = scmp.eq.s32.totalorder %s32, 0
      %p122 = por %p120, %p121
      %s124 = sadd.s32 %s123, 1
      %p127 = scmp.eq.s32.totalorder %s26, 1
      %p128 = scmp.ne.s32.totalorder %s123, %s125
      %p129 = scmp.eq.s32.totalorder %s26, 0
      %p130 = por %p128, %p129
      %p131 = scmp.ne.s32.totalorder %s123, %s125
      %p132 = scmp.eq.s32.totalorder %s31, 1
      %p133 = por %p131, %p132
      %p134 = scmp.ne.s32.totalorder %s125, %s126
      %p135 = scmp.eq.s32.totalorder %s31, 0
      %p136 = por %p134, %p135
      %p137 = scmp.ne.s32.totalorder %s125, %s126
      %p138 = scmp.eq.s32.totalorder %s32, 1
      %p139 = por %p137, %p138
      %p141 = scmp.ne.s32.totalorder %s126, %s140
      %p142 = scmp.eq.s32.totalorder %s32, 0
      %p143 = por %p141, %p142
      %s145 = sadd.s32 %s144, 1
      %p148 = scmp.eq.s32.totalorder %s26, 1
      %p149 = scmp.ne.s32.totalorder %s144, %s146
      %p150 = scmp.eq.s32.totalorder %s26, 0
      %p151 = por %p149, %p150
      %p152 = scmp.ne.s32.totalorder %s144, %s146
      %p153 = scmp.eq.s32.totalorder %s31, 1
      %p154 = por %p152, %p153
      %p155 = scmp.ne.s32.totalorder %s146, %s147
      %p156 = scmp.eq.s32.totalorder %s31, 0
      %p157 = por %p155, %p156
      %p158 = scmp.ne.s32.totalorder %s146, %s147
      %p159 = scmp.eq.s32.totalorder %s32, 1
      %p160 = por %p158, %p159
      %p162 = scmp.ne.s32.totalorder %s147, %s161
      %p163 = scmp.eq.s32.totalorder %s32, 0
      %p164 = por %p162, %p163
      %s166 = sadd.s32 %s165, 1
      %p169 = scmp.eq.s32.totalorder %s26, 1
      %p170 = scmp.ne.s32.totalorder %s165, %s167
      %p171 = scmp.eq.s32.totalorder %s26, 0
      %p172 = por %p170, %p171
      %p173 = scmp.ne.s32.totalorder %s165, %s167
      %p174 = scmp.eq.s32.totalorder %s31, 1
      %p175 = por %p173, %p174
      %p176 = scmp.ne.s32.totalorder %s167, %s168
      %p177 = scmp.eq.s32.totalorder %s31, 0
      %p178 = por %p176, %p177
      %p179 = scmp.ne.s32.totalorder %s167, %s168
      %p180 = scmp.eq.s32.totalorder %s32, 1
      %p181 = por %p179, %p180
      %p183 = scmp.ne.s32.totalorder %s168, %s182
      %p184 = scmp.eq.s32.totalorder %s32, 0
      %p185 = por %p183, %p184
      %s187 = sadd.s32 %s186, 1
      %p190 = scmp.eq.s32.totalorder %s26, 1
      %p191 = scmp.ne.s32.totalorder %s186, %s188
      %p192 = scmp.eq.s32.totalorder %s26, 0
      %p193 = por %p191, %p192
      %p194 = scmp.ne.s32.totalorder %s186, %s188
      %p195 = scmp.eq.s32.totalorder %s31, 1
      %p196 = por %p194, %p195
      %p197 = scmp.ne.s32.totalorder %s188, %s189
      %p198 = scmp.eq.s32.totalorder %s31, 0
      %p199 = por %p197, %p198
      %p200 = scmp.ne.s32.totalorder %s188, %s189
      %p201 = scmp.eq.s32.totalorder %s32, 1
      %p202 = por %p200, %p201
      %p204 = scmp.ne.s32.totalorder %s189, %s203
      %p205 = scmp.eq.s32.totalorder %s32, 0
      %p206 = por %p204, %p205
      %s208 = sadd.s32 %s207, 1
      %p211 = scmp.eq.s32.totalorder %s26, 1
      %p212 = scmp.ne.s32.totalorder %s207, %s209
      %p213 = scmp.eq.s32.totalorder %s26, 0
      %p214 = por %p212, %p213
      %p215 = scmp.ne.s32.totalorder %s207, %s209
      %p216 = scmp.eq.s32.totalorder %s31, 1
      %p217 = por %p215, %p216
      %p218 = scmp.ne.s32.totalorder %s209, %s210
      %p219 = scmp.eq.s32.totalorder %s31, 0
      %p220 = por %p218, %p219
      %p221 = scmp.ne.s32.totalorder %s209, %s210
      %p222 = scmp.eq.s32.totalorder %s32, 1
      %p223 = por %p221, %p222
      %p225 = scmp.ne.s32.totalorder %s210, %s224
      %p226 = scmp.eq.s32.totalorder %s32, 0
      %p227 = por %p225, %p226
      %s229 = sadd.s32 %s228, 1
      %p232 = scmp.eq.s32.totalorder %s26, 1
      %p233 = scmp.ne.s32.totalorder %s228, %s230
      %p234 = scmp.eq.s32.totalorder %s26, 0
      %p235 = por %p233, %p234
      %p236 = scmp.ne.s32.totalorder %s228, %s230
      %p237 = scmp.eq.s32.totalorder %s31, 1
      %p238 = por %p236, %p237
      %p239 = scmp.ne.s32.totalorder %s230, %s231
      %p240 = scmp.eq.s32.totalorder %s31, 0
      %p241 = por %p239, %p240
      %p242 = scmp.ne.s32.totalorder %s230, %s231
      %p243 = scmp.eq.s32.totalorder %s32, 1
      %p244 = por %p242, %p243
      %p246 = scmp.ne.s32.totalorder %s231, %s245
      %p247 = scmp.eq.s32.totalorder %s32, 0
      %p248 = por %p246, %p247
      %s250 = sadd.s32 %s249, 1
      %p253 = scmp.eq.s32.totalorder %s26, 1
      %p254 = scmp.ne.s32.totalorder %s249, %s251
      %p255 = scmp.eq.s32.totalorder %s26, 0
      %p256 = por %p254, %p255
      %p257 = scmp.ne.s32.totalorder %s249, %s251
      %p258 = scmp.eq.s32.totalorder %s31, 1
      %p259 = por %p257, %p258
      %p260 = scmp.ne.s32.totalorder %s251, %s252
      %p261 = scmp.eq.s32.totalorder %s31, 0
      %p262 = por %p260, %p261
      %p263 = scmp.ne.s32.totalorder %s251, %s252
      %p264 = scmp.eq.s32.totalorder %s32, 1
      %p265 = por %p263, %p264
      %p267 = scmp.ne.s32.totalorder %s252, %s266
      %p268 = scmp.eq.s32.totalorder %s32, 0
      %p269 = por %p267, %p268
      %s271 = sadd.s32 %s270, 1
      %p274 = scmp.eq.s32.totalorder %s26, 1
      %p275 = scmp.ne.s32.totalorder %s270, %s272
      %p276 = scmp.eq.s32.totalorder %s26, 0
      %p277 = por %p275, %p276
      %p278 = scmp.ne.s32.totalorder %s270, %s272
      %p279 = scmp.eq.s32.totalorder %s31, 1
      %p280 = por %p278, %p279
      %p281 = scmp.ne.s32.totalorder %s272, %s273
      %p282 = scmp.eq.s32.totalorder %s31, 0
      %p283 = por %p281, %p282
      %p284 = scmp.ne.s32.totalorder %s272, %s273
      %p285 = scmp.eq.s32.totalorder %s32, 1
      %p286 = por %p284, %p285
      %p288 = scmp.ne.s32.totalorder %s273, %s287
      %p289 = scmp.eq.s32.totalorder %s32, 0
      %p290 = por %p288, %p289
      %s292 = sadd.s32 %s291, 1
      %p295 = scmp.eq.s32.totalorder %s26, 1
      %p296 = scmp.ne.s32.totalorder %s291, %s293
      %p297 = scmp.eq.s32.totalorder %s26, 0
      %p298 = por %p296, %p297
      %p299 = scmp.ne.s32.totalorder %s291, %s293
      %p300 = scmp.eq.s32.totalorder %s31, 1
      %p301 = por %p299, %p300
      %p302 = scmp.ne.s32.totalorder %s293, %s294
      %p303 = scmp.eq.s32.totalorder %s31, 0
      %p304 = por %p302, %p303
      %p305 = scmp.ne.s32.totalorder %s293, %s294
      %p306 = scmp.eq.s32.totalorder %s32, 1
      %p307 = por %p305, %p306
      %p309 = scmp.ne.s32.totalorder %s294, %s308
      %p310 = scmp.eq.s32.totalorder %s32, 0
      %p311 = por %p309, %p310
      %s313 = sadd.s32 %s312, 1
      %p316 = scmp.eq.s32.totalorder %s26, 1
      %p317 = scmp.ne.s32.totalorder %s312, %s314
      %p318 = scmp.eq.s32.totalorder %s26, 0
      %p319 = por %p317, %p318
      %p320 = scmp.ne.s32.totalorder %s312, %s314
      %p321 = scmp.eq.s32.totalorder %s31, 1
      %p322 = por %p320, %p321
      %p323 = scmp.ne.s32.totalorder %s314, %s315
      %p324 = scmp.eq.s32.totalorder %s31, 0
      %p325 = por %p323, %p324
      %p326 = scmp.ne.s32.totalorder %s314, %s315
      %p327 = scmp.eq.s32.totalorder %s32, 1
      %p328 = por %p326, %p327
      %p330 = scmp.ne.s32.totalorder %s315, %s329
      %p331 = scmp.eq.s32.totalorder %s32, 0
      %p332 = por %p330, %p331
      %s333 = ssub.s32 %s26, %s33
      %p334 = scmp.eq.s32.totalorder %s333, 0
      %s336 = sadd.s32 %s335, 1
      %s337 = scalar_select %p334, %s335, %s336
      %p340 = pneg %p334
      %p341 = scmp.eq.s32.totalorder %s26, 1
      %p342 = por %p340, %p341
      %p343 = scmp.ne.s32.totalorder %s335, %s338
      %p344 = scmp.eq.s32.totalorder %s26, 0
      %p345 = por %p343, %p344
      %p346 = scmp.ne.s32.totalorder %s335, %s338
      %p347 = scmp.eq.s32.totalorder %s31, 1
      %p348 = por %p346, %p347
      %p349 = scmp.ne.s32.totalorder %s338, %s339
      %p350 = scmp.eq.s32.totalorder %s31, 0
      %p351 = por %p349, %p350
      %p352 = scmp.ne.s32.totalorder %s338, %s339
      %p353 = scmp.eq.s32.totalorder %s32, 1
      %p354 = por %p352, %p353
      %p356 = scmp.ne.s32.totalorder %s339, %s355
      %p357 = scmp.eq.s32.totalorder %s32, 0
      %p358 = por %p356, %p357
      %p359 = scmp.le.s32.totalorder 1, %s26
      %p360 = scmp.lt.s32.totalorder %s26, 3
      %p361 = pnand %p359, %p360
      %p362 = pneg %p361
      // Predicated region
      $region9: #{tpu_custom_call.1} parent=5 // pred_check
        _
      $region10: #{tpu_custom_call.1} parent=5 // pred_check_branch
        %364 = sbr.rel (%p361) target = $region12
      $region11: #{tpu_custom_call.1} parent=5 // pred_region
        %s365 = ssub.s32 %s26, 1
        // Predicated region
        $region13: #{tpu_custom_call.1} parent=11 // pred_check
          %p366 = pneg %p73
        $region14: #{tpu_custom_call.1} parent=11 // pred_check_branch
          %368 = sbr.rel (%p366) target = $region16
        $region15: #{tpu_custom_call.1} parent=11 // pred_region
          _
        $region16: #{tpu_custom_call.1} parent=11 // pred_fallthru
          _
        // Predicated region
        $region17: #{tpu_custom_call.1} parent=11 // pred_check
          %p369 = pneg %p94
        $region18: #{tpu_custom_call.1} parent=11 // pred_check_branch
          %371 = sbr.rel (%p369) target = $region20
        $region19: #{tpu_custom_call.1} parent=11 // pred_region
          _
        $region20: #{tpu_custom_call.1} parent=11 // pred_fallthru
          _
        // Predicated region
        $region21: #{tpu_custom_call.1} parent=11 // pred_check
          %p372 = pneg %p115
        $region22: #{tpu_custom_call.1} parent=11 // pred_check_branch
          %374 = sbr.rel (%p372) target = $region24
        $region23: #{tpu_custom_call.1} parent=11 // pred_region
          _
        $region24: #{tpu_custom_call.1} parent=11 // pred_fallthru
          _
        // Predicated region
        $region25: #{tpu_custom_call.1} parent=11 // pred_check
          %p375 = pneg %p136
        $region26: #{tpu_custom_call.1} parent=11 // pred_check_branch
          %377 = sbr.rel (%p375) target = $region28
        $region27: #{tpu_custom_call.1} parent=11 // pred_region
          _
        $region28: #{tpu_custom_call.1} parent=11 // pred_fallthru
          _
        // Predicated region
        $region29: #{tpu_custom_call.1} parent=11 // pred_check
          %p378 = pneg %p157
        $region30: #{tpu_custom_call.1} parent=11 // pred_check_branch
          %380 = sbr.rel (%p378) target = $region32
        $region31: #{tpu_custom_call.1} parent=11 // pred_region
          _
        $region32: #{tpu_custom_call.1} parent=11 // pred_fallthru
          _
        // Predicated region
        $region33: #{tpu_custom_call.1} parent=11 // pred_check
          %p381 = pneg %p178
        $region34: #{tpu_custom_call.1} parent=11 // pred_check_branch
          %383 = sbr.rel (%p381) target = $region36
        $region35: #{tpu_custom_call.1} parent=11 // pred_region
          _
        $region36: #{tpu_custom_call.1} parent=11 // pred_fallthru
          _
        // Predicated region
        $region37: #{tpu_custom_call.1} parent=11 // pred_check
          %p384 = pneg %p199
        $region38: #{tpu_custom_call.1} parent=11 // pred_check_branch
          %386 = sbr.rel (%p384) target = $region40
        $region39: #{tpu_custom_call.1} parent=11 // pred_region
          _
        $region40: #{tpu_custom_call.1} parent=11 // pred_fallthru
          _
        // Predicated region
        $region41: #{tpu_custom_call.1} parent=11 // pred_check
          %p387 = pneg %p220
        $region42: #{tpu_custom_call.1} parent=11 // pred_check_branch
          %389 = sbr.rel (%p387) target = $region44
        $region43: #{tpu_custom_call.1} parent=11 // pred_region
          _
        $region44: #{tpu_custom_call.1} parent=11 // pred_fallthru
          _
        // Predicated region
        $region45: #{tpu_custom_call.1} parent=11 // pred_check
          %p390 = pneg %p241
        $region46: #{tpu_custom_call.1} parent=11 // pred_check_branch
          %392 = sbr.rel (%p390) target = $region48
        $region47: #{tpu_custom_call.1} parent=11 // pred_region
          _
        $region48: #{tpu_custom_call.1} parent=11 // pred_fallthru
          _
        // Predicated region
        $region49: #{tpu_custom_call.1} parent=11 // pred_check
          %p393 = pneg %p262
        $region50: #{tpu_custom_call.1} parent=11 // pred_check_branch
          %395 = sbr.rel (%p393) target = $region52
        $region51: #{tpu_custom_call.1} parent=11 // pred_region
          _
        $region52: #{tpu_custom_call.1} parent=11 // pred_fallthru
          _
        // Predicated region
        $region53: #{tpu_custom_call.1} parent=11 // pred_check
          %p396 = pneg %p283
        $region54: #{tpu_custom_call.1} parent=11 // pred_check_branch
          %398 = sbr.rel (%p396) target = $region56
        $region55: #{tpu_custom_call.1} parent=11 // pred_region
          _
        $region56: #{tpu_custom_call.1} parent=11 // pred_fallthru
          _
        // Predicated region
        $region57: #{tpu_custom_call.1} parent=11 // pred_check
          %p399 = pneg %p304
        $region58: #{tpu_custom_call.1} parent=11 // pred_check_branch
          %401 = sbr.rel (%p399) target = $region60
        $region59: #{tpu_custom_call.1} parent=11 // pred_region
          _
        $region60: #{tpu_custom_call.1} parent=11 // pred_fallthru
          _
        // Predicated region
        $region61: #{tpu_custom_call.1} parent=11 // pred_check
          %p402 = pneg %p325
        $region62: #{tpu_custom_call.1} parent=11 // pred_check_branch
          %404 = sbr.rel (%p402) target = $region64
        $region63: #{tpu_custom_call.1} parent=11 // pred_region
          _
        $region64: #{tpu_custom_call.1} parent=11 // pred_fallthru
          _
      $region12: #{tpu_custom_call.1} parent=5 // pred_fallthru
        _
      %p405 = scmp.lt.s32.totalorder %s26, 2
      // Predicated region
      $region65: #{tpu_custom_call.1} parent=5 // pred_check
        %p406 = pneg %p405
      $region66: #{tpu_custom_call.1} parent=5 // pred_check_branch
        %408 = sbr.rel (%p406) target = $region68
      $region67: #{tpu_custom_call.1} parent=5 // pred_region
        // Predicated region
        $region69: #{tpu_custom_call.1} parent=67 // pred_check
          %p409 = pneg %p46
        $region70: #{tpu_custom_call.1} parent=67 // pred_check_branch
          %411 = sbr.rel (%p409) target = $region72
        $region71: #{tpu_custom_call.1} parent=67 // pred_region
          %s412 = sand.u32 %s36, 1
          %s413 = scalar_lea.sflag [#allocation3], %s412
          %s414 = sand.u32 %s36, 1
          %s415 = smul.addr %s414, 16
          %s416 = scalar_lea.vmem [#allocation2], %s415
          %s418 = ssub.s32 256, 256
          %419 = vsyncadd %s413, %s418
          %s420 = smul.addr %s26, 2
          %s421 = smul.addr %s420, 128
          %s422 = scalar_lea.hbm %s0, %s421
          %s423 = sshll.u32 %s416, 4
          %s424 = int_to_ptr.vmem [resolvable:$true] %s423
          %429 = dma.hbm_to_vmem [thread:$0]  %s422, 256, %s424, %s413, 128, 128, 8
        $region72: #{tpu_custom_call.1} parent=67 // pred_fallthru
          _
      $region68: #{tpu_custom_call.1} parent=5 // pred_fallthru
        _
      %p430 = scmp.le.s32.totalorder 1, %s26
      %p431 = scmp.lt.s32.totalorder %s26, 3
      %p432 = pnand %p430, %p431
      %p433 = pneg %p432
      // Predicated region
      $region73: #{tpu_custom_call.1} parent=5 // pred_check
        _
      $region74: #{tpu_custom_call.1} parent=5 // pred_check_branch
        %435 = sbr.rel (%p432) target = $region76
      $region75: #{tpu_custom_call.1} parent=5 // pred_region
        %s436 = ssub.s32 %s26, 1
        %s437 = sand.u32 %s39, 1
        %s438 = scalar_lea.sflag [#allocation3], %s437
        %s439 = sand.u32 %s39, 1
        %s440 = smul.addr %s439, 16
        %s441 = scalar_lea.vmem [#allocation2], %s440
        // Predicated region
        $region77: #{tpu_custom_call.1} parent=75 // pred_check
          %p442 = pneg %p52
        $region78: #{tpu_custom_call.1} parent=75 // pred_check_branch
          %444 = sbr.rel (%p442) target = $region80
        $region79: #{tpu_custom_call.1} parent=75 // pred_region
          %445 = dma.done %s438, 256
        $region80: #{tpu_custom_call.1} parent=75 // pred_fallthru
          _
        %s446 = sand.u32 %s39, 1
        %s447 = scalar_lea.sflag [#allocation3], %s446
        %s448 = sand.u32 %s39, 1
        %s449 = smul.addr %s448, 16
        %s450 = scalar_lea.vmem [#allocation2], %s449
        %p451 = pneg %p52
        %p452 = pneg %p49
        %p453 = pneg %p73
        %p454 = pneg %p70
        %p455 = pneg %p94
        %p456 = pneg %p91
        %p457 = pneg %p115
        %p458 = pneg %p112
        %p459 = pneg %p136
        %p460 = pneg %p133
        %p461 = pneg %p157
        %p462 = pneg %p154
        %p463 = pneg %p178
        %p464 = pneg %p175
        %p465 = pneg %p199
        %p466 = pneg %p196
        %p467 = pneg %p220
        %p468 = pneg %p217
        %p469 = pneg %p241
        %p470 = pneg %p238
        %p471 = pneg %p262
        %p472 = pneg %p259
        %p473 = pneg %p283
        %p474 = pneg %p280
        %p475 = pneg %p304
        %p476 = pneg %p301
        %p477 = pneg %p325
        %p478 = pneg %p322
        %p479 = pneg %p351
        %p480 = pneg %p348
        %s481 = sand.u32 %s338, 1
        %s482 = scalar_lea.sflag [#allocation4], %s481
        %s483 = sand.u32 %s338, 1
        %s484 = smul.addr %s483, 16
        %s485 = scalar_lea.vmem [#allocation5], %s484
        %v487 = vld [vmem:[%s441] sm:$0xff]
        %v488 = vld [vmem:[%s441 + $0x8] sm:$0xff]
        %v489 = vld [vmem:[%s1] sm:$0x1]
        %v490 = vld [vmem:[%s2] sm:$0x1]
        %491 = vadd.xlane.f32.xlu0 %v487
        %v492 = vpop.xlane.xlu0 %491
        %493 = vadd.xlane.f32.xlu0 %v488
        %v494 = vpop.xlane.xlu0 %493
        %v495 = vrcp.pop 128.0
        %v496 = vmul.f32 %v492, %v495
        %v497 = vmul.f32 %v494, %v495
        %v498 = vsub.f32 %v487, %v496
        %v499 = vsub.f32 %v488, %v497
        %v500 = vmul.f32 %v498, %v498
        %v501 = vmul.f32 %v499, %v499
        %502 = vadd.xlane.f32.xlu0 %v500
        %v503 = vpop.xlane.xlu0 %502
        %504 = vadd.xlane.f32.xlu0 %v501
        %v505 = vpop.xlane.xlu0 %504
        %v506 = vmul.f32 %v503, %v495
        %v507 = vmul.f32 %v505, %v495
        %v508 = vadd.f32 %v506, 1e-05
        %v509 = vadd.f32 %v507, 1e-05
        %v510 = vrsqrt.pop %v508
        %v511 = vrsqrt.pop %v509
        %v512 = vmul.f32 %v498, %v510
        %v513 = vmul.f32 %v499, %v511
        %v515 = vlaneseq
        %v516 = vshrl.u32 %v515, 7
        %v517 = vsub.s32 0, %v516
        %v518 = vrot.slane %v489, %v517
        %v520 = vmul.f32 %v512, %v518
        %v521 = vmul.f32 %v513, %v518
        %v523 = vlaneseq
        %v524 = vshrl.u32 %v523, 7
        %v525 = vsub.s32 0, %v524
        %v526 = vrot.slane %v490, %v525
        %v528 = vadd.f32 %v520, %v526
        %v529 = vadd.f32 %v521, %v526
        %v530 = vld [vmem:[%s3] sm:$0xf]
        %v531 = vld [vmem:[%s3 + $0x4] sm:$0xf]
        %v532 = vld [vmem:[%s3 + $0x8] sm:$0xf]
        %v533 = vld [vmem:[%s3 + $0xc] sm:$0xf]
        %v534 = vld [vmem:[%s3 + $0x10] sm:$0xf]
        %v535 = vld [vmem:[%s3 + $0x14] sm:$0xf]
        %v536 = vld [vmem:[%s3 + $0x18] sm:$0xf]
        %v537 = vld [vmem:[%s3 + $0x1c] sm:$0xf]
        %v538 = vld [vmem:[%s3 + $0x20] sm:$0xf]
        %v539 = vld [vmem:[%s3 + $0x24] sm:$0xf]
        %v540 = vld [vmem:[%s3 + $0x28] sm:$0xf]
        %v541 = vld [vmem:[%s3 + $0x2c] sm:$0xf]
        %v542 = vld [vmem:[%s3 + $0x30] sm:$0xf]
        %v543 = vld [vmem:[%s3 + $0x34] sm:$0xf]
        %v544 = vld [vmem:[%s3 + $0x38] sm:$0xf]
        %v545 = vld [vmem:[%s3 + $0x3c] sm:$0xf]
        %v546 = vpack.c.bf16 %v529, %v528
        %v563 = vunpack.c.l.b16 %v530
        %v564 = vunpack.c.l.b16 %v531
        %v565 = vunpack.c.l.b16 %v532
        %v566 = vunpack.c.l.b16 %v533
        %v567 = vunpack.c.l.b16 %v534
        %v568 = vunpack.c.l.b16 %v535
        %v569 = vunpack.c.l.b16 %v536
        %v570 = vunpack.c.l.b16 %v537
        %v571 = vunpack.c.l.b16 %v538
        %v572 = vunpack.c.l.b16 %v539
        %v573 = vunpack.c.l.b16 %v540
        %v574 = vunpack.c.l.b16 %v541
        %v575 = vunpack.c.l.b16 %v542
        %v576 = vunpack.c.l.b16 %v543
        %v577 = vunpack.c.l.b16 %v544
        %v578 = vunpack.c.l.b16 %v545
        %v579 = vpack.c.b16 %v564, %v563
        %v580 = vpack.c.b16 %v566, %v565
        %v581 = vpack.c.b16 %v568, %v567
        %v582 = vpack.c.b16 %v570, %v569
        %v583 = vpack.c.b16 %v572, %v571
        %v584 = vpack.c.b16 %v574, %v573
        %v585 = vpack.c.b16 %v576, %v575
        %v586 = vpack.c.b16 %v578, %v577
        %595 = vmatprep.subr.bf16.mxu0 0
        %596 = vmatpush1.bf16.msra.mxu0 %v586
        %597 = vmatprep.subr.bf16.mxu0 0
        %598 = vmatpush1.bf16.msra.mxu0 %v585
        %599 = vmatprep.subr.bf16.mxu0 0
        %600 = vmatpush1.bf16.msra.mxu0 %v584
        %601 = vmatprep.subr.bf16.mxu0 0
        %602 = vmatpush1.bf16.msra.mxu0 %v583
        %603 = vmatprep.subr.bf16.mxu0 0
        %604 = vmatpush1.bf16.msra.mxu0 %v582
        %605 = vmatprep.subr.bf16.mxu0 0
        %606 = vmatpush1.bf16.msra.mxu0 %v581
        %607 = vmatprep.subr.bf16.mxu0 0
        %608 = vmatpush1.bf16.msra.mxu0 %v580
        %609 = vmatprep.subr.bf16.mxu0 0
        %610 = vmatpush1.bf16.msra.mxu0 %v579
        %611 = vmatprep.subr.bf16.mxu0 0
        %612 = vmatpush2.bf16.msra.mxu0 0
        %613 = vmatprep.subr.bf16.mxu0 0
        %614 = vmatpush2.bf16.msra.mxu0 0
        %615 = vmatprep.subr.bf16.mxu0 0
        %616 = vmatpush2.bf16.msra.mxu0 0
        %617 = vmatprep.subr.bf16.mxu0 0
        %618 = vmatpush2.bf16.msra.mxu0 0
        %619 = vmatprep.subr.bf16.mxu0 0
        %620 = vmatpush2.bf16.msra.mxu0 0
        %621 = vmatprep.subr.bf16.mxu0 0
        %622 = vmatpush2.bf16.msra.mxu0 0
        %623 = vmatprep.subr.bf16.mxu0 0
        %624 = vmatpush2.bf16.msra.mxu0 0
        %625 = vmatprep.subr.bf16.mxu0 0
        %626 = vmatpush2.bf16.msra.mxu0 0
        %627 = vmatprep.mubr.bf16.mxu0 0
        %628 = vmatmul.mubr.bf16.gmra.mxu0 %v546
        %v629 = vpop.f32.mrf.mxu0
        %v630 = vadd.f32 0.0, %v629
        %v631 = vpop.f32.mrf.mxu0
        %v632 = vpop.f32.mrf.mxu0
        %v633 = vadd.f32 0.0, %v632
        %v634 = vpop.f32.mrf.mxu0
        %635 = vdwg.mxu0
        %v636 = vld [vmem:[%s4] sm:$0xf]
        %v637 = vld [vmem:[%s4 + $0x4] sm:$0xf]
        %v638 = vld [vmem:[%s4 + $0x8] sm:$0xf]
        %v639 = vld [vmem:[%s4 + $0xc] sm:$0xf]
        %v640 = vld [vmem:[%s4 + $0x10] sm:$0xf]
        %v641 = vld [vmem:[%s4 + $0x14] sm:$0xf]
        %v642 = vld [vmem:[%s4 + $0x18] sm:$0xf]
        %v643 = vld [vmem:[%s4 + $0x1c] sm:$0xf]
        %v644 = vld [vmem:[%s4 + $0x20] sm:$0xf]
        %v645 = vld [vmem:[%s4 + $0x24] sm:$0xf]
        %v646 = vld [vmem:[%s4 + $0x28] sm:$0xf]
        %v647 = vld [vmem:[%s4 + $0x2c] sm:$0xf]
        %v648 = vld [vmem:[%s4 + $0x30] sm:$0xf]
        %v649 = vld [vmem:[%s4 + $0x34] sm:$0xf]
        %v650 = vld [vmem:[%s4 + $0x38] sm:$0xf]
        %v651 = vld [vmem:[%s4 + $0x3c] sm:$0xf]
        %v668 = vunpack.c.l.b16 %v636
        %v669 = vunpack.c.l.b16 %v637
        %v670 = vunpack.c.l.b16 %v638
        %v671 = vunpack.c.l.b16 %v639
        %v672 = vunpack.c.l.b16 %v640
        %v673 = vunpack.c.l.b16 %v641
        %v674 = vunpack.c.l.b16 %v642
        %v675 = vunpack.c.l.b16 %v643
        %v676 = vunpack.c.l.b16 %v644
        %v677 = vunpack.c.l.b16 %v645
        %v678 = vunpack.c.l.b16 %v646
        %v679 = vunpack.c.l.b16 %v647
        %v680 = vunpack.c.l.b16 %v648
        %v681 = vunpack.c.l.b16 %v649
        %v682 = vunpack.c.l.b16 %v650
        %v683 = vunpack.c.l.b16 %v651
        %v684 = vpack.c.b16 %v669, %v668
        %v685 = vpack.c.b16 %v671, %v670
        %v686 = vpack.c.b16 %v673, %v672
        %v687 = vpack.c.b16 %v675, %v674
        %v688 = vpack.c.b16 %v677, %v676
        %v689 = vpack.c.b16 %v679, %v678
        %v690 = vpack.c.b16 %v681, %v680
        %v691 = vpack.c.b16 %v683, %v682
        %700 = vmatprep.subr.bf16.mxu0 0
        %701 = vmatpush1.bf16.msra.mxu0 %v691
        %702 = vmatprep.subr.bf16.mxu0 0
        %703 = vmatpush1.bf16.msra.mxu0 %v690
        %704 = vmatprep.subr.bf16.mxu0 0
        %705 = vmatpush1.bf16.msra.mxu0 %v689
        %706 = vmatprep.subr.bf16.mxu0 0
        %707 = vmatpush1.bf16.msra.mxu0 %v688
        %708 = vmatprep.subr.bf16.mxu0 0
        %709 = vmatpush1.bf16.msra.mxu0 %v687
        %710 = vmatprep.subr.bf16.mxu0 0
        %711 = vmatpush1.bf16.msra.mxu0 %v686
        %712 = vmatprep.subr.bf16.mxu0 0
        %713 = vmatpush1.bf16.msra.mxu0 %v685
        %714 = vmatprep.subr.bf16.mxu0 0
        %715 = vmatpush1.bf16.msra.mxu0 %v684
        %716 = vmatprep.subr.bf16.mxu0 0
        %717 = vmatpush2.bf16.msra.mxu0 0
        %718 = vmatprep.subr.bf16.mxu0 0
        %719 = vmatpush2.bf16.msra.mxu0 0
        %720 = vmatprep.subr.bf16.mxu0 0
        %721 = vmatpush2.bf16.msra.mxu0 0
        %722 = vmatprep.subr.bf16.mxu0 0
        %723 = vmatpush2.bf16.msra.mxu0 0
        %724 = vmatprep.subr.bf16.mxu0 0
        %725 = vmatpush2.bf16.msra.mxu0 0
        %726 = vmatprep.subr.bf16.mxu0 0
        %727 = vmatpush2.bf16.msra.mxu0 0
        %728 = vmatprep.subr.bf16.mxu0 0
        %729 = vmatpush2.bf16.msra.mxu0 0
        %730 = vmatprep.subr.bf16.mxu0 0
        %731 = vmatpush2.bf16.msra.mxu0 0
        %732 = vmatprep.mubr.bf16.mxu0 0
        %733 = vmatmul.mubr.bf16.gmra.mxu0 %v546
        %v734 = vpop.f32.mrf.mxu0
        %v735 = vadd.f32 0.0, %v734
        %v736 = vpop.f32.mrf.mxu0
        %v737 = vpop.f32.mrf.mxu0
        %v738 = vadd.f32 0.0, %v737
        %v739 = vpop.f32.mrf.mxu0
        %740 = vdwg.mxu0
        %v741 = vld [vmem:[%s5] sm:$0xf]
        %v742 = vld [vmem:[%s5 + $0x4] sm:$0xf]
        %v743 = vld [vmem:[%s5 + $0x8] sm:$0xf]
        %v744 = vld [vmem:[%s5 + $0xc] sm:$0xf]
        %v745 = vld [vmem:[%s5 + $0x10] sm:$0xf]
        %v746 = vld [vmem:[%s5 + $0x14] sm:$0xf]
        %v747 = vld [vmem:[%s5 + $0x18] sm:$0xf]
        %v748 = vld [vmem:[%s5 + $0x1c] sm:$0xf]
        %v749 = vld [vmem:[%s5 + $0x20] sm:$0xf]
        %v750 = vld [vmem:[%s5 + $0x24] sm:$0xf]
        %v751 = vld [vmem:[%s5 + $0x28] sm:$0xf]
        %v752 = vld [vmem:[%s5 + $0x2c] sm:$0xf]
        %v753 = vld [vmem:[%s5 + $0x30] sm:$0xf]
        %v754 = vld [vmem:[%s5 + $0x34] sm:$0xf]
        %v755 = vld [vmem:[%s5 + $0x38] sm:$0xf]
        %v756 = vld [vmem:[%s5 + $0x3c] sm:$0xf]
        %v773 = vunpack.c.l.b16 %v741
        %v774 = vunpack.c.l.b16 %v742
        %v775 = vunpack.c.l.b16 %v743
        %v776 = vunpack.c.l.b16 %v744
        %v777 = vunpack.c.l.b16 %v745
        %v778 = vunpack.c.l.b16 %v746
        %v779 = vunpack.c.l.b16 %v747
        %v780 = vunpack.c.l.b16 %v748
        %v781 = vunpack.c.l.b16 %v749
        %v782 = vunpack.c.l.b16 %v750
        %v783 = vunpack.c.l.b16 %v751
        %v784 = vunpack.c.l.b16 %v752
        %v785 = vunpack.c.l.b16 %v753
        %v786 = vunpack.c.l.b16 %v754
        %v787 = vunpack.c.l.b16 %v755
        %v788 = vunpack.c.l.b16 %v756
        %v789 = vpack.c.b16 %v774, %v773
        %v790 = vpack.c.b16 %v776, %v775
        %v791 = vpack.c.b16 %v778, %v777
        %v792 = vpack.c.b16 %v780, %v779
        %v793 = vpack.c.b16 %v782, %v781
        %v794 = vpack.c.b16 %v784, %v783
        %v795 = vpack.c.b16 %v786, %v785
        %v796 = vpack.c.b16 %v788, %v787
        %805 = vmatprep.subr.bf16.mxu0 0
        %806 = vmatpush1.bf16.msra.mxu0 %v796
        %807 = vmatprep.subr.bf16.mxu0 0
        %808 = vmatpush1.bf16.msra.mxu0 %v795
        %809 = vmatprep.subr.bf16.mxu0 0
        %810 = vmatpush1.bf16.msra.mxu0 %v794
        %811 = vmatprep.subr.bf16.mxu0 0
        %812 = vmatpush1.bf16.msra.mxu0 %v793
        %813 = vmatprep.subr.bf16.mxu0 0
        %814 = vmatpush1.bf16.msra.mxu0 %v792
        %815 = vmatprep.subr.bf16.mxu0 0
        %816 = vmatpush1.bf16.msra.mxu0 %v791
        %817 = vmatprep.subr.bf16.mxu0 0
        %818 = vmatpush1.bf16.msra.mxu0 %v790
        %819 = vmatprep.subr.bf16.mxu0 0
        %820 = vmatpush1.bf16.msra.mxu0 %v789
        %821 = vmatprep.subr.bf16.mxu0 0
        %822 = vmatpush2.bf16.msra.mxu0 0
        %823 = vmatprep.subr.bf16.mxu0 0
        %824 = vmatpush2.bf16.msra.mxu0 0
        %825 = vmatprep.subr.bf16.mxu0 0
        %826 = vmatpush2.bf16.msra.mxu0 0
        %827 = vmatprep.subr.bf16.mxu0 0
        %828 = vmatpush2.bf16.msra.mxu0 0
        %829 = vmatprep.subr.bf16.mxu0 0
        %830 = vmatpush2.bf16.msra.mxu0 0
        %831 = vmatprep.subr.bf16.mxu0 0
        %832 = vmatpush2.bf16.msra.mxu0 0
        %833 = vmatprep.subr.bf16.mxu0 0
        %834 = vmatpush2.bf16.msra.mxu0 0
        %835 = vmatprep.subr.bf16.mxu0 0
        %836 = vmatpush2.bf16.msra.mxu0 0
        %837 = vmatprep.mubr.bf16.mxu0 0
        %838 = vmatmul.mubr.bf16.gmra.mxu0 %v546
        %v839 = vpop.f32.mrf.mxu0
        %v840 = vadd.f32 0.0, %v839
        %v841 = vpop.f32.mrf.mxu0
        %v842 = vpop.f32.mrf.mxu0
        %v843 = vadd.f32 0.0, %v842
        %v844 = vpop.f32.mrf.mxu0
        %845 = vdwg.mxu0
        %v846 = vpack.c.bf16 %v633, %v630
        %v847 = vpack.c.bf16 %v738, %v735
        %vm848 = vcmask 523264
        %v850 = vsel %vm848, %v846, 0
        %v853 = vsel %vm848, %v847, 0
        %855 = vmatprep.subr.bf16.mxu0 0
        %856 = vmatpush1.bf16.xpose.msra.mxu0 0
        %857 = vmatprep.subr.bf16.mxu0 0
        %858 = vmatpush1.bf16.xpose.msra.mxu0 0
        %859 = vmatprep.subr.bf16.mxu0 0
        %860 = vmatpush1.bf16.xpose.msra.mxu0 0
        %861 = vmatprep.subr.bf16.mxu0 0
        %862 = vmatpush1.bf16.xpose.msra.mxu0 0
        %863 = vmatprep.subr.bf16.mxu0 0
        %864 = vmatpush1.bf16.xpose.msra.mxu0 0
        %865 = vmatprep.subr.bf16.mxu0 0
        %866 = vmatpush1.bf16.xpose.msra.mxu0 0
        %867 = vmatprep.subr.bf16.mxu0 0
        %868 = vmatpush1.bf16.xpose.msra.mxu0 0
        %869 = vmatprep.subr.bf16.mxu0 0
        %870 = vmatpush1.bf16.xpose.msra.mxu0 %v853
        %871 = vmatprep.subr.bf16.mxu0 0
        %872 = vmatpush2.bf16.xpose.msra.mxu0 0
        %873 = vmatprep.subr.bf16.mxu0 0
        %874 = vmatpush2.bf16.xpose.msra.mxu0 0
        %875 = vmatprep.subr.bf16.mxu0 0
        %876 = vmatpush2.bf16.xpose.msra.mxu0 0
        %877 = vmatprep.subr.bf16.mxu0 0
        %878 = vmatpush2.bf16.xpose.msra.mxu0 0
        %879 = vmatprep.subr.bf16.mxu0 0
        %880 = vmatpush2.bf16.xpose.msra.mxu0 0
        %881 = vmatprep.subr.bf16.mxu0 0
        %882 = vmatpush2.bf16.xpose.msra.mxu0 0
        %883 = vmatprep.subr.bf16.mxu0 0
        %884 = vmatpush2.bf16.xpose.msra.mxu0 0
        %885 = vmatprep.subr.bf16.mxu0 0
        %886 = vmatpush2.bf16.xpose.msra.mxu0 0
        %887 = vmatprep.mubr.bf16.mxu0 0
        %888 = vmatmul.mubr.bf16.gmra.mxu0 %v850
        %v889 = vpop.f32.mrf.mxu0
        %v890 = vadd.f32 0.0, %v889
        %v891 = vpop.f32.mrf.mxu0
        %v892 = vpop.f32.mrf.mxu0
        %v893 = vadd.f32 0.0, %v892
        %v894 = vpop.f32.mrf.mxu0
        %895 = vdwg.mxu0
        %vm896 = vcmask 130048
        %v897 = vsel %vm896, %v890, -inf
        %898 = vmax.xlane.f32.xlu0 %v897
        %v899 = vpop.xlane.xlu0 %898
        %v900 = vsel %vm896, %v893, -inf
        %901 = vmax.xlane.f32.xlu0 %v900
        %v902 = vpop.xlane.xlu0 %901
        %v903 = vsub.f32 %v890, %v899
        %v904 = vsub.f32 %v893, %v902
        %v905 = vmul.f32 %v903, 1.442695
        %v906 = vpow.pop %v905
        %v907 = vmul.f32 %v904, 1.442695
        %v908 = vpow.pop %v907
        %v909 = vsel %vm896, %v906, 0.0
        %910 = vadd.xlane.f32.xlu0 %v909
        %v911 = vpop.xlane.xlu0 %910
        %v912 = vsel %vm896, %v908, 0.0
        %913 = vadd.xlane.f32.xlu0 %v912
        %v914 = vpop.xlane.xlu0 %913
        %v915 = vpack.c.bf16 %v908, %v906
        %v916 = vpack.c.bf16 %v843, %v840
        %v918 = vsel %vm896, %v915, 0
        %920 = vmatprep.subr.bf16.mxu0 0
        %921 = vmatpush1.bf16.msra.mxu0 0
        %922 = vmatprep.subr.bf16.mxu0 0
        %923 = vmatpush1.bf16.msra.mxu0 0
        %924 = vmatprep.subr.bf16.mxu0 0
        %925 = vmatpush1.bf16.msra.mxu0 0
        %926 = vmatprep.subr.bf16.mxu0 0
        %927 = vmatpush1.bf16.msra.mxu0 0
        %928 = vmatprep.subr.bf16.mxu0 0
        %929 = vmatpush1.bf16.msra.mxu0 0
        %930 = vmatprep.subr.bf16.mxu0 0
        %931 = vmatpush1.bf16.msra.mxu0 0
        %932 = vmatprep.subr.bf16.mxu0 0
        %933 = vmatpush1.bf16.msra.mxu0 0
        %934 = vmatprep.subr.bf16.mxu0 0
        %935 = vmatpush1.bf16.msra.mxu0 %v916
        %936 = vmatprep.subr.bf16.mxu0 0
        %937 = vmatpush2.bf16.msra.mxu0 0
        %938 = vmatprep.subr.bf16.mxu0 0
        %939 = vmatpush2.bf16.msra.mxu0 0
        %940 = vmatprep.subr.bf16.mxu0 0
        %941 = vmatpush2.bf16.msra.mxu0 0
        %942 = vmatprep.subr.bf16.mxu0 0
        %943 = vmatpush2.bf16.msra.mxu0 0
        %944 = vmatprep.subr.bf16.mxu0 0
        %945 = vmatpush2.bf16.msra.mxu0 0
        %946 = vmatprep.subr.bf16.mxu0 0
        %947 = vmatpush2.bf16.msra.mxu0 0
        %948 = vmatprep.subr.bf16.mxu0 0
        %949 = vmatpush2.bf16.msra.mxu0 0
        %950 = vmatprep.subr.bf16.mxu0 0
        %951 = vmatpush2.bf16.msra.mxu0 0
        %952 = vmatprep.mubr.bf16.mxu0 0
        %953 = vmatmul.mubr.bf16.gmra.mxu0 %v918
        %v954 = vpop.f32.mrf.mxu0
        %v955 = vadd.f32 0.0, %v954
        %v956 = vpop.f32.mrf.mxu0
        %v957 = vpop.f32.mrf.mxu0
        %v958 = vadd.f32 0.0, %v957
        %v959 = vpop.f32.mrf.mxu0
        %960 = vdwg.mxu0
        %v961 = vrcp.pop %v911
        %v962 = vmul.f32 %v955, %v961
        %v963 = vrcp.pop %v914
        %v964 = vmul.f32 %v958, %v963
        %s965 = scalar_lea.vmem %s3, 64
        %v966 = vld [vmem:[%s965] sm:$0xf]
        %v967 = vld [vmem:[%s965 + $0x4] sm:$0xf]
        %v968 = vld [vmem:[%s965 + $0x8] sm:$0xf]
        %v969 = vld [vmem:[%s965 + $0xc] sm:$0xf]
        %v970 = vld [vmem:[%s965 + $0x10] sm:$0xf]
        %v971 = vld [vmem:[%s965 + $0x14] sm:$0xf]
        %v972 = vld [vmem:[%s965 + $0x18] sm:$0xf]
        %v973 = vld [vmem:[%s965 + $0x1c] sm:$0xf]
        %v974 = vld [vmem:[%s965 + $0x20] sm:$0xf]
        %v975 = vld [vmem:[%s965 + $0x24] sm:$0xf]
        %v976 = vld [vmem:[%s965 + $0x28] sm:$0xf]
        %v977 = vld [vmem:[%s965 + $0x2c] sm:$0xf]
        %v978 = vld [vmem:[%s965 + $0x30] sm:$0xf]
        %v979 = vld [vmem:[%s965 + $0x34] sm:$0xf]
        %v980 = vld [vmem:[%s965 + $0x38] sm:$0xf]
        %v981 = vld [vmem:[%s965 + $0x3c] sm:$0xf]
        %v998 = vunpack.c.l.b16 %v966
        %v999 = vunpack.c.l.b16 %v967
        %v1000 = vunpack.c.l.b16 %v968
        %v1001 = vunpack.c.l.b16 %v969
        %v1002 = vunpack.c.l.b16 %v970
        %v1003 = vunpack.c.l.b16 %v971
        %v1004 = vunpack.c.l.b16 %v972
        %v1005 = vunpack.c.l.b16 %v973
        %v1006 = vunpack.c.l.b16 %v974
        %v1007 = vunpack.c.l.b16 %v975
        %v1008 = vunpack.c.l.b16 %v976
        %v1009 = vunpack.c.l.b16 %v977
        %v1010 = vunpack.c.l.b16 %v978
        %v1011 = vunpack.c.l.b16 %v979
        %v1012 = vunpack.c.l.b16 %v980
        %v1013 = vunpack.c.l.b16 %v981
        %v1014 = vpack.c.b16 %v999, %v998
        %v1015 = vpack.c.b16 %v1001, %v1000
        %v1016 = vpack.c.b16 %v1003, %v1002
        %v1017 = vpack.c.b16 %v1005, %v1004
        %v1018 = vpack.c.b16 %v1007, %v1006
        %v1019 = vpack.c.b16 %v1009, %v1008
        %v1020 = vpack.c.b16 %v1011, %v1010
        %v1021 = vpack.c.b16 %v1013, %v1012
        %1030 = vmatprep.subr.bf16.mxu0 0
        %1031 = vmatpush1.bf16.msra.mxu0 %v1021
        %1032 = vmatprep.subr.bf16.mxu0 0
        %1033 = vmatpush1.bf16.msra.mxu0 %v1020
        %1034 = vmatprep.subr.bf16.mxu0 0
        %1035 = vmatpush1.bf16.msra.mxu0 %v1019
        %1036 = vmatprep.subr.bf16.mxu0 0
        %1037 = vmatpush1.bf16.msra.mxu0 %v1018
        %1038 = vmatprep.subr.bf16.mxu0 0
        %1039 = vmatpush1.bf16.msra.mxu0 %v1017
        %1040 = vmatprep.subr.bf16.mxu0 0
        %1041 = vmatpush1.bf16.msra.mxu0 %v1016
        %1042 = vmatprep.subr.bf16.mxu0 0
        %1043 = vmatpush1.bf16.msra.mxu0 %v1015
        %1044 = vmatprep.subr.bf16.mxu0 0
        %1045 = vmatpush1.bf16.msra.mxu0 %v1014
        %1046 = vmatprep.subr.bf16.mxu0 0
        %1047 = vmatpush2.bf16.msra.mxu0 0
        %1048 = vmatprep.subr.bf16.mxu0 0
        %1049 = vmatpush2.bf16.msra.mxu0 0
        %1050 = vmatprep.subr.bf16.mxu0 0
        %1051 = vmatpush2.bf16.msra.mxu0 0
        %1052 = vmatprep.subr.bf16.mxu0 0
        %1053 = vmatpush2.bf16.msra.mxu0 0
        %1054 = vmatprep.subr.bf16.mxu0 0
        %1055 = vmatpush2.bf16.msra.mxu0 0
        %1056 = vmatprep.subr.bf16.mxu0 0
        %1057 = vmatpush2.bf16.msra.mxu0 0
        %1058 = vmatprep.subr.bf16.mxu0 0
        %1059 = vmatpush2.bf16.msra.mxu0 0
        %1060 = vmatprep.subr.bf16.mxu0 0
        %1061 = vmatpush2.bf16.msra.mxu0 0
        %1062 = vmatprep.mubr.bf16.mxu0 0
        %1063 = vmatmul.mubr.bf16.gmra.mxu0 %v546
        %v1064 = vpop.f32.mrf.mxu0
        %v1065 = vadd.f32 0.0, %v1064
        %v1066 = vpop.f32.mrf.mxu0
        %v1067 = vpop.f32.mrf.mxu0
        %v1068 = vadd.f32 0.0, %v1067
        %v1069 = vpop.f32.mrf.mxu0
        %1070 = vdwg.mxu0
        %s1071 = scalar_lea.vmem %s4, 64
        %v1072 = vld [vmem:[%s1071] sm:$0xf]
        %v1073 = vld [vmem:[%s1071 + $0x4] sm:$0xf]
        %v1074 = vld [vmem:[%s1071 + $0x8] sm:$0xf]
        %v1075 = vld [vmem:[%s1071 + $0xc] sm:$0xf]
        %v1076 = vld [vmem:[%s1071 + $0x10] sm:$0xf]
        %v1077 = vld [vmem:[%s1071 + $0x14] sm:$0xf]
        %v1078 = vld [vmem:[%s1071 + $0x18] sm:$0xf]
        %v1079 = vld [vmem:[%s1071 + $0x1c] sm:$0xf]
        %v1080 = vld [vmem:[%s1071 + $0x20] sm:$0xf]
        %v1081 = vld [vmem:[%s1071 + $0x24] sm:$0xf]
        %v1082 = vld [vmem:[%s1071 + $0x28] sm:$0xf]
        %v1083 = vld [vmem:[%s1071 + $0x2c] sm:$0xf]
        %v1084 = vld [vmem:[%s1071 + $0x30] sm:$0xf]
        %v1085 = vld [vmem:[%s1071 + $0x34] sm:$0xf]
        %v1086 = vld [vmem:[%s1071 + $0x38] sm:$0xf]
        %v1087 = vld [vmem:[%s1071 + $0x3c] sm:$0xf]
        %v1104 = vunpack.c.l.b16 %v1072
        %v1105 = vunpack.c.l.b16 %v1073
        %v1106 = vunpack.c.l.b16 %v1074
        %v1107 = vunpack.c.l.b16 %v1075
        %v1108 = vunpack.c.l.b16 %v1076
        %v1109 = vunpack.c.l.b16 %v1077
        %v1110 = vunpack.c.l.b16 %v1078
        %v1111 = vunpack.c.l.b16 %v1079
        %v1112 = vunpack.c.l.b16 %v1080
        %v1113 = vunpack.c.l.b16 %v1081
        %v1114 = vunpack.c.l.b16 %v1082
        %v1115 = vunpack.c.l.b16 %v1083
        %v1116 = vunpack.c.l.b16 %v1084
        %v1117 = vunpack.c.l.b16 %v1085
        %v1118 = vunpack.c.l.b16 %v1086
        %v1119 = vunpack.c.l.b16 %v1087
        %v1120 = vpack.c.b16 %v1105, %v1104
        %v1121 = vpack.c.b16 %v1107, %v1106
        %v1122 = vpack.c.b16 %v1109, %v1108
        %v1123 = vpack.c.b16 %v1111, %v1110
        %v1124 = vpack.c.b16 %v1113, %v1112
        %v1125 = vpack.c.b16 %v1115, %v1114
        %v1126 = vpack.c.b16 %v1117, %v1116
        %v1127 = vpack.c.b16 %v1119, %v1118
        %1136 = vmatprep.subr.bf16.mxu0 0
        %1137 = vmatpush1.bf16.msra.mxu0 %v1127
        %1138 = vmatprep.subr.bf16.mxu0 0
        %1139 = vmatpush1.bf16.msra.mxu0 %v1126
        %1140 = vmatprep.subr.bf16.mxu0 0
        %1141 = vmatpush1.bf16.msra.mxu0 %v1125
        %1142 = vmatprep.subr.bf16.mxu0 0
        %1143 = vmatpush1.bf16.msra.mxu0 %v1124
        %1144 = vmatprep.subr.bf16.mxu0 0
        %1145 = vmatpush1.bf16.msra.mxu0 %v1123
        %1146 = vmatprep.subr.bf16.mxu0 0
        %1147 = vmatpush1.bf16.msra.mxu0 %v1122
        %1148 = vmatprep.subr.bf16.mxu0 0
        %1149 = vmatpush1.bf16.msra.mxu0 %v1121
        %1150 = vmatprep.subr.bf16.mxu0 0
        %1151 = vmatpush1.bf16.msra.mxu0 %v1120
        %1152 = vmatprep.subr.bf16.mxu0 0
        %1153 = vmatpush2.bf16.msra.mxu0 0
        %1154 = vmatprep.subr.bf16.mxu0 0
        %1155 = vmatpush2.bf16.msra.mxu0 0
        %1156 = vmatprep.subr.bf16.mxu0 0
        %1157 = vmatpush2.bf16.msra.mxu0 0
        %1158 = vmatprep.subr.bf16.mxu0 0
        %1159 = vmatpush2.bf16.msra.mxu0 0
        %1160 = vmatprep.subr.bf16.mxu0 0
        %1161 = vmatpush2.bf16.msra.mxu0 0
        %1162 = vmatprep.subr.bf16.mxu0 0
        %1163 = vmatpush2.bf16.msra.mxu0 0
        %1164 = vmatprep.subr.bf16.mxu0 0
        %1165 = vmatpush2.bf16.msra.mxu0 0
        %1166 = vmatprep.subr.bf16.mxu0 0
        %1167 = vmatpush2.bf16.msra.mxu0 0
        %1168 = vmatprep.mubr.bf16.mxu0 0
        %1169 = vmatmul.mubr.bf16.gmra.mxu0 %v546
        %v1170 = vpop.f32.mrf.mxu0
        %v1171 = vadd.f32 0.0, %v1170
        %v1172 = vpop.f32.mrf.mxu0
        %v1173 = vpop.f32.mrf.mxu0
        %v1174 = vadd.f32 0.0, %v1173
        %v1175 = vpop.f32.mrf.mxu0
        %1176 = vdwg.mxu0
        %s1177 = scalar_lea.vmem %s5, 64
        %v1178 = vld [vmem:[%s1177] sm:$0xf]
        %v1179 = vld [vmem:[%s1177 + $0x4] sm:$0xf]
        %v1180 = vld [vmem:[%s1177 + $0x8] sm:$0xf]
        %v1181 = vld [vmem:[%s1177 + $0xc] sm:$0xf]
        %v1182 = vld [vmem:[%s1177 + $0x10] sm:$0xf]
        %v1183 = vld [vmem:[%s1177 + $0x14] sm:$0xf]
        %v1184 = vld [vmem:[%s1177 + $0x18] sm:$0xf]
        %v1185 = vld [vmem:[%s1177 + $0x1c] sm:$0xf]
        %v1186 = vld [vmem:[%s1177 + $0x20] sm:$0xf]
        %v1187 = vld [vmem:[%s1177 + $0x24] sm:$0xf]
        %v1188 = vld [vmem:[%s1177 + $0x28] sm:$0xf]
        %v1189 = vld [vmem:[%s1177 + $0x2c] sm:$0xf]
        %v1190 = vld [vmem:[%s1177 + $0x30] sm:$0xf]
        %v1191 = vld [vmem:[%s1177 + $0x34] sm:$0xf]
        %v1192 = vld [vmem:[%s1177 + $0x38] sm:$0xf]
        %v1193 = vld [vmem:[%s1177 + $0x3c] sm:$0xf]
        %v1210 = vunpack.c.l.b16 %v1178
        %v1211 = vunpack.c.l.b16 %v1179
        %v1212 = vunpack.c.l.b16 %v1180
        %v1213 = vunpack.c.l.b16 %v1181
        %v1214 = vunpack.c.l.b16 %v1182
        %v1215 = vunpack.c.l.b16 %v1183
        %v1216 = vunpack.c.l.b16 %v1184
        %v1217 = vunpack.c.l.b16 %v1185
        %v1218 = vunpack.c.l.b16 %v1186
        %v1219 = vunpack.c.l.b16 %v1187
        %v1220 = vunpack.c.l.b16 %v1188
        %v1221 = vunpack.c.l.b16 %v1189
        %v1222 = vunpack.c.l.b16 %v1190
        %v1223 = vunpack.c.l.b16 %v1191
        %v1224 = vunpack.c.l.b16 %v1192
        %v1225 = vunpack.c.l.b16 %v1193
        %v1226 = vpack.c.b16 %v1211, %v1210
        %v1227 = vpack.c.b16 %v1213, %v1212
        %v1228 = vpack.c.b16 %v1215, %v1214
        %v1229 = vpack.c.b16 %v1217, %v1216
        %v1230 = vpack.c.b16 %v1219, %v1218
        %v1231 = vpack.c.b16 %v1221, %v1220
        %v1232 = vpack.c.b16 %v1223, %v1222
        %v1233 = vpack.c.b16 %v1225, %v1224
        %1242 = vmatprep.subr.bf16.mxu0 0
        %1243 = vmatpush1.bf16.msra.mxu0 %v1233
        %1244 = vmatprep.subr.bf16.mxu0 0
        %1245 = vmatpush1.bf16.msra.mxu0 %v1232
        %1246 = vmatprep.subr.bf16.mxu0 0
        %1247 = vmatpush1.bf16.msra.mxu0 %v1231
        %1248 = vmatprep.subr.bf16.mxu0 0
        %1249 = vmatpush1.bf16.msra.mxu0 %v1230
        %1250 = vmatprep.subr.bf16.mxu0 0
        %1251 = vmatpush1.bf16.msra.mxu0 %v1229
        %1252 = vmatprep.subr.bf16.mxu0 0
        %1253 = vmatpush1.bf16.msra.mxu0 %v1228
        %1254 = vmatprep.subr.bf16.mxu0 0
        %1255 = vmatpush1.bf16.msra.mxu0 %v1227
        %1256 = vmatprep.subr.bf16.mxu0 0
        %1257 = vmatpush1.bf16.msra.mxu0 %v1226
        %1258 = vmatprep.subr.bf16.mxu0 0
        %1259 = vmatpush2.bf16.msra.mxu0 0
        %1260 = vmatprep.subr.bf16.mxu0 0
        %1261 = vmatpush2.bf16.msra.mxu0 0
        %1262 = vmatprep.subr.bf16.mxu0 0
        %1263 = vmatpush2.bf16.msra.mxu0 0
        %1264 = vmatprep.subr.bf16.mxu0 0
        %1265 = vmatpush2.bf16.msra.mxu0 0
        %1266 = vmatprep.subr.bf16.mxu0 0
        %1267 = vmatpush2.bf16.msra.mxu0 0
        %1268 = vmatprep.subr.bf16.mxu0 0
        %1269 = vmatpush2.bf16.msra.mxu0 0
        %1270 = vmatprep.subr.bf16.mxu0 0
        %1271 = vmatpush2.bf16.msra.mxu0 0
        %1272 = vmatprep.subr.bf16.mxu0 0
        %1273 = vmatpush2.bf16.msra.mxu0 0
        %1274 = vmatprep.mubr.bf16.mxu0 0
        %1275 = vmatmul.mubr.bf16.gmra.mxu0 %v546
        %v1276 = vpop.f32.mrf.mxu0
        %v1277 = vadd.f32 0.0, %v1276
        %v1278 = vpop.f32.mrf.mxu0
        %v1279 = vpop.f32.mrf.mxu0
        %v1280 = vadd.f32 0.0, %v1279
        %v1281 = vpop.f32.mrf.mxu0
        %1282 = vdwg.mxu0
        %v1283 = vpack.c.bf16 %v1068, %v1065
        %v1284 = vpack.c.bf16 %v1174, %v1171
        %v1286 = vsel %vm848, %v1283, 0
        %v1289 = vsel %vm848, %v1284, 0
        %1291 = vmatprep.subr.bf16.mxu0 0
        %1292 = vmatpush1.bf16.xpose.msra.mxu0 0
        %1293 = vmatprep.subr.bf16.mxu0 0
        %1294 = vmatpush1.bf16.xpose.msra.mxu0 0
        %1295 = vmatprep.subr.bf16.mxu0 0
        %1296 = vmatpush1.bf16.xpose.msra.mxu0 0
        %1297 = vmatprep.subr.bf16.mxu0 0
        %1298 = vmatpush1.bf16.xpose.msra.mxu0 0
        %1299 = vmatprep.subr.bf16.mxu0 0
        %1300 = vmatpush1.bf16.xpose.msra.mxu0 0
        %1301 = vmatprep.subr.bf16.mxu0 0
        %1302 = vmatpush1.bf16.xpose.msra.mxu0 0
        %1303 = vmatprep.subr.bf16.mxu0 0
        %1304 = vmatpush1.bf16.xpose.msra.mxu0 0
        %1305 = vmatprep.subr.bf16.mxu0 0
        %1306 = vmatpush1.bf16.xpose.msra.mxu0 %v1289
        %1307 = vmatprep.subr.bf16.mxu0 0
        %1308 = vmatpush2.bf16.xpose.msra.mxu0 0
        %1309 = vmatprep.subr.bf16.mxu0 0
        %1310 = vmatpush2.bf16.xpose.msra.mxu0 0
        %1311 = vmatprep.subr.bf16.mxu0 0
        %1312 = vmatpush2.bf16.xpose.msra.mxu0 0
        %1313 = vmatprep.subr.bf16.mxu0 0
        %1314 = vmatpush2.bf16.xpose.msra.mxu0 0
        %1315 = vmatprep.subr.bf16.mxu0 0
        %1316 = vmatpush2.bf16.xpose.msra.mxu0 0
        %1317 = vmatprep.subr.bf16.mxu0 0
        %1318 = vmatpush2.bf16.xpose.msra.mxu0 0
        %1319 = vmatprep.subr.bf16.mxu0 0
        %1320 = vmatpush2.bf16.xpose.msra.mxu0 0
        %1321 = vmatprep.subr.bf16.mxu0 0
        %1322 = vmatpush2.bf16.xpose.msra.mxu0 0
        %1323 = vmatprep.mubr.bf16.mxu0 0
        %1324 = vmatmul.mubr.bf16.gmra.mxu0 %v1286
        %v1325 = vpop.f32.mrf.mxu0
        %v1326 = vadd.f32 0.0, %v1325
        %v1327 = vpop.f32.mrf.mxu0
        %v1328 = vpop.f32.mrf.mxu0
        %v1329 = vadd.f32 0.0, %v1328
        %v1330 = vpop.f32.mrf.mxu0
        %1331 = vdwg.mxu0
        %v1332 = vsel %vm896, %v1326, -inf
        %1333 = vmax.xlane.f32.xlu0 %v1332
        %v1334 = vpop.xlane.xlu0 %1333
        %v1335 = vsel %vm896, %v1329, -inf
        %1336 = vmax.xlane.f32.xlu0 %v1335
        %v1337 = vpop.xlane.xlu0 %1336
        %v1338 = vsub.f32 %v1326, %v1334
        %v1339 = vsub.f32 %v1329, %v1337
        %v1340 = vmul.f32 %v1338, 1.442695
        %v1341 = vpow.pop %v1340
        %v1342 = vmul.f32 %v1339, 1.442695
        %v1343 = vpow.pop %v1342
        %v1344 = vsel %vm896, %v1341, 0.0
        %1345 = vadd.xlane.f32.xlu0 %v1344
        %v1346 = vpop.xlane.xlu0 %1345
        %v1347 = vsel %vm896, %v1343, 0.0
        %1348 = vadd.xlane.f32.xlu0 %v1347
        %v1349 = vpop.xlane.xlu0 %1348
        %v1350 = vpack.c.bf16 %v1343, %v1341
        %v1351 = vpack.c.bf16 %v1280, %v1277
        %v1353 = vsel %vm896, %v1350, 0
        %1355 = vmatprep.subr.bf16.mxu0 0
        %1356 = vmatpush1.bf16.msra.mxu0 0
        %1357 = vmatprep.subr.bf16.mxu0 0
        %1358 = vmatpush1.bf16.msra.mxu0 0
        %1359 = vmatprep.subr.bf16.mxu0 0
        %1360 = vmatpush1.bf16.msra.mxu0 0
        %1361 = vmatprep.subr.bf16.mxu0 0
        %1362 = vmatpush1.bf16.msra.mxu0 0
        %1363 = vmatprep.subr.bf16.mxu0 0
        %1364 = vmatpush1.bf16.msra.mxu0 0
        %1365 = vmatprep.subr.bf16.mxu0 0
        %1366 = vmatpush1.bf16.msra.mxu0 0
        %1367 = vmatprep.subr.bf16.mxu0 0
        %1368 = vmatpush1.bf16.msra.mxu0 0
        %1369 = vmatprep.subr.bf16.mxu0 0
        %1370 = vmatpush1.bf16.msra.mxu0 %v1351
        %1371 = vmatprep.subr.bf16.mxu0 0
        %1372 = vmatpush2.bf16.msra.mxu0 0
        %1373 = vmatprep.subr.bf16.mxu0 0
        %1374 = vmatpush2.bf16.msra.mxu0 0
        %1375 = vmatprep.subr.bf16.mxu0 0
        %1376 = vmatpush2.bf16.msra.mxu0 0
        %1377 = vmatprep.subr.bf16.mxu0 0
        %1378 = vmatpush2.bf16.msra.mxu0 0
        %1379 = vmatprep.subr.bf16.mxu0 0
        %1380 = vmatpush2.bf16.msra.mxu0 0
        %1381 = vmatprep.subr.bf16.mxu0 0
        %1382 = vmatpush2.bf16.msra.mxu0 0
        %1383 = vmatprep.subr.bf16.mxu0 0
        %1384 = vmatpush2.bf16.msra.mxu0 0
        %1385 = vmatprep.subr.bf16.mxu0 0
        %1386 = vmatpush2.bf16.msra.mxu0 0
        %1387 = vmatprep.mubr.bf16.mxu0 0
        %1388 = vmatmul.mubr.bf16.gmra.mxu0 %v1353
        %v1389 = vpop.f32.mrf.mxu0
        %v1390 = vadd.f32 0.0, %v1389
        %v1391 = vpop.f32.mrf.mxu0
        %v1392 = vpop.f32.mrf.mxu0
        %v1393 = vadd.f32 0.0, %v1392
        %v1394 = vpop.f32.mrf.mxu0
        %1395 = vdwg.mxu0
        %v1396 = vrcp.pop %v1346
        %v1397 = vmul.f32 %v1390, %v1396
        %v1398 = vrcp.pop %v1349
        %v1399 = vmul.f32 %v1393, %v1398
        %1402 = vrot.lane.b32.xlu0 %v1397, 64
        %v1403 = vpop.permute.xlu0 %1402
        %1404 = vrot.lane.b32.xlu0 %v1399, 64
        %v1405 = vpop.permute.xlu0 %1404
        %v1408 = vsel %vm848, %v962, %v1403
        %v1409 = vsel %vm848, %v964, %v1405
        %v1410 = vld [vmem:[%s6] sm:$0xf]
        %v1411 = vld [vmem:[%s6 + $0x4] sm:$0xf]
        %v1412 = vld [vmem:[%s6 + $0x8] sm:$0xf]
        %v1413 = vld [vmem:[%s6 + $0xc] sm:$0xf]
        %v1414 = vld [vmem:[%s6 + $0x10] sm:$0xf]
        %v1415 = vld [vmem:[%s6 + $0x14] sm:$0xf]
        %v1416 = vld [vmem:[%s6 + $0x18] sm:$0xf]
        %v1417 = vld [vmem:[%s6 + $0x1c] sm:$0xf]
        %v1418 = vld [vmem:[%s6 + $0x20] sm:$0xf]
        %v1419 = vld [vmem:[%s6 + $0x24] sm:$0xf]
        %v1420 = vld [vmem:[%s6 + $0x28] sm:$0xf]
        %v1421 = vld [vmem:[%s6 + $0x2c] sm:$0xf]
        %v1422 = vld [vmem:[%s6 + $0x30] sm:$0xf]
        %v1423 = vld [vmem:[%s6 + $0x34] sm:$0xf]
        %v1424 = vld [vmem:[%s6 + $0x38] sm:$0xf]
        %v1425 = vld [vmem:[%s6 + $0x3c] sm:$0xf]
        %v1426 = vpack.c.bf16 %v1409, %v1408
        %v1427 = vld [vmem:[%s7] sm:$0x1]
        %v1429 = vlaneseq
        %v1430 = vshrl.u32 %v1429, 7
        %v1431 = vsub.s32 0, %v1430
        %v1432 = vrot.slane %v1427, %v1431
        %v1450 = vunpack.c.l.b16 %v1410
        %v1451 = vunpack.c.l.b16 %v1411
        %v1452 = vunpack.c.l.b16 %v1412
        %v1453 = vunpack.c.l.b16 %v1413
        %v1454 = vunpack.c.l.b16 %v1414
        %v1455 = vunpack.c.l.b16 %v1415
        %v1456 = vunpack.c.l.b16 %v1416
        %v1457 = vunpack.c.l.b16 %v1417
        %v1458 = vunpack.c.l.b16 %v1418
        %v1459 = vunpack.c.l.b16 %v1419
        %v1460 = vunpack.c.l.b16 %v1420
        %v1461 = vunpack.c.l.b16 %v1421
        %v1462 = vunpack.c.l.b16 %v1422
        %v1463 = vunpack.c.l.b16 %v1423
        %v1464 = vunpack.c.l.b16 %v1424
        %v1465 = vunpack.c.l.b16 %v1425
        %v1466 = vpack.c.b16 %v1451, %v1450
        %v1467 = vpack.c.b16 %v1453, %v1452
        %v1468 = vpack.c.b16 %v1455, %v1454
        %v1469 = vpack.c.b16 %v1457, %v1456
        %v1470 = vpack.c.b16 %v1459, %v1458
        %v1471 = vpack.c.b16 %v1461, %v1460
        %v1472 = vpack.c.b16 %v1463, %v1462
        %v1473 = vpack.c.b16 %v1465, %v1464
        %1482 = vmatprep.subr.bf16.mxu0 0
        %1483 = vmatpush1.bf16.msra.mxu0 %v1473
        %1484 = vmatprep.subr.bf16.mxu0 0
        %1485 = vmatpush1.bf16.msra.mxu0 %v1472
        %1486 = vmatprep.subr.bf16.mxu0 0
        %1487 = vmatpush1.bf16.msra.mxu0 %v1471
        %1488 = vmatprep.subr.bf16.mxu0 0
        %1489 = vmatpush1.bf16.msra.mxu0 %v1470
        %1490 = vmatprep.subr.bf16.mxu0 0
        %1491 = vmatpush1.bf16.msra.mxu0 %v1469
        %1492 = vmatprep.subr.bf16.mxu0 0
        %1493 = vmatpush1.bf16.msra.mxu0 %v1468
        %1494 = vmatprep.subr.bf16.mxu0 0
        %1495 = vmatpush1.bf16.msra.mxu0 %v1467
        %1496 = vmatprep.subr.bf16.mxu0 0
        %1497 = vmatpush1.bf16.msra.mxu0 %v1466
        %1498 = vmatprep.subr.bf16.mxu0 0
        %1499 = vmatpush2.bf16.msra.mxu0 0
        %1500 = vmatprep.subr.bf16.mxu0 0
        %1501 = vmatpush2.bf16.msra.mxu0 0
        %1502 = vmatprep.subr.bf16.mxu0 0
        %1503 = vmatpush2.bf16.msra.mxu0 0
        %1504 = vmatprep.subr.bf16.mxu0 0
        %1505 = vmatpush2.bf16.msra.mxu0 0
        %1506 = vmatprep.subr.bf16.mxu0 0
        %1507 = vmatpush2.bf16.msra.mxu0 0
        %1508 = vmatprep.subr.bf16.mxu0 0
        %1509 = vmatpush2.bf16.msra.mxu0 0
        %1510 = vmatprep.subr.bf16.mxu0 0
        %1511 = vmatpush2.bf16.msra.mxu0 0
        %1512 = vmatprep.subr.bf16.mxu0 0
        %1513 = vmatpush2.bf16.msra.mxu0 0
        %1514 = vmatprep.mubr.bf16.mxu0 0
        %1515 = vmatmul.mubr.bf16.gmra.mxu0 %v1426
        %v1516 = vpop.f32.mrf.mxu0
        %v1517 = vadd.f32 %v1432, %v1516
        %v1518 = vpop.f32.mrf.mxu0
        %v1519 = vpop.f32.mrf.mxu0
        %v1520 = vadd.f32 %v1432, %v1519
        %v1521 = vpop.f32.mrf.mxu0
        %1522 = vdwg.mxu0
        %v1523 = vadd.f32 %v487, %v1517
        %v1524 = vadd.f32 %v488, %v1520
        %v1525 = vld [vmem:[%s8] sm:$0x1]
        %v1526 = vld [vmem:[%s9] sm:$0x1]
        %1527 = vadd.xlane.f32.xlu0 %v1523
        %v1528 = vpop.xlane.xlu0 %1527
        %1529 = vadd.xlane.f32.xlu0 %v1524
        %v1530 = vpop.xlane.xlu0 %1529
        %v1531 = vmul.f32 %v1528, %v495
        %v1532 = vmul.f32 %v1530, %v495
        %v1533 = vsub.f32 %v1523, %v1531
        %v1534 = vsub.f32 %v1524, %v1532
        %v1535 = vmul.f32 %v1533, %v1533
        %v1536 = vmul.f32 %v1534, %v1534
        %1537 = vadd.xlane.f32.xlu0 %v1535
        %v1538 = vpop.xlane.xlu0 %1537
        %1539 = vadd.xlane.f32.xlu0 %v1536
        %v1540 = vpop.xlane.xlu0 %1539
        %v1541 = vmul.f32 %v1538, %v495
        %v1542 = vmul.f32 %v1540, %v495
        %v1543 = vadd.f32 %v1541, 1e-05
        %v1544 = vadd.f32 %v1542, 1e-05
        %v1545 = vrsqrt.pop %v1543
        %v1546 = vrsqrt.pop %v1544
        %v1547 = vmul.f32 %v1533, %v1545
        %v1548 = vmul.f32 %v1534, %v1546
        %v1550 = vlaneseq
        %v1551 = vshrl.u32 %v1550, 7
        %v1552 = vsub.s32 0, %v1551
        %v1553 = vrot.slane %v1525, %v1552
        %v1555 = vmul.f32 %v1547, %v1553
        %v1556 = vmul.f32 %v1548, %v1553
        %v1558 = vlaneseq
        %v1559 = vshrl.u32 %v1558, 7
        %v1560 = vsub.s32 0, %v1559
        %v1561 = vrot.slane %v1526, %v1560
        %v1563 = vadd.f32 %v1555, %v1561
        %v1564 = vadd.f32 %v1556, %v1561
        %v1565 = vld [vmem:[%s10] sm:$0xff]
        %v1566 = vld [vmem:[%s10 + $0x8] sm:$0xff]
        %v1567 = vld [vmem:[%s10 + $0x10] sm:$0xff]
        %v1568 = vld [vmem:[%s10 + $0x18] sm:$0xff]
        %v1569 = vld [vmem:[%s10 + $0x20] sm:$0xff]
        %v1570 = vld [vmem:[%s10 + $0x28] sm:$0xff]
        %v1571 = vld [vmem:[%s10 + $0x30] sm:$0xff]
        %v1572 = vld [vmem:[%s10 + $0x38] sm:$0xff]
        %v1573 = vld [vmem:[%s10 + $0x40] sm:$0xff]
        %v1574 = vld [vmem:[%s10 + $0x48] sm:$0xff]
        %v1575 = vld [vmem:[%s10 + $0x50] sm:$0xff]
        %v1576 = vld [vmem:[%s10 + $0x58] sm:$0xff]
        %v1577 = vld [vmem:[%s10 + $0x60] sm:$0xff]
        %v1578 = vld [vmem:[%s10 + $0x68] sm:$0xff]
        %v1579 = vld [vmem:[%s10 + $0x70] sm:$0xff]
        %v1580 = vld [vmem:[%s10 + $0x78] sm:$0xff]
        %v1581 = vld [vmem:[%s10 + $0x80] sm:$0xff]
        %v1582 = vld [vmem:[%s10 + $0x88] sm:$0xff]
        %v1583 = vld [vmem:[%s10 + $0x90] sm:$0xff]
        %v1584 = vld [vmem:[%s10 + $0x98] sm:$0xff]
        %v1585 = vld [vmem:[%s10 + $0xa0] sm:$0xff]
        %v1586 = vld [vmem:[%s10 + $0xa8] sm:$0xff]
        %v1587 = vld [vmem:[%s10 + $0xb0] sm:$0xff]
        %v1588 = vld [vmem:[%s10 + $0xb8] sm:$0xff]
        %v1589 = vld [vmem:[%s10 + $0xc0] sm:$0xff]
        %v1590 = vld [vmem:[%s10 + $0xc8] sm:$0xff]
        %v1591 = vld [vmem:[%s10 + $0xd0] sm:$0xff]
        %v1592 = vld [vmem:[%s10 + $0xd8] sm:$0xff]
        %v1593 = vld [vmem:[%s10 + $0xe0] sm:$0xff]
        %v1594 = vld [vmem:[%s10 + $0xe8] sm:$0xff]
        %v1595 = vld [vmem:[%s10 + $0xf0] sm:$0xff]
        %v1596 = vld [vmem:[%s10 + $0xf8] sm:$0xff]
        %v1597 = vpack.c.bf16 %v1564, %v1563
        %v1598 = vld [vmem:[%s11] sm:$0xf]
        %v1600 = vlaneseq
        %v1601 = vshrl.u32 %v1600, 7
        %v1602 = vsub.s32 0, %v1601
        %v1603 = vrot.slane %v1598, %v1602
        %v1604 = vlaneseq
        %v1605 = vshrl.u32 %v1604, 7
        %v1606 = vsub.s32 1, %v1605
        %v1607 = vrot.slane %v1598, %v1606
        %v1608 = vlaneseq
        %v1609 = vshrl.u32 %v1608, 7
        %v1610 = vsub.s32 2, %v1609
        %v1611 = vrot.slane %v1598, %v1610
        %v1612 = vlaneseq
        %v1613 = vshrl.u32 %v1612, 7
        %v1614 = vsub.s32 3, %v1613
        %v1615 = vrot.slane %v1598, %v1614
        %v1652 = vunpack.c.l.b16 %v1565
        %v1653 = vunpack.c.h.b16 %v1565
        %v1654 = vunpack.c.l.b16 %v1566
        %v1655 = vunpack.c.h.b16 %v1566
        %v1656 = vunpack.c.l.b16 %v1567
        %v1657 = vunpack.c.h.b16 %v1567
        %v1658 = vunpack.c.l.b16 %v1568
        %v1659 = vunpack.c.h.b16 %v1568
        %v1660 = vunpack.c.l.b16 %v1569
        %v1661 = vunpack.c.h.b16 %v1569
        %v1662 = vunpack.c.l.b16 %v1570
        %v1663 = vunpack.c.h.b16 %v1570
        %v1664 = vunpack.c.l.b16 %v1571
        %v1665 = vunpack.c.h.b16 %v1571
        %v1666 = vunpack.c.l.b16 %v1572
        %v1667 = vunpack.c.h.b16 %v1572
        %v1668 = vunpack.c.l.b16 %v1573
        %v1669 = vunpack.c.h.b16 %v1573
        %v1670 = vunpack.c.l.b16 %v1574
        %v1671 = vunpack.c.h.b16 %v1574
        %v1672 = vunpack.c.l.b16 %v1575
        %v1673 = vunpack.c.h.b16 %v1575
        %v1674 = vunpack.c.l.b16 %v1576
        %v1675 = vunpack.c.h.b16 %v1576
        %v1676 = vunpack.c.l.b16 %v1577
        %v1677 = vunpack.c.h.b16 %v1577
        %v1678 = vunpack.c.l.b16 %v1578
        %v1679 = vunpack.c.h.b16 %v1578
        %v1680 = vunpack.c.l.b16 %v1579
        %v1681 = vunpack.c.h.b16 %v1579
        %v1682 = vunpack.c.l.b16 %v1580
        %v1683 = vunpack.c.h.b16 %v1580
        %v1684 = vunpack.c.l.b16 %v1581
        %v1685 = vunpack.c.h.b16 %v1581
        %v1686 = vunpack.c.l.b16 %v1582
        %v1687 = vunpack.c.h.b16 %v1582
        %v1688 = vunpack.c.l.b16 %v1583
        %v1689 = vunpack.c.h.b16 %v1583
        %v1690 = vunpack.c.l.b16 %v1584
        %v1691 = vunpack.c.h.b16 %v1584
        %v1692 = vunpack.c.l.b16 %v1585
        %v1693 = vunpack.c.h.b16 %v1585
        %v1694 = vunpack.c.l.b16 %v1586
        %v1695 = vunpack.c.h.b16 %v1586
        %v1696 = vunpack.c.l.b16 %v1587
        %v1697 = vunpack.c.h.b16 %v1587
        %v1698 = vunpack.c.l.b16 %v1588
        %v1699 = vunpack.c.h.b16 %v1588
        %v1700 = vunpack.c.l.b16 %v1589
        %v1701 = vunpack.c.h.b16 %v1589
        %v1702 = vunpack.c.l.b16 %v1590
        %v1703 = vunpack.c.h.b16 %v1590
        %v1704 = vunpack.c.l.b16 %v1591
        %v1705 = vunpack.c.h.b16 %v1591
        %v1706 = vunpack.c.l.b16 %v1592
        %v1707 = vunpack.c.h.b16 %v1592
        %v1708 = vunpack.c.l.b16 %v1593
        %v1709 = vunpack.c.h.b16 %v1593
        %v1710 = vunpack.c.l.b16 %v1594
        %v1711 = vunpack.c.h.b16 %v1594
        %v1712 = vunpack.c.l.b16 %v1595
        %v1713 = vunpack.c.h.b16 %v1595
        %v1714 = vunpack.c.l.b16 %v1596
        %v1715 = vunpack.c.h.b16 %v1596
        %v1716 = vpack.c.b16 %v1656, %v1652
        %v1717 = vpack.c.b16 %v1657, %v1653
        %v1718 = vpack.c.b16 %v1658, %v1654
        %v1719 = vpack.c.b16 %v1659, %v1655
        %v1720 = vpack.c.b16 %v1664, %v1660
        %v1721 = vpack.c.b16 %v1665, %v1661
        %v1722 = vpack.c.b16 %v1666, %v1662
        %v1723 = vpack.c.b16 %v1667, %v1663
        %v1724 = vpack.c.b16 %v1672, %v1668
        %v1725 = vpack.c.b16 %v1673, %v1669
        %v1726 = vpack.c.b16 %v1674, %v1670
        %v1727 = vpack.c.b16 %v1675, %v1671
        %v1728 = vpack.c.b16 %v1680, %v1676
        %v1729 = vpack.c.b16 %v1681, %v1677
        %v1730 = vpack.c.b16 %v1682, %v1678
        %v1731 = vpack.c.b16 %v1683, %v1679
        %v1732 = vpack.c.b16 %v1688, %v1684
        %v1733 = vpack.c.b16 %v1689, %v1685
        %v1734 = vpack.c.b16 %v1690, %v1686
        %v1735 = vpack.c.b16 %v1691, %v1687
        %v1736 = vpack.c.b16 %v1696, %v1692
        %v1737 = vpack.c.b16 %v1697, %v1693
        %v1738 = vpack.c.b16 %v1698, %v1694
        %v1739 = vpack.c.b16 %v1699, %v1695
        %v1740 = vpack.c.b16 %v1704, %v1700
        %v1741 = vpack.c.b16 %v1705, %v1701
        %v1742 = vpack.c.b16 %v1706, %v1702
        %v1743 = vpack.c.b16 %v1707, %v1703
        %v1744 = vpack.c.b16 %v1712, %v1708
        %v1745 = vpack.c.b16 %v1713, %v1709
        %v1746 = vpack.c.b16 %v1714, %v1710
        %v1747 = vpack.c.b16 %v1715, %v1711
        %1780 = vmatprep.subr.bf16.mxu0 %v1745
        %1781 = vmatpush1.bf16.msra.mxu0 %v1744
        %1782 = vmatprep.subr.bf16.mxu0 %v1741
        %1783 = vmatpush1.bf16.msra.mxu0 %v1740
        %1784 = vmatprep.subr.bf16.mxu0 %v1737
        %1785 = vmatpush1.bf16.msra.mxu0 %v1736
        %1786 = vmatprep.subr.bf16.mxu0 %v1733
        %1787 = vmatpush1.bf16.msra.mxu0 %v1732
        %1788 = vmatprep.subr.bf16.mxu0 %v1729
        %1789 = vmatpush1.bf16.msra.mxu0 %v1728
        %1790 = vmatprep.subr.bf16.mxu0 %v1725
        %1791 = vmatpush1.bf16.msra.mxu0 %v1724
        %1792 = vmatprep.subr.bf16.mxu0 %v1721
        %1793 = vmatpush1.bf16.msra.mxu0 %v1720
        %1794 = vmatprep.subr.bf16.mxu0 %v1717
        %1795 = vmatpush1.bf16.msra.mxu0 %v1716
        %1796 = vmatprep.subr.bf16.mxu0 0
        %1797 = vmatpush2.bf16.msra.mxu0 0
        %1798 = vmatprep.subr.bf16.mxu0 0
        %1799 = vmatpush2.bf16.msra.mxu0 0
        %1800 = vmatprep.subr.bf16.mxu0 0
        %1801 = vmatpush2.bf16.msra.mxu0 0
        %1802 = vmatprep.subr.bf16.mxu0 0
        %1803 = vmatpush2.bf16.msra.mxu0 0
        %1804 = vmatprep.subr.bf16.mxu0 0
        %1805 = vmatpush2.bf16.msra.mxu0 0
        %1806 = vmatprep.subr.bf16.mxu0 0
        %1807 = vmatpush2.bf16.msra.mxu0 0
        %1808 = vmatprep.subr.bf16.mxu0 0
        %1809 = vmatpush2.bf16.msra.mxu0 0
        %1810 = vmatprep.subr.bf16.mxu0 0
        %1811 = vmatpush2.bf16.msra.mxu0 0
        %1812 = vmatprep.mubr.bf16.mxu0 0
        %1813 = vmatmul.mubr.bf16.gmra.mxu0 %v1597
        %v1814 = vpop.f32.mrf.mxu0
        %v1815 = vadd.f32 %v1603, %v1814
        %v1816 = vpop.f32.mrf.mxu0
        %v1817 = vadd.f32 %v1607, %v1816
        %v1818 = vpop.f32.mrf.mxu0
        %v1819 = vadd.f32 %v1603, %v1818
        %v1820 = vpop.f32.mrf.mxu0
        %v1821 = vadd.f32 %v1607, %v1820
        %1822 = vdwg.mxu0
        %1823 = vmatprep.subr.bf16.mxu0 %v1747
        %1824 = vmatpush1.bf16.msra.mxu0 %v1746
        %1825 = vmatprep.subr.bf16.mxu0 %v1743
        %1826 = vmatpush1.bf16.msra.mxu0 %v1742
        %1827 = vmatprep.subr.bf16.mxu0 %v1739
        %1828 = vmatpush1.bf16.msra.mxu0 %v1738
        %1829 = vmatprep.subr.bf16.mxu0 %v1735
        %1830 = vmatpush1.bf16.msra.mxu0 %v1734
        %1831 = vmatprep.subr.bf16.mxu0 %v1731
        %1832 = vmatpush1.bf16.msra.mxu0 %v1730
        %1833 = vmatprep.subr.bf16.mxu0 %v1727
        %1834 = vmatpush1.bf16.msra.mxu0 %v1726
        %1835 = vmatprep.subr.bf16.mxu0 %v1723
        %1836 = vmatpush1.bf16.msra.mxu0 %v1722
        %1837 = vmatprep.subr.bf16.mxu0 %v1719
        %1838 = vmatpush1.bf16.msra.mxu0 %v1718
        %1839 = vmatprep.subr.bf16.mxu0 0
        %1840 = vmatpush2.bf16.msra.mxu0 0
        %1841 = vmatprep.subr.bf16.mxu0 0
        %1842 = vmatpush2.bf16.msra.mxu0 0
        %1843 = vmatprep.subr.bf16.mxu0 0
        %1844 = vmatpush2.bf16.msra.mxu0 0
        %1845 = vmatprep.subr.bf16.mxu0 0
        %1846 = vmatpush2.bf16.msra.mxu0 0
        %1847 = vmatprep.subr.bf16.mxu0 0
        %1848 = vmatpush2.bf16.msra.mxu0 0
        %1849 = vmatprep.subr.bf16.mxu0 0
        %1850 = vmatpush2.bf16.msra.mxu0 0
        %1851 = vmatprep.subr.bf16.mxu0 0
        %1852 = vmatpush2.bf16.msra.mxu0 0
        %1853 = vmatprep.subr.bf16.mxu0 0
        %1854 = vmatpush2.bf16.msra.mxu0 0
        %1855 = vmatprep.mubr.bf16.mxu0 0
        %1856 = vmatmul.mubr.bf16.gmra.mxu0 %v1597
        %v1857 = vpop.f32.mrf.mxu0
        %v1858 = vadd.f32 %v1611, %v1857
        %v1859 = vpop.f32.mrf.mxu0
        %v1860 = vadd.f32 %v1615, %v1859
        %v1861 = vpop.f32.mrf.mxu0
        %v1862 = vadd.f32 %v1611, %v1861
        %v1863 = vpop.f32.mrf.mxu0
        %v1864 = vadd.f32 %v1615, %v1863
        %1865 = vdwg.mxu0
        %v1866 = vmax.f32 %v1815, 0.0
        %v1867 = vmax.f32 %v1817, 0.0
        %v1868 = vmax.f32 %v1858, 0.0
        %v1869 = vmax.f32 %v1860, 0.0
        %v1870 = vmax.f32 %v1819, 0.0
        %v1871 = vmax.f32 %v1821, 0.0
        %v1872 = vmax.f32 %v1862, 0.0
        %v1873 = vmax.f32 %v1864, 0.0
        %v1874 = vld [vmem:[%s12] sm:$0xf]
        %v1875 = vld [vmem:[%s12 + $0x4] sm:$0xf]
        %v1876 = vld [vmem:[%s12 + $0x8] sm:$0xf]
        %v1877 = vld [vmem:[%s12 + $0xc] sm:$0xf]
        %v1878 = vld [vmem:[%s12 + $0x10] sm:$0xf]
        %v1879 = vld [vmem:[%s12 + $0x14] sm:$0xf]
        %v1880 = vld [vmem:[%s12 + $0x18] sm:$0xf]
        %v1881 = vld [vmem:[%s12 + $0x1c] sm:$0xf]
        %v1882 = vld [vmem:[%s12 + $0x20] sm:$0xf]
        %v1883 = vld [vmem:[%s12 + $0x24] sm:$0xf]
        %v1884 = vld [vmem:[%s12 + $0x28] sm:$0xf]
        %v1885 = vld [vmem:[%s12 + $0x2c] sm:$0xf]
        %v1886 = vld [vmem:[%s12 + $0x30] sm:$0xf]
        %v1887 = vld [vmem:[%s12 + $0x34] sm:$0xf]
        %v1888 = vld [vmem:[%s12 + $0x38] sm:$0xf]
        %v1889 = vld [vmem:[%s12 + $0x3c] sm:$0xf]
        %v1890 = vld [vmem:[%s12 + $0x40] sm:$0xf]
        %v1891 = vld [vmem:[%s12 + $0x44] sm:$0xf]
        %v1892 = vld [vmem:[%s12 + $0x48] sm:$0xf]
        %v1893 = vld [vmem:[%s12 + $0x4c] sm:$0xf]
        %v1894 = vld [vmem:[%s12 + $0x50] sm:$0xf]
        %v1895 = vld [vmem:[%s12 + $0x54] sm:$0xf]
        %v1896 = vld [vmem:[%s12 + $0x58] sm:$0xf]
        %v1897 = vld [vmem:[%s12 + $0x5c] sm:$0xf]
        %v1898 = vld [vmem:[%s12 + $0x60] sm:$0xf]
        %v1899 = vld [vmem:[%s12 + $0x64] sm:$0xf]
        %v1900 = vld [vmem:[%s12 + $0x68] sm:$0xf]
        %v1901 = vld [vmem:[%s12 + $0x6c] sm:$0xf]
        %v1902 = vld [vmem:[%s12 + $0x70] sm:$0xf]
        %v1903 = vld [vmem:[%s12 + $0x74] sm:$0xf]
        %v1904 = vld [vmem:[%s12 + $0x78] sm:$0xf]
        %v1905 = vld [vmem:[%s12 + $0x7c] sm:$0xf]
        %v1906 = vld [vmem:[%s12 + $0x80] sm:$0xf]
        %v1907 = vld [vmem:[%s12 + $0x84] sm:$0xf]
        %v1908 = vld [vmem:[%s12 + $0x88] sm:$0xf]
        %v1909 = vld [vmem:[%s12 + $0x8c] sm:$0xf]
        %v1910 = vld [vmem:[%s12 + $0x90] sm:$0xf]
        %v1911 = vld [vmem:[%s12 + $0x94] sm:$0xf]
        %v1912 = vld [vmem:[%s12 + $0x98] sm:$0xf]
        %v1913 = vld [vmem:[%s12 + $0x9c] sm:$0xf]
        %v1914 = vld [vmem:[%s12 + $0xa0] sm:$0xf]
        %v1915 = vld [vmem:[%s12 + $0xa4] sm:$0xf]
        %v1916 = vld [vmem:[%s12 + $0xa8] sm:$0xf]
        %v1917 = vld [vmem:[%s12 + $0xac] sm:$0xf]
        %v1918 = vld [vmem:[%s12 + $0xb0] sm:$0xf]
        %v1919 = vld [vmem:[%s12 + $0xb4] sm:$0xf]
        %v1920 = vld [vmem:[%s12 + $0xb8] sm:$0xf]
        %v1921 = vld [vmem:[%s12 + $0xbc] sm:$0xf]
        %v1922 = vld [vmem:[%s12 + $0xc0] sm:$0xf]
        %v1923 = vld [vmem:[%s12 + $0xc4] sm:$0xf]
        %v1924 = vld [vmem:[%s12 + $0xc8] sm:$0xf]
        %v1925 = vld [vmem:[%s12 + $0xcc] sm:$0xf]
        %v1926 = vld [vmem:[%s12 + $0xd0] sm:$0xf]
        %v1927 = vld [vmem:[%s12 + $0xd4] sm:$0xf]
        %v1928 = vld [vmem:[%s12 + $0xd8] sm:$0xf]
        %v1929 = vld [vmem:[%s12 + $0xdc] sm:$0xf]
        %v1930 = vld [vmem:[%s12 + $0xe0] sm:$0xf]
        %v1931 = vld [vmem:[%s12 + $0xe4] sm:$0xf]
        %v1932 = vld [vmem:[%s12 + $0xe8] sm:$0xf]
        %v1933 = vld [vmem:[%s12 + $0xec] sm:$0xf]
        %v1934 = vld [vmem:[%s12 + $0xf0] sm:$0xf]
        %v1935 = vld [vmem:[%s12 + $0xf4] sm:$0xf]
        %v1936 = vld [vmem:[%s12 + $0xf8] sm:$0xf]
        %v1937 = vld [vmem:[%s12 + $0xfc] sm:$0xf]
        %v1938 = vpack.c.bf16 %v1870, %v1866
        %v1939 = vpack.c.bf16 %v1871, %v1867
        %v1940 = vpack.c.bf16 %v1872, %v1868
        %v1941 = vpack.c.bf16 %v1873, %v1869
        %v1942 = vld [vmem:[%s13] sm:$0x1]
        %v1944 = vlaneseq
        %v1945 = vshrl.u32 %v1944, 7
        %v1946 = vsub.s32 0, %v1945
        %v1947 = vrot.slane %v1942, %v1946
        %v2013 = vunpack.c.l.b16 %v1874
        %v2014 = vunpack.c.l.b16 %v1875
        %v2015 = vunpack.c.l.b16 %v1876
        %v2016 = vunpack.c.l.b16 %v1877
        %v2017 = vunpack.c.l.b16 %v1878
        %v2018 = vunpack.c.l.b16 %v1879
        %v2019 = vunpack.c.l.b16 %v1880
        %v2020 = vunpack.c.l.b16 %v1881
        %v2021 = vunpack.c.l.b16 %v1882
        %v2022 = vunpack.c.l.b16 %v1883
        %v2023 = vunpack.c.l.b16 %v1884
        %v2024 = vunpack.c.l.b16 %v1885
        %v2025 = vunpack.c.l.b16 %v1886
        %v2026 = vunpack.c.l.b16 %v1887
        %v2027 = vunpack.c.l.b16 %v1888
        %v2028 = vunpack.c.l.b16 %v1889
        %v2029 = vunpack.c.l.b16 %v1890
        %v2030 = vunpack.c.l.b16 %v1891
        %v2031 = vunpack.c.l.b16 %v1892
        %v2032 = vunpack.c.l.b16 %v1893
        %v2033 = vunpack.c.l.b16 %v1894
        %v2034 = vunpack.c.l.b16 %v1895
        %v2035 = vunpack.c.l.b16 %v1896
        %v2036 = vunpack.c.l.b16 %v1897
        %v2037 = vunpack.c.l.b16 %v1898
        %v2038 = vunpack.c.l.b16 %v1899
        %v2039 = vunpack.c.l.b16 %v1900
        %v2040 = vunpack.c.l.b16 %v1901
        %v2041 = vunpack.c.l.b16 %v1902
        %v2042 = vunpack.c.l.b16 %v1903
        %v2043 = vunpack.c.l.b16 %v1904
        %v2044 = vunpack.c.l.b16 %v1905
        %v2045 = vunpack.c.l.b16 %v1906
        %v2046 = vunpack.c.l.b16 %v1907
        %v2047 = vunpack.c.l.b16 %v1908
        %v2048 = vunpack.c.l.b16 %v1909
        %v2049 = vunpack.c.l.b16 %v1910
        %v2050 = vunpack.c.l.b16 %v1911
        %v2051 = vunpack.c.l.b16 %v1912
        %v2052 = vunpack.c.l.b16 %v1913
        %v2053 = vunpack.c.l.b16 %v1914
        %v2054 = vunpack.c.l.b16 %v1915
        %v2055 = vunpack.c.l.b16 %v1916
        %v2056 = vunpack.c.l.b16 %v1917
        %v2057 = vunpack.c.l.b16 %v1918
        %v2058 = vunpack.c.l.b16 %v1919
        %v2059 = vunpack.c.l.b16 %v1920
        %v2060 = vunpack.c.l.b16 %v1921
        %v2061 = vunpack.c.l.b16 %v1922
        %v2062 = vunpack.c.l.b16 %v1923
        %v2063 = vunpack.c.l.b16 %v1924
        %v2064 = vunpack.c.l.b16 %v1925
        %v2065 = vunpack.c.l.b16 %v1926
        %v2066 = vunpack.c.l.b16 %v1927
        %v2067 = vunpack.c.l.b16 %v1928
        %v2068 = vunpack.c.l.b16 %v1929
        %v2069 = vunpack.c.l.b16 %v1930
        %v2070 = vunpack.c.l.b16 %v1931
        %v2071 = vunpack.c.l.b16 %v1932
        %v2072 = vunpack.c.l.b16 %v1933
        %v2073 = vunpack.c.l.b16 %v1934
        %v2074 = vunpack.c.l.b16 %v1935
        %v2075 = vunpack.c.l.b16 %v1936
        %v2076 = vunpack.c.l.b16 %v1937
        %v2077 = vpack.c.b16 %v2014, %v2013
        %v2078 = vpack.c.b16 %v2016, %v2015
        %v2079 = vpack.c.b16 %v2018, %v2017
        %v2080 = vpack.c.b16 %v2020, %v2019
        %v2081 = vpack.c.b16 %v2022, %v2021
        %v2082 = vpack.c.b16 %v2024, %v2023
        %v2083 = vpack.c.b16 %v2026, %v2025
        %v2084 = vpack.c.b16 %v2028, %v2027
        %v2085 = vpack.c.b16 %v2030, %v2029
        %v2086 = vpack.c.b16 %v2032, %v2031
        %v2087 = vpack.c.b16 %v2034, %v2033
        %v2088 = vpack.c.b16 %v2036, %v2035
        %v2089 = vpack.c.b16 %v2038, %v2037
        %v2090 = vpack.c.b16 %v2040, %v2039
        %v2091 = vpack.c.b16 %v2042, %v2041
        %v2092 = vpack.c.b16 %v2044, %v2043
        %v2093 = vpack.c.b16 %v2046, %v2045
        %v2094 = vpack.c.b16 %v2048, %v2047
        %v2095 = vpack.c.b16 %v2050, %v2049
        %v2096 = vpack.c.b16 %v2052, %v2051
        %v2097 = vpack.c.b16 %v2054, %v2053
        %v2098 = vpack.c.b16 %v2056, %v2055
        %v2099 = vpack.c.b16 %v2058, %v2057
        %v2100 = vpack.c.b16 %v2060, %v2059
        %v2101 = vpack.c.b16 %v2062, %v2061
        %v2102 = vpack.c.b16 %v2064, %v2063
        %v2103 = vpack.c.b16 %v2066, %v2065
        %v2104 = vpack.c.b16 %v2068, %v2067
        %v2105 = vpack.c.b16 %v2070, %v2069
        %v2106 = vpack.c.b16 %v2072, %v2071
        %v2107 = vpack.c.b16 %v2074, %v2073
        %v2108 = vpack.c.b16 %v2076, %v2075
        %2141 = vmatprep.subr.bf16.mxu0 0
        %2142 = vmatpush1.bf16.msra.mxu0 %v2084
        %2143 = vmatprep.subr.bf16.mxu0 0
        %2144 = vmatpush1.bf16.msra.mxu0 %v2083
        %2145 = vmatprep.subr.bf16.mxu0 0
        %2146 = vmatpush1.bf16.msra.mxu0 %v2082
        %2147 = vmatprep.subr.bf16.mxu0 0
        %2148 = vmatpush1.bf16.msra.mxu0 %v2081
        %2149 = vmatprep.subr.bf16.mxu0 0
        %2150 = vmatpush1.bf16.msra.mxu0 %v2080
        %2151 = vmatprep.subr.bf16.mxu0 0
        %2152 = vmatpush1.bf16.msra.mxu0 %v2079
        %2153 = vmatprep.subr.bf16.mxu0 0
        %2154 = vmatpush1.bf16.msra.mxu0 %v2078
        %2155 = vmatprep.subr.bf16.mxu0 0
        %2156 = vmatpush1.bf16.msra.mxu0 %v2077
        %2157 = vmatprep.subr.bf16.mxu0 0
        %2158 = vmatpush2.bf16.msra.mxu0 %v2092
        %2159 = vmatprep.subr.bf16.mxu0 0
        %2160 = vmatpush2.bf16.msra.mxu0 %v2091
        %2161 = vmatprep.subr.bf16.mxu0 0
        %2162 = vmatpush2.bf16.msra.mxu0 %v2090
        %2163 = vmatprep.subr.bf16.mxu0 0
        %2164 = vmatpush2.bf16.msra.mxu0 %v2089
        %2165 = vmatprep.subr.bf16.mxu0 0
        %2166 = vmatpush2.bf16.msra.mxu0 %v2088
        %2167 = vmatprep.subr.bf16.mxu0 0
        %2168 = vmatpush2.bf16.msra.mxu0 %v2087
        %2169 = vmatprep.subr.bf16.mxu0 0
        %2170 = vmatpush2.bf16.msra.mxu0 %v2086
        %2171 = vmatprep.subr.bf16.mxu0 0
        %2172 = vmatpush2.bf16.msra.mxu0 %v2085
        %2173 = vmatprep.mubr.bf16.mxu0 %v1939
        %2174 = vmatmul.mubr.bf16.gmra.mxu0 %v1938
        %v2175 = vpop.f32.mrf.mxu0
        %v2176 = vadd.f32 %v1947, %v2175
        %v2177 = vpop.f32.mrf.mxu0
        %v2178 = vpop.f32.mrf.mxu0
        %v2179 = vadd.f32 %v1947, %v2178
        %v2180 = vpop.f32.mrf.mxu0
        %2181 = vdwg.mxu0
        %2182 = vmatprep.subr.bf16.mxu0 0
        %2183 = vmatpush1.bf16.msra.mxu0 %v2100
        %2184 = vmatprep.subr.bf16.mxu0 0
        %2185 = vmatpush1.bf16.msra.mxu0 %v2099
        %2186 = vmatprep.subr.bf16.mxu0 0
        %2187 = vmatpush1.bf16.msra.mxu0 %v2098
        %2188 = vmatprep.subr.bf16.mxu0 0
        %2189 = vmatpush1.bf16.msra.mxu0 %v2097
        %2190 = vmatprep.subr.bf16.mxu0 0
        %2191 = vmatpush1.bf16.msra.mxu0 %v2096
        %2192 = vmatprep.subr.bf16.mxu0 0
        %2193 = vmatpush1.bf16.msra.mxu0 %v2095
        %2194 = vmatprep.subr.bf16.mxu0 0
        %2195 = vmatpush1.bf16.msra.mxu0 %v2094
        %2196 = vmatprep.subr.bf16.mxu0 0
        %2197 = vmatpush1.bf16.msra.mxu0 %v2093
        %2198 = vmatprep.subr.bf16.mxu0 0
        %2199 = vmatpush2.bf16.msra.mxu0 %v2108
        %2200 = vmatprep.subr.bf16.mxu0 0
        %2201 = vmatpush2.bf16.msra.mxu0 %v2107
        %2202 = vmatprep.subr.bf16.mxu0 0
        %2203 = vmatpush2.bf16.msra.mxu0 %v2106
        %2204 = vmatprep.subr.bf16.mxu0 0
        %2205 = vmatpush2.bf16.msra.mxu0 %v2105
        %2206 = vmatprep.subr.bf16.mxu0 0
        %2207 = vmatpush2.bf16.msra.mxu0 %v2104
        %2208 = vmatprep.subr.bf16.mxu0 0
        %2209 = vmatpush2.bf16.msra.mxu0 %v2103
        %2210 = vmatprep.subr.bf16.mxu0 0
        %2211 = vmatpush2.bf16.msra.mxu0 %v2102
        %2212 = vmatprep.subr.bf16.mxu0 0
        %2213 = vmatpush2.bf16.msra.mxu0 %v2101
        %2214 = vmatprep.mubr.bf16.mxu0 %v1941
        %2215 = vmatmul.mubr.bf16.gmra.mxu0 %v1940
        %v2216 = vpop.f32.mrf.mxu0
        %v2217 = vadd.f32 %v2176, %v2216
        %v2218 = vpop.f32.mrf.mxu0
        %v2219 = vpop.f32.mrf.mxu0
        %v2220 = vadd.f32 %v2179, %v2219
        %v2221 = vpop.f32.mrf.mxu0
        %2222 = vdwg.mxu0
        %v2223 = vadd.f32 %v1523, %v2217
        %v2224 = vadd.f32 %v1524, %v2220
        %2225 = vst [vmem:[%s485] sm:$0xff] %v2223
        %2226 = vst [vmem:[%s485 + $0x8] sm:$0xff] %v2224
        %s2227 = sand.u32 %s338, 1
        %s2228 = scalar_lea.sflag [#allocation4], %s2227
        %s2229 = sand.u32 %s338, 1
        %s2230 = smul.addr %s2229, 16
        %s2231 = scalar_lea.vmem [#allocation5], %s2230
        // Predicated region
        $region81: #{tpu_custom_call.1} parent=75 // pred_check
          %p2232 = pneg %p348
        $region82: #{tpu_custom_call.1} parent=75 // pred_check_branch
          %2234 = sbr.rel (%p2232) target = $region84
        $region83: #{tpu_custom_call.1} parent=75 // pred_region
          %s2236 = ssub.s32 256, 256
          %2237 = vsyncadd %s2228, %s2236
          %s2238 = smul.addr %s31, 2
          %s2239 = smul.addr %s2238, 128
          %s2240 = scalar_lea.hbm %s14, %s2239
          %s2241 = sshll.u32 %s2231, 4
          %s2242 = int_to_ptr.vmem [resolvable:$true] %s2241
          %2247 = dma.vmem_to_hbm [thread:$0]  %s2242, 256, %s2240, %s2228, 128, 128, 8
        $region84: #{tpu_custom_call.1} parent=75 // pred_fallthru
          _
      $region76: #{tpu_custom_call.1} parent=5 // pred_fallthru
        _
      %p2248 = scmp.le.s32.totalorder 2, %s26
      // Predicated region
      $region85: #{tpu_custom_call.1} parent=5 // pred_check
        %p2249 = pneg %p2248
      $region86: #{tpu_custom_call.1} parent=5 // pred_check_branch
        %2251 = sbr.rel (%p2249) target = $region88
      $region87: #{tpu_custom_call.1} parent=5 // pred_region
        %s2252 = ssub.s32 %s26, 2
        // Predicated region
        $region89: #{tpu_custom_call.1} parent=87 // pred_check
          %p2253 = pneg %p354
        $region90: #{tpu_custom_call.1} parent=87 // pred_check_branch
          %2255 = sbr.rel (%p2253) target = $region92
        $region91: #{tpu_custom_call.1} parent=87 // pred_region
          %s2256 = sand.u32 %s339, 1
          %s2257 = scalar_lea.sflag [#allocation4], %s2256
          %s2258 = sand.u32 %s339, 1
          %s2259 = smul.addr %s2258, 16
          %s2260 = scalar_lea.vmem [#allocation5], %s2259
          %2261 = dma.done %s2257, 256
        $region92: #{tpu_custom_call.1} parent=87 // pred_fallthru
          _
      $region88: #{tpu_custom_call.1} parent=5 // pred_fallthru
        _
    $region6: #{tpu_custom_call.1} parent=1 // loop_footer
      %s30 = sadd.s32 1, %s26
    $region7: #{tpu_custom_call.1} parent=1 // loop_footer_branch
      %25 = sbr.rel target = $region3
    $region8: #{tpu_custom_call.1} parent=1 // loop_exit
      _
    %2262 = vsyncpa [#allocation3], 1
    %s2263 = scalar_lea.sflag [#allocation3], 1
    %2264 = vsyncpa %s2263, 1
    %2265 = vsyncpa [#allocation4], 1
    %s2266 = scalar_lea.sflag [#allocation4], 1
    %2267 = vsyncpa %s2266, 1

// kernel: tpu_custom_call.1
$region0: #{tpu_custom_call.1}
  #allocation0 [shape = 'u32[]', space=smem, size = 0x4, offset = 0x4, fixed_abs, tag = 'smem constant byte address 0x4 - core index']
  #allocation1 [shape = 'u32[144,128]{1,0:T(1,128)}', space=vmem, size = 0x12000, scoped, tag = 'internal scratch']
  %s0 = inlined_call_operand.hbm [shape: f32[2,16,128], index: 0, kind: input, shape index: {}]
  %s1 = inlined_call_operand.vmem [shape: f32[1,128], index: 1, kind: input, shape index: {}]
  %s2 = inlined_call_operand.vmem [shape: f32[1,128], index: 2, kind: input, shape index: {}]
  %s3 = inlined_call_operand.vmem [shape: bf16[2,128,64], index: 3, kind: input, shape index: {}]
  %s4 = inlined_call_operand.vmem [shape: bf16[2,128,64], index: 4, kind: input, shape index: {}]
  %s5 = inlined_call_operand.vmem [shape: bf16[2,128,64], index: 5, kind: input, shape index: {}]
  %s6 = inlined_call_operand.vmem [shape: bf16[128,128], index: 6, kind: input, shape index: {}]
  %s7 = inlined_call_operand.vmem [shape: f32[1,128], index: 7, kind: input, shape index: {}]
  %s8 = inlined_call_operand.vmem [shape: f32[1,128], index: 8, kind: input, shape index: {}]
  %s9 = inlined_call_operand.vmem [shape: f32[1,128], index: 9, kind: input, shape index: {}]
  %s10 = inlined_call_operand.vmem [shape: bf16[128,512], index: 10, kind: input, shape index: {}]
  %s11 = inlined_call_operand.vmem [shape: f32[1,512], index: 11, kind: input, shape index: {}]
  %s12 = inlined_call_operand.vmem [shape: bf16[512,128], index: 12, kind: input, shape index: {}]
  %s13 = inlined_call_operand.vmem [shape: f32[1,128], index: 13, kind: input, shape index: {}]
  %s14 = inlined_call_operand.hbm [shape: f32[2,16,128], index: 14, kind: output, shape index: {}]
  %s15 = sld [smem:[#allocation0]]
  $region93: #{tpu_custom_call.1} parent=0
    _
  %s17 = ssub.s32 1, %s15
  %s18 = scalar_select 0, %s17, %s15
  $region1: #{tpu_custom_call.1} parent=0
    #allocation2 [shape = 'u8[16384]{0}', space=vmem, size = 0x4000, scoped, tag = 'input window, operand 0']
    #allocation3 [shape = 's32[2]{0}', space=sflag, size = 0x8, scoped, tag = 'scoped memory for tpu_custom_call.1']
    #allocation4 [shape = 's32[2]{0}', space=sflag, size = 0x8, scoped, tag = 'scoped memory for tpu_custom_call.1']
    #allocation5 [shape = 'u8[16384]{0}', space=vmem, size = 0x4000, scoped, tag = 'output window, operand 0']
    %19 = vsyncpa [#allocation3], 0
    %s20 = scalar_lea.sflag [#allocation3], 1
    %21 = vsyncpa %s20, 0
    %22 = vsyncpa [#allocation4], 0
    %s23 = scalar_lea.sflag [#allocation4], 1
    %24 = vsyncpa %s23, 0
    loop: start=0, step=1, limit=4
    $region2: #{tpu_custom_call.1} parent=1 // loop_pre_header
      _
    $region3: #{tpu_custom_call.1} parent=1 // loop_header
      %s26 = sphi 0, %s30
      %p27 = scmp.ge.s32.totalorder %s26, 4
      %s36 = sphi 0, %s38
      %s39 = sphi 0, %s36
      %s40 = sphi 0, %s39
      %s56 = sphi 0, %s40
      %s60 = sphi 0, %s60
      %s62 = sphi 0, %s60
      %s63 = sphi 0, %s62
      %s77 = sphi 0, %s63
      %s81 = sphi 0, %s81
      %s83 = sphi 0, %s81
      %s84 = sphi 0, %s83
      %s98 = sphi 0, %s84
      %s102 = sphi 0, %s102
      %s104 = sphi 0, %s102
      %s105 = sphi 0, %s104
      %s119 = sphi 0, %s105
      %s123 = sphi 0, %s123
      %s125 = sphi 0, %s123
      %s126 = sphi 0, %s125
      %s140 = sphi 0, %s126
      %s144 = sphi 0, %s144
      %s146 = sphi 0, %s144
      %s147 = sphi 0, %s146
      %s161 = sphi 0, %s147
      %s165 = sphi 0, %s165
      %s167 = sphi 0, %s165
      %s168 = sphi 0, %s167
      %s182 = sphi 0, %s168
      %s186 = sphi 0, %s186
      %s188 = sphi 0, %s186
      %s189 = sphi 0, %s188
      %s203 = sphi 0, %s189
      %s207 = sphi 0, %s207
      %s209 = sphi 0, %s207
      %s210 = sphi 0, %s209
      %s224 = sphi 0, %s210
      %s228 = sphi 0, %s228
      %s230 = sphi 0, %s228
      %s231 = sphi 0, %s230
      %s245 = sphi 0, %s231
      %s249 = sphi 0, %s249
      %s251 = sphi 0, %s249
      %s252 = sphi 0, %s251
      %s266 = sphi 0, %s252
      %s270 = sphi 0, %s270
      %s272 = sphi 0, %s270
      %s273 = sphi 0, %s272
      %s287 = sphi 0, %s273
      %s291 = sphi 0, %s291
      %s293 = sphi 0, %s291
      %s294 = sphi 0, %s293
      %s308 = sphi 0, %s294
      %s312 = sphi 0, %s312
      %s314 = sphi 0, %s312
      %s315 = sphi 0, %s314
      %s329 = sphi 0, %s315
      %s335 = sphi 0, %s337
      %s338 = sphi 0, %s335
      %s339 = sphi 0, %s338
      %s355 = sphi 0, %s339
    $region4: #{tpu_custom_call.1} parent=1 // loop_header_branch
      %29 = sbr.rel (%p27) target = $region8
    $region5: #{tpu_custom_call.1} parent=1 // loop_body
      %s31 = ssub.s32 %s26, 1
      %s32 = ssub.s32 %s26, 2
      %s33 = sadd.s32 %s26, 1
      %s34 = ssub.s32 %s26, %s33
      %p35 = scmp.eq.s32.totalorder %s34, 0
      %s37 = sadd.s32 %s36, 1
      %s38 = scalar_select %p35, %s36, %s37
      %p41 = pneg %p35
      %p42 = scmp.eq.s32.totalorder %s26, 1
      %p43 = por %p41, %p42
      %p44 = scmp.ne.s32.totalorder %s36, %s39
      %p45 = scmp.eq.s32.totalorder %s26, 0
      %p46 = por %p44, %p45
      %p47 = scmp.ne.s32.totalorder %s36, %s39
      %p48 = scmp.eq.s32.totalorder %s31, 1
      %p49 = por %p47, %p48
      %p50 = scmp.ne.s32.totalorder %s39, %s40
      %p51 = scmp.eq.s32.totalorder %s31, 0
      %p52 = por %p50, %p51
      %p53 = scmp.ne.s32.totalorder %s39, %s40
      %p54 = scmp.eq.s32.totalorder %s32, 1
      %p55 = por %p53, %p54
      %p57 = scmp.ne.s32.totalorder %s40, %s56
      %p58 = scmp.eq.s32.totalorder %s32, 0
      %p59 = por %p57, %p58
      %s61 = sadd.s32 %s60, 1
      %p64 = scmp.eq.s32.totalorder %s26, 1
      %p65 = scmp.ne.s32.totalorder %s60, %s62
      %p66 = scmp.eq.s32.totalorder %s26, 0
      %p67 = por %p65, %p66
      %p68 = scmp.ne.s32.totalorder %s60, %s62
      %p69 = scmp.eq.s32.totalorder %s31, 1
      %p70 = por %p68, %p69
      %p71 = scmp.ne.s32.totalorder %s62, %s63
      %p72 = scmp.eq.s32.totalorder %s31, 0
      %p73 = por %p71, %p72
      %p74 = scmp.ne.s32.totalorder %s62, %s63
      %p75 = scmp.eq.s32.totalorder %s32, 1
      %p76 = por %p74, %p75
      %p78 = scmp.ne.s32.totalorder %s63, %s77
      %p79 = scmp.eq.s32.totalorder %s32, 0
      %p80 = por %p78, %p79
      %s82 = sadd.s32 %s81, 1
      %p85 = scmp.eq.s32.totalorder %s26, 1
      %p86 = scmp.ne.s32.totalorder %s81, %s83
      %p87 = scmp.eq.s32.totalorder %s26, 0
      %p88 = por %p86, %p87
      %p89 = scmp.ne.s32.totalorder %s81, %s83
      %p90 = scmp.eq.s32.totalorder %s31, 1
      %p91 = por %p89, %p90
      %p92 = scmp.ne.s32.totalorder %s83, %s84
      %p93 = scmp.eq.s32.totalorder %s31, 0
      %p94 = por %p92, %p93
      %p95 = scmp.ne.s32.totalorder %s83, %s84
      %p96 = scmp.eq.s32.totalorder %s32, 1
      %p97 = por %p95, %p96
      %p99 = scmp.ne.s32.totalorder %s84, %s98
      %p100 = scmp.eq.s32.totalorder %s32, 0
      %p101 = por %p99, %p100
      %s103 = sadd.s32 %s102, 1
      %p106 = scmp.eq.s32.totalorder %s26, 1
      %p107 = scmp.ne.s32.totalorder %s102, %s104
      %p108 = scmp.eq.s32.totalorder %s26, 0
      %p109 = por %p107, %p108
      %p110 = scmp.ne.s32.totalorder %s102, %s104
      %p111 = scmp.eq.s32.totalorder %s31, 1
      %p112 = por %p110, %p111
      %p113 = scmp.ne.s32.totalorder %s104, %s105
      %p114 = scmp.eq.s32.totalorder %s31, 0
      %p115 = por %p113, %p114
      %p116 = scmp.ne.s32.totalorder %s104, %s105
      %p117 = scmp.eq.s32.totalorder %s32, 1
      %p118 = por %p116, %p117
      %p120 = scmp.ne.s32.totalorder %s105, %s119
      %p121 = scmp.eq.s32.totalorder %s32, 0
      %p122 = por %p120, %p121
      %s124 = sadd.s32 %s123, 1
      %p127 = scmp.eq.s32.totalorder %s26, 1
      %p128 = scmp.ne.s32.totalorder %s123, %s125
      %p129 = scmp.eq.s32.totalorder %s26, 0
      %p130 = por %p128, %p129
      %p131 = scmp.ne.s32.totalorder %s123, %s125
      %p132 = scmp.eq.s32.totalorder %s31, 1
      %p133 = por %p131, %p132
      %p134 = scmp.ne.s32.totalorder %s125, %s126
      %p135 = scmp.eq.s32.totalorder %s31, 0
      %p136 = por %p134, %p135
      %p137 = scmp.ne.s32.totalorder %s125, %s126
      %p138 = scmp.eq.s32.totalorder %s32, 1
      %p139 = por %p137, %p138
      %p141 = scmp.ne.s32.totalorder %s126, %s140
      %p142 = scmp.eq.s32.totalorder %s32, 0
      %p143 = por %p141, %p142
      %s145 = sadd.s32 %s144, 1
      %p148 = scmp.eq.s32.totalorder %s26, 1
      %p149 = scmp.ne.s32.totalorder %s144, %s146
      %p150 = scmp.eq.s32.totalorder %s26, 0
      %p151 = por %p149, %p150
      %p152 = scmp.ne.s32.totalorder %s144, %s146
      %p153 = scmp.eq.s32.totalorder %s31, 1
      %p154 = por %p152, %p153
      %p155 = scmp.ne.s32.totalorder %s146, %s147
      %p156 = scmp.eq.s32.totalorder %s31, 0
      %p157 = por %p155, %p156
      %p158 = scmp.ne.s32.totalorder %s146, %s147
      %p159 = scmp.eq.s32.totalorder %s32, 1
      %p160 = por %p158, %p159
      %p162 = scmp.ne.s32.totalorder %s147, %s161
      %p163 = scmp.eq.s32.totalorder %s32, 0
      %p164 = por %p162, %p163
      %s166 = sadd.s32 %s165, 1
      %p169 = scmp.eq.s32.totalorder %s26, 1
      %p170 = scmp.ne.s32.totalorder %s165, %s167
      %p171 = scmp.eq.s32.totalorder %s26, 0
      %p172 = por %p170, %p171
      %p173 = scmp.ne.s32.totalorder %s165, %s167
      %p174 = scmp.eq.s32.totalorder %s31, 1
      %p175 = por %p173, %p174
      %p176 = scmp.ne.s32.totalorder %s167, %s168
      %p177 = scmp.eq.s32.totalorder %s31, 0
      %p178 = por %p176, %p177
      %p179 = scmp.ne.s32.totalorder %s167, %s168
      %p180 = scmp.eq.s32.totalorder %s32, 1
      %p181 = por %p179, %p180
      %p183 = scmp.ne.s32.totalorder %s168, %s182
      %p184 = scmp.eq.s32.totalorder %s32, 0
      %p185 = por %p183, %p184
      %s187 = sadd.s32 %s186, 1
      %p190 = scmp.eq.s32.totalorder %s26, 1
      %p191 = scmp.ne.s32.totalorder %s186, %s188
      %p192 = scmp.eq.s32.totalorder %s26, 0
      %p193 = por %p191, %p192
      %p194 = scmp.ne.s32.totalorder %s186, %s188
      %p195 = scmp.eq.s32.totalorder %s31, 1
      %p196 = por %p194, %p195
      %p197 = scmp.ne.s32.totalorder %s188, %s189
      %p198 = scmp.eq.s32.totalorder %s31, 0
      %p199 = por %p197, %p198
      %p200 = scmp.ne.s32.totalorder %s188, %s189
      %p201 = scmp.eq.s32.totalorder %s32, 1
      %p202 = por %p200, %p201
      %p204 = scmp.ne.s32.totalorder %s189, %s203
      %p205 = scmp.eq.s32.totalorder %s32, 0
      %p206 = por %p204, %p205
      %s208 = sadd.s32 %s207, 1
      %p211 = scmp.eq.s32.totalorder %s26, 1
      %p212 = scmp.ne.s32.totalorder %s207, %s209
      %p213 = scmp.eq.s32.totalorder %s26, 0
      %p214 = por %p212, %p213
      %p215 = scmp.ne.s32.totalorder %s207, %s209
      %p216 = scmp.eq.s32.totalorder %s31, 1
      %p217 = por %p215, %p216
      %p218 = scmp.ne.s32.totalorder %s209, %s210
      %p219 = scmp.eq.s32.totalorder %s31, 0
      %p220 = por %p218, %p219
      %p221 = scmp.ne.s32.totalorder %s209, %s210
      %p222 = scmp.eq.s32.totalorder %s32, 1
      %p223 = por %p221, %p222
      %p225 = scmp.ne.s32.totalorder %s210, %s224
      %p226 = scmp.eq.s32.totalorder %s32, 0
      %p227 = por %p225, %p226
      %s229 = sadd.s32 %s228, 1
      %p232 = scmp.eq.s32.totalorder %s26, 1
      %p233 = scmp.ne.s32.totalorder %s228, %s230
      %p234 = scmp.eq.s32.totalorder %s26, 0
      %p235 = por %p233, %p234
      %p236 = scmp.ne.s32.totalorder %s228, %s230
      %p237 = scmp.eq.s32.totalorder %s31, 1
      %p238 = por %p236, %p237
      %p239 = scmp.ne.s32.totalorder %s230, %s231
      %p240 = scmp.eq.s32.totalorder %s31, 0
      %p241 = por %p239, %p240
      %p242 = scmp.ne.s32.totalorder %s230, %s231
      %p243 = scmp.eq.s32.totalorder %s32, 1
      %p244 = por %p242, %p243
      %p246 = scmp.ne.s32.totalorder %s231, %s245
      %p247 = scmp.eq.s32.totalorder %s32, 0
      %p248 = por %p246, %p247
      %s250 = sadd.s32 %s249, 1
      %p253 = scmp.eq.s32.totalorder %s26, 1
      %p254 = scmp.ne.s32.totalorder %s249, %s251
      %p255 = scmp.eq.s32.totalorder %s26, 0
      %p256 = por %p254, %p255
      %p257 = scmp.ne.s32.totalorder %s249, %s251
      %p258 = scmp.eq.s32.totalorder %s31, 1
      %p259 = por %p257, %p258
      %p260 = scmp.ne.s32.totalorder %s251, %s252
      %p261 = scmp.eq.s32.totalorder %s31, 0
      %p262 = por %p260, %p261
      %p263 = scmp.ne.s32.totalorder %s251, %s252
      %p264 = scmp.eq.s32.totalorder %s32, 1
      %p265 = por %p263, %p264
      %p267 = scmp.ne.s32.totalorder %s252, %s266
      %p268 = scmp.eq.s32.totalorder %s32, 0
      %p269 = por %p267, %p268
      %s271 = sadd.s32 %s270, 1
      %p274 = scmp.eq.s32.totalorder %s26, 1
      %p275 = scmp.ne.s32.totalorder %s270, %s272
      %p276 = scmp.eq.s32.totalorder %s26, 0
      %p277 = por %p275, %p276
      %p278 = scmp.ne.s32.totalorder %s270, %s272
      %p279 = scmp.eq.s32.totalorder %s31, 1
      %p280 = por %p278, %p279
      %p281 = scmp.ne.s32.totalorder %s272, %s273
      %p282 = scmp.eq.s32.totalorder %s31, 0
      %p283 = por %p281, %p282
      %p284 = scmp.ne.s32.totalorder %s272, %s273
      %p285 = scmp.eq.s32.totalorder %s32, 1
      %p286 = por %p284, %p285
      %p288 = scmp.ne.s32.totalorder %s273, %s287
      %p289 = scmp.eq.s32.totalorder %s32, 0
      %p290 = por %p288, %p289
      %s292 = sadd.s32 %s291, 1
      %p295 = scmp.eq.s32.totalorder %s26, 1
      %p296 = scmp.ne.s32.totalorder %s291, %s293
      %p297 = scmp.eq.s32.totalorder %s26, 0
      %p298 = por %p296, %p297
      %p299 = scmp.ne.s32.totalorder %s291, %s293
      %p300 = scmp.eq.s32.totalorder %s31, 1
      %p301 = por %p299, %p300
      %p302 = scmp.ne.s32.totalorder %s293, %s294
      %p303 = scmp.eq.s32.totalorder %s31, 0
      %p304 = por %p302, %p303
      %p305 = scmp.ne.s32.totalorder %s293, %s294
      %p306 = scmp.eq.s32.totalorder %s32, 1
      %p307 = por %p305, %p306
      %p309 = scmp.ne.s32.totalorder %s294, %s308
      %p310 = scmp.eq.s32.totalorder %s32, 0
      %p311 = por %p309, %p310
      %s313 = sadd.s32 %s312, 1
      %p316 = scmp.eq.s32.totalorder %s26, 1
      %p317 = scmp.ne.s32.totalorder %s312, %s314
      %p318 = scmp.eq.s32.totalorder %s26, 0
      %p319 = por %p317, %p318
      %p320 = scmp.ne.s32.totalorder %s312, %s314
      %p321 = scmp.eq.s32.totalorder %s31, 1
      %p322 = por %p320, %p321
      %p323 = scmp.ne.s32.totalorder %s314, %s315
      %p324 = scmp.eq.s32.totalorder %s31, 0
      %p325 = por %p323, %p324
      %p326 = scmp.ne.s32.totalorder %s314, %s315
      %p327 = scmp.eq.s32.totalorder %s32, 1
      %p328 = por %p326, %p327
      %p330 = scmp.ne.s32.totalorder %s315, %s329
      %p331 = scmp.eq.s32.totalorder %s32, 0
      %p332 = por %p330, %p331
      %s333 = ssub.s32 %s26, %s33
      %p334 = scmp.eq.s32.totalorder %s333, 0
      %s336 = sadd.s32 %s335, 1
      %s337 = scalar_select %p334, %s335, %s336
      %p340 = pneg %p334
      %p341 = scmp.eq.s32.totalorder %s26, 1
      %p342 = por %p340, %p341
      %p343 = scmp.ne.s32.totalorder %s335, %s338
      %p344 = scmp.eq.s32.totalorder %s26, 0
      %p345 = por %p343, %p344
      %p346 = scmp.ne.s32.totalorder %s335, %s338
      %p347 = scmp.eq.s32.totalorder %s31, 1
      %p348 = por %p346, %p347
      %p349 = scmp.ne.s32.totalorder %s338, %s339
      %p350 = scmp.eq.s32.totalorder %s31, 0
      %p351 = por %p349, %p350
      %p352 = scmp.ne.s32.totalorder %s338, %s339
      %p353 = scmp.eq.s32.totalorder %s32, 1
      %p354 = por %p352, %p353
      %p356 = scmp.ne.s32.totalorder %s339, %s355
      %p357 = scmp.eq.s32.totalorder %s32, 0
      %p358 = por %p356, %p357
      %p359 = scmp.le.s32.totalorder 1, %s26
      %p360 = scmp.lt.s32.totalorder %s26, 3
      %p361 = pnand %p359, %p360
      %p362 = pneg %p361
      // Predicated region
      $region9: #{tpu_custom_call.1} parent=5 // pred_check
        _
      $region10: #{tpu_custom_call.1} parent=5 // pred_check_branch
        %364 = sbr.rel (%p361) target = $region12
      $region11: #{tpu_custom_call.1} parent=5 // pred_region
        %s365 = ssub.s32 %s26, 1
        // Predicated region
        $region13: #{tpu_custom_call.1} parent=11 // pred_check
          %p366 = pneg %p73
        $region14: #{tpu_custom_call.1} parent=11 // pred_check_branch
          %368 = sbr.rel (%p366) target = $region16
        $region15: #{tpu_custom_call.1} parent=11 // pred_region
          _
        $region16: #{tpu_custom_call.1} parent=11 // pred_fallthru
          _
        // Predicated region
        $region17: #{tpu_custom_call.1} parent=11 // pred_check
          %p369 = pneg %p94
        $region18: #{tpu_custom_call.1} parent=11 // pred_check_branch
          %371 = sbr.rel (%p369) target = $region20
        $region19: #{tpu_custom_call.1} parent=11 // pred_region
          _
        $region20: #{tpu_custom_call.1} parent=11 // pred_fallthru
          _
        // Predicated region
        $region21: #{tpu_custom_call.1} parent=11 // pred_check
          %p372 = pneg %p115
        $region22: #{tpu_custom_call.1} parent=11 // pred_check_branch
          %374 = sbr.rel (%p372) target = $region24
        $region23: #{tpu_custom_call.1} parent=11 // pred_region
          _
        $region24: #{tpu_custom_call.1} parent=11 // pred_fallthru
          _
        // Predicated region
        $region25: #{tpu_custom_call.1} parent=11 // pred_check
          %p375 = pneg %p136
        $region26: #{tpu_custom_call.1} parent=11 // pred_check_branch
          %377 = sbr.rel (%p375) target = $region28
        $region27: #{tpu_custom_call.1} parent=11 // pred_region
          _
        $region28: #{tpu_custom_call.1} parent=11 // pred_fallthru
          _
        // Predicated region
        $region29: #{tpu_custom_call.1} parent=11 // pred_check
          %p378 = pneg %p157
        $region30: #{tpu_custom_call.1} parent=11 // pred_check_branch
          %380 = sbr.rel (%p378) target = $region32
        $region31: #{tpu_custom_call.1} parent=11 // pred_region
          _
        $region32: #{tpu_custom_call.1} parent=11 // pred_fallthru
          _
        // Predicated region
        $region33: #{tpu_custom_call.1} parent=11 // pred_check
          %p381 = pneg %p178
        $region34: #{tpu_custom_call.1} parent=11 // pred_check_branch
          %383 = sbr.rel (%p381) target = $region36
        $region35: #{tpu_custom_call.1} parent=11 // pred_region
          _
        $region36: #{tpu_custom_call.1} parent=11 // pred_fallthru
          _
        // Predicated region
        $region37: #{tpu_custom_call.1} parent=11 // pred_check
          %p384 = pneg %p199
        $region38: #{tpu_custom_call.1} parent=11 // pred_check_branch
          %386 = sbr.rel (%p384) target = $region40
        $region39: #{tpu_custom_call.1} parent=11 // pred_region
          _
        $region40: #{tpu_custom_call.1} parent=11 // pred_fallthru
          _
        // Predicated region
        $region41: #{tpu_custom_call.1} parent=11 // pred_check
          %p387 = pneg %p220
        $region42: #{tpu_custom_call.1} parent=11 // pred_check_branch
          %389 = sbr.rel (%p387) target = $region44
        $region43: #{tpu_custom_call.1} parent=11 // pred_region
          _
        $region44: #{tpu_custom_call.1} parent=11 // pred_fallthru
          _
        // Predicated region
        $region45: #{tpu_custom_call.1} parent=11 // pred_check
          %p390 = pneg %p241
        $region46: #{tpu_custom_call.1} parent=11 // pred_check_branch
          %392 = sbr.rel (%p390) target = $region48
        $region47: #{tpu_custom_call.1} parent=11 // pred_region
          _
        $region48: #{tpu_custom_call.1} parent=11 // pred_fallthru
          _
        // Predicated region
        $region49: #{tpu_custom_call.1} parent=11 // pred_check
          %p393 = pneg %p262
        $region50: #{tpu_custom_call.1} parent=11 // pred_check_branch
          %395 = sbr.rel (%p393) target = $region52
        $region51: #{tpu_custom_call.1} parent=11 // pred_region
          _
        $region52: #{tpu_custom_call.1} parent=11 // pred_fallthru
          _
        // Predicated region
        $region53: #{tpu_custom_call.1} parent=11 // pred_check
          %p396 = pneg %p283
        $region54: #{tpu_custom_call.1} parent=11 // pred_check_branch
          %398 = sbr.rel (%p396) target = $region56
        $region55: #{tpu_custom_call.1} parent=11 // pred_region
          _
        $region56: #{tpu_custom_call.1} parent=11 // pred_fallthru
          _
        // Predicated region
        $region57: #{tpu_custom_call.1} parent=11 // pred_check
          %p399 = pneg %p304
        $region58: #{tpu_custom_call.1} parent=11 // pred_check_branch
          %401 = sbr.rel (%p399) target = $region60
        $region59: #{tpu_custom_call.1} parent=11 // pred_region
          _
        $region60: #{tpu_custom_call.1} parent=11 // pred_fallthru
          _
        // Predicated region
        $region61: #{tpu_custom_call.1} parent=11 // pred_check
          %p402 = pneg %p325
        $region62: #{tpu_custom_call.1} parent=11 // pred_check_branch
          %404 = sbr.rel (%p402) target = $region64
        $region63: #{tpu_custom_call.1} parent=11 // pred_region
          _
        $region64: #{tpu_custom_call.1} parent=11 // pred_fallthru
          _
      $region12: #{tpu_custom_call.1} parent=5 // pred_fallthru
        _
      %p405 = scmp.lt.s32.totalorder %s26, 2
      // Predicated region
      $region65: #{tpu_custom_call.1} parent=5 // pred_check
        %p406 = pneg %p405
      $region66: #{tpu_custom_call.1} parent=5 // pred_check_branch
        %408 = sbr.rel (%p406) target = $region68
      $region67: #{tpu_custom_call.1} parent=5 // pred_region
        // Predicated region
        $region69: #{tpu_custom_call.1} parent=67 // pred_check
          %p409 = pneg %p46
        $region70: #{tpu_custom_call.1} parent=67 // pred_check_branch
          %411 = sbr.rel (%p409) target = $region72
        $region71: #{tpu_custom_call.1} parent=67 // pred_region
          %s412 = sand.u32 %s36, 1
          %s413 = scalar_lea.sflag [#allocation3], %s412
          %s414 = sand.u32 %s36, 1
          %s415 = smul.addr %s414, 16
          %s416 = scalar_lea.vmem [#allocation2], %s415
          %s418 = ssub.s32 256, 256
          %419 = vsyncadd %s413, %s418
          %s420 = smul.addr %s26, 2
          %s421 = smul.addr %s420, 128
          %s422 = scalar_lea.hbm %s0, %s421
          %s423 = sshll.u32 %s416, 4
          %s424 = int_to_ptr.vmem [resolvable:$true] %s423
          %429 = dma.hbm_to_vmem [thread:$0]  %s422, 256, %s424, %s413, 128, 128, 8
        $region72: #{tpu_custom_call.1} parent=67 // pred_fallthru
          _
      $region68: #{tpu_custom_call.1} parent=5 // pred_fallthru
        _
      %p430 = scmp.le.s32.totalorder 1, %s26
      %p431 = scmp.lt.s32.totalorder %s26, 3
      %p432 = pnand %p430, %p431
      %p433 = pneg %p432
      // Predicated region
      $region73: #{tpu_custom_call.1} parent=5 // pred_check
        _
      $region74: #{tpu_custom_call.1} parent=5 // pred_check_branch
        %435 = sbr.rel (%p432) target = $region76
      $region75: #{tpu_custom_call.1} parent=5 // pred_region
        %s436 = ssub.s32 %s26, 1
        %s437 = sand.u32 %s39, 1
        %s438 = scalar_lea.sflag [#allocation3], %s437
        %s439 = sand.u32 %s39, 1
        %s440 = smul.addr %s439, 16
        %s441 = scalar_lea.vmem [#allocation2], %s440
        // Predicated region
        $region77: #{tpu_custom_call.1} parent=75 // pred_check
          %p442 = pneg %p52
        $region78: #{tpu_custom_call.1} parent=75 // pred_check_branch
          %444 = sbr.rel (%p442) target = $region80
        $region79: #{tpu_custom_call.1} parent=75 // pred_region
          %445 = dma.done %s438, 256
        $region80: #{tpu_custom_call.1} parent=75 // pred_fallthru
          _
        %s446 = sand.u32 %s39, 1
        %s447 = scalar_lea.sflag [#allocation3], %s446
        %s448 = sand.u32 %s39, 1
        %s449 = smul.addr %s448, 16
        %s450 = scalar_lea.vmem [#allocation2], %s449
        %p451 = pneg %p52
        %p452 = pneg %p49
        %p453 = pneg %p73
        %p454 = pneg %p70
        %p455 = pneg %p94
        %p456 = pneg %p91
        %p457 = pneg %p115
        %p458 = pneg %p112
        %p459 = pneg %p136
        %p460 = pneg %p133
        %p461 = pneg %p157
        %p462 = pneg %p154
        %p463 = pneg %p178
        %p464 = pneg %p175
        %p465 = pneg %p199
        %p466 = pneg %p196
        %p467 = pneg %p220
        %p468 = pneg %p217
        %p469 = pneg %p241
        %p470 = pneg %p238
        %p471 = pneg %p262
        %p472 = pneg %p259
        %p473 = pneg %p283
        %p474 = pneg %p280
        %p475 = pneg %p304
        %p476 = pneg %p301
        %p477 = pneg %p325
        %p478 = pneg %p322
        %p479 = pneg %p351
        %p480 = pneg %p348
        %s481 = sand.u32 %s338, 1
        %s482 = scalar_lea.sflag [#allocation4], %s481
        %s483 = sand.u32 %s338, 1
        %s484 = smul.addr %s483, 16
        %s485 = scalar_lea.vmem [#allocation5], %s484
        %v487 = vld [vmem:[%s441] sm:$0xff]
        %v488 = vld [vmem:[%s441 + $0x8] sm:$0xff]
        %v489 = vld [vmem:[%s1] sm:$0x1]
        %v490 = vld [vmem:[%s2] sm:$0x1]
        %491 = vadd.xlane.f32.xlu0 %v487
        %v492 = vpop.xlane.xlu0 %491
        %493 = vadd.xlane.f32.xlu0 %v488
        %v494 = vpop.xlane.xlu0 %493
        %v495 = vrcp.pop 128.0
        %v496 = vmul.f32 %v492, %v495
        %v497 = vmul.f32 %v494, %v495
        %v498 = vsub.f32 %v487, %v496
        %v499 = vsub.f32 %v488, %v497
        %v500 = vmul.f32 %v498, %v498
        %v501 = vmul.f32 %v499, %v499
        %502 = vadd.xlane.f32.xlu0 %v500
        %v503 = vpop.xlane.xlu0 %502
        %504 = vadd.xlane.f32.xlu0 %v501
        %v505 = vpop.xlane.xlu0 %504
        %v506 = vmul.f32 %v503, %v495
        %v507 = vmul.f32 %v505, %v495
        %v508 = vadd.f32 %v506, 1e-05
        %v509 = vadd.f32 %v507, 1e-05
        %v510 = vrsqrt.pop %v508
        %v511 = vrsqrt.pop %v509
        %v512 = vmul.f32 %v498, %v510
        %v513 = vmul.f32 %v499, %v511
        %v515 = vlaneseq
        %v516 = vshrl.u32 %v515, 7
        %v517 = vsub.s32 0, %v516
        %v518 = vrot.slane %v489, %v517
        %v520 = vmul.f32 %v512, %v518
        %v521 = vmul.f32 %v513, %v518
        %v523 = vlaneseq
        %v524 = vshrl.u32 %v523, 7
        %v525 = vsub.s32 0, %v524
        %v526 = vrot.slane %v490, %v525
        %v528 = vadd.f32 %v520, %v526
        %v529 = vadd.f32 %v521, %v526
        %v530 = vld [vmem:[%s3] sm:$0xf]
        %v531 = vld [vmem:[%s3 + $0x4] sm:$0xf]
        %v532 = vld [vmem:[%s3 + $0x8] sm:$0xf]
        %v533 = vld [vmem:[%s3 + $0xc] sm:$0xf]
        %v534 = vld [vmem:[%s3 + $0x10] sm:$0xf]
        %v535 = vld [vmem:[%s3 + $0x14] sm:$0xf]
        %v536 = vld [vmem:[%s3 + $0x18] sm:$0xf]
        %v537 = vld [vmem:[%s3 + $0x1c] sm:$0xf]
        %v538 = vld [vmem:[%s3 + $0x20] sm:$0xf]
        %v539 = vld [vmem:[%s3 + $0x24] sm:$0xf]
        %v540 = vld [vmem:[%s3 + $0x28] sm:$0xf]
        %v541 = vld [vmem:[%s3 + $0x2c] sm:$0xf]
        %v542 = vld [vmem:[%s3 + $0x30] sm:$0xf]
        %v543 = vld [vmem:[%s3 + $0x34] sm:$0xf]
        %v544 = vld [vmem:[%s3 + $0x38] sm:$0xf]
        %v545 = vld [vmem:[%s3 + $0x3c] sm:$0xf]
        %v546 = vpack.c.bf16 %v529, %v528
        %v563 = vunpack.c.l.b16 %v530
        %v564 = vunpack.c.l.b16 %v531
        %v565 = vunpack.c.l.b16 %v532
        %v566 = vunpack.c.l.b16 %v533
        %v567 = vunpack.c.l.b16 %v534
        %v568 = vunpack.c.l.b16 %v535
        %v569 = vunpack.c.l.b16 %v536
        %v570 = vunpack.c.l.b16 %v537
        %v571 = vunpack.c.l.b16 %v538
        %v572 = vunpack.c.l.b16 %v539
        %v573 = vunpack.c.l.b16 %v540
        %v574 = vunpack.c.l.b16 %v541
        %v575 = vunpack.c.l.b16 %v542
        %v576 = vunpack.c.l.b16 %v543
        %v577 = vunpack.c.l.b16 %v544
        %v578 = vunpack.c.l.b16 %v545
        %v579 = vpack.c.b16 %v564, %v563
        %v580 = vpack.c.b16 %v566, %v565
        %v581 = vpack.c.b16 %v568, %v567
        %v582 = vpack.c.b16 %v570, %v569
        %v583 = vpack.c.b16 %v572, %v571
        %v584 = vpack.c.b16 %v574, %v573
        %v585 = vpack.c.b16 %v576, %v575
        %v586 = vpack.c.b16 %v578, %v577
        %595 = vmatprep.subr.bf16.mxu0 0
        %596 = vmatpush1.bf16.msra.mxu0 %v586
        %597 = vmatprep.subr.bf16.mxu0 0
        %598 = vmatpush1.bf16.msra.mxu0 %v585
        %599 = vmatprep.subr.bf16.mxu0 0
        %600 = vmatpush1.bf16.msra.mxu0 %v584
        %601 = vmatprep.subr.bf16.mxu0 0
        %602 = vmatpush1.bf16.msra.mxu0 %v583
        %603 = vmatprep.subr.bf16.mxu0 0
        %604 = vmatpush1.bf16.msra.mxu0 %v582
        %605 = vmatprep.subr.bf16.mxu0 0
        %606 = vmatpush1.bf16.msra.mxu0 %v581
        %607 = vmatprep.subr.bf16.mxu0 0
        %608 = vmatpush1.bf16.msra.mxu0 %v580
        %609 = vmatprep.subr.bf16.mxu0 0
        %610 = vmatpush1.bf16.msra.mxu0 %v579
        %611 = vmatprep.subr.bf16.mxu0 0
        %612 = vmatpush2.bf16.msra.mxu0 0
        %613 = vmatprep.subr.bf16.mxu0 0
        %614 = vmatpush2.bf16.msra.mxu0 0
        %615 = vmatprep.subr.bf16.mxu0 0
        %616 = vmatpush2.bf16.msra.mxu0 0
        %617 = vmatprep.subr.bf16.mxu0 0
        %618 = vmatpush2.bf16.msra.mxu0 0
        %619 = vmatprep.subr.bf16.mxu0 0
        %620 = vmatpush2.bf16.msra.mxu0 0
        %621 = vmatprep.subr.bf16.mxu0 0
        %622 = vmatpush2.bf16.msra.mxu0 0
        %623 = vmatprep.subr.bf16.mxu0 0
        %624 = vmatpush2.bf16.msra.mxu0 0
        %625 = vmatprep.subr.bf16.mxu0 0
        %626 = vmatpush2.bf16.msra.mxu0 0
        %627 = vmatprep.mubr.bf16.mxu0 0
        %628 = vmatmul.mubr.bf16.gmra.mxu0 %v546
        %v629 = vpop.f32.mrf.mxu0
        %v630 = vadd.f32 0.0, %v629
        %v631 = vpop.f32.mrf.mxu0
        %v632 = vpop.f32.mrf.mxu0
        %v633 = vadd.f32 0.0, %v632
        %v634 = vpop.f32.mrf.mxu0
        %635 = vdwg.mxu0
        %v636 = vld [vmem:[%s4] sm:$0xf]
        %v637 = vld [vmem:[%s4 + $0x4] sm:$0xf]
        %v638 = vld [vmem:[%s4 + $0x8] sm:$0xf]
        %v639 = vld [vmem:[%s4 + $0xc] sm:$0xf]
        %v640 = vld [vmem:[%s4 + $0x10] sm:$0xf]
        %v641 = vld [vmem:[%s4 + $0x14] sm:$0xf]
        %v642 = vld [vmem:[%s4 + $0x18] sm:$0xf]
        %v643 = vld [vmem:[%s4 + $0x1c] sm:$0xf]
        %v644 = vld [vmem:[%s4 + $0x20] sm:$0xf]
        %v645 = vld [vmem:[%s4 + $0x24] sm:$0xf]
        %v646 = vld [vmem:[%s4 + $0x28] sm:$0xf]
        %v647 = vld [vmem:[%s4 + $0x2c] sm:$0xf]
        %v648 = vld [vmem:[%s4 + $0x30] sm:$0xf]
        %v649 = vld [vmem:[%s4 + $0x34] sm:$0xf]
        %v650 = vld [vmem:[%s4 + $0x38] sm:$0xf]
        %v651 = vld [vmem:[%s4 + $0x3c] sm:$0xf]
        %v668 = vunpack.c.l.b16 %v636
        %v669 = vunpack.c.l.b16 %v637
        %v670 = vunpack.c.l.b16 %v638
        %v671 = vunpack.c.l.b16 %v639
        %v672 = vunpack.c.l.b16 %v640
        %v673 = vunpack.c.l.b16 %v641
        %v674 = vunpack.c.l.b16 %v642
        %v675 = vunpack.c.l.b16 %v643
        %v676 = vunpack.c.l.b16 %v644
        %v677 = vunpack.c.l.b16 %v645
        %v678 = vunpack.c.l.b16 %v646
        %v679 = vunpack.c.l.b16 %v647
        %v680 = vunpack.c.l.b16 %v648
        %v681 = vunpack.c.l.b16 %v649
        %v682 = vunpack.c.l.b16 %v650
        %v683 = vunpack.c.l.b16 %v651
        %v684 = vpack.c.b16 %v669, %v668
        %v685 = vpack.c.b16 %v671, %v670
        %v686 = vpack.c.b16 %v673, %v672
        %v687 = vpack.c.b16 %v675, %v674
        %v688 = vpack.c.b16 %v677, %v676
        %v689 = vpack.c.b16 %v679, %v678
        %v690 = vpack.c.b16 %v681, %v680
        %v691 = vpack.c.b16 %v683, %v682
        %700 = vmatprep.subr.bf16.mxu0 0
        %701 = vmatpush1.bf16.msra.mxu0 %v691
        %702 = vmatprep.subr.bf16.mxu0 0
        %703 = vmatpush1.bf16.msra.mxu0 %v690
        %704 = vmatprep.subr.bf16.mxu0 0
        %705 = vmatpush1.bf16.msra.mxu0 %v689
        %706 = vmatprep.subr.bf16.mxu0 0
        %707 = vmatpush1.bf16.msra.mxu0 %v688
        %708 = vmatprep.subr.bf16.mxu0 0
        %709 = vmatpush1.bf16.msra.mxu0 %v687
        %710 = vmatprep.subr.bf16.mxu0 0
        %711 = vmatpush1.bf16.msra.mxu0 %v686
        %712 = vmatprep.subr.bf16.mxu0 0
        %713 = vmatpush1.bf16.msra.mxu0 %v685
        %714 = vmatprep.subr.bf16.mxu0 0
        %715 = vmatpush1.bf16.msra.mxu0 %v684
        %716 = vmatprep.subr.bf16.mxu0 0
        %717 = vmatpush2.bf16.msra.mxu0 0
        %718 = vmatprep.subr.bf16.mxu0 0
        %719 = vmatpush2.bf16.msra.mxu0 0
        %720 = vmatprep.subr.bf16.mxu0 0
        %721 = vmatpush2.bf16.msra.mxu0 0
        %722 = vmatprep.subr.bf16.mxu0 0
        %723 = vmatpush2.bf16.msra.mxu0 0
        %724 = vmatprep.subr.bf16.mxu0 0
        %725 = vmatpush2.bf16.msra.mxu0 0
        %726 = vmatprep.subr.bf16.mxu0 0
        %727 = vmatpush2.bf16.msra.mxu0 0
        %728 = vmatprep.subr.bf16.mxu0 0
        %729 = vmatpush2.bf16.msra.mxu0 0
        %730 = vmatprep.subr.bf16.mxu0 0
        %731 = vmatpush2.bf16.msra.mxu0 0
        %732 = vmatprep.mubr.bf16.mxu0 0
        %733 = vmatmul.mubr.bf16.gmra.mxu0 %v546
        %v734 = vpop.f32.mrf.mxu0
        %v735 = vadd.f32 0.0, %v734
        %v736 = vpop.f32.mrf.mxu0
        %v737 = vpop.f32.mrf.mxu0
        %v738 = vadd.f32 0.0, %v737
        %v739 = vpop.f32.mrf.mxu0
        %740 = vdwg.mxu0
        %v741 = vld [vmem:[%s5] sm:$0xf]
        %v742 = vld [vmem:[%s5 + $0x4] sm:$0xf]
        %v743 = vld [vmem:[%s5 + $0x8] sm:$0xf]
        %v744 = vld [vmem:[%s5 + $0xc] sm:$0xf]
        %v745 = vld [vmem:[%s5 + $0x10] sm:$0xf]
        %v746 = vld [vmem:[%s5 + $0x14] sm:$0xf]
        %v747 = vld [vmem:[%s5 + $0x18] sm:$0xf]
        %v748 = vld [vmem:[%s5 + $0x1c] sm:$0xf]
        %v749 = vld [vmem:[%s5 + $0x20] sm:$0xf]
        %v750 = vld [vmem:[%s5 + $0x24] sm:$0xf]
        %v751 = vld [vmem:[%s5 + $0x28] sm:$0xf]
        %v752 = vld [vmem:[%s5 + $0x2c] sm:$0xf]
        %v753 = vld [vmem:[%s5 + $0x30] sm:$0xf]
        %v754 = vld [vmem:[%s5 + $0x34] sm:$0xf]
        %v755 = vld [vmem:[%s5 + $0x38] sm:$0xf]
        %v756 = vld [vmem:[%s5 + $0x3c] sm:$0xf]
        %v773 = vunpack.c.l.b16 %v741
        %v774 = vunpack.c.l.b16 %v742
        %v775 = vunpack.c.l.b16 %v743
        %v776 = vunpack.c.l.b16 %v744
        %v777 = vunpack.c.l.b16 %v745
        %v778 = vunpack.c.l.b16 %v746
        %v779 = vunpack.c.l.b16 %v747
        %v780 = vunpack.c.l.b16 %v748
        %v781 = vunpack.c.l.b16 %v749
        %v782 = vunpack.c.l.b16 %v750
        %v783 = vunpack.c.l.b16 %v751
        %v784 = vunpack.c.l.b16 %v752
        %v785 = vunpack.c.l.b16 %v753
        %v786 = vunpack.c.l.b16 %v754
        %v787 = vunpack.c.l.b16 %v755
        %v788 = vunpack.c.l.b16 %v756
        %v789 = vpack.c.b16 %v774, %v773
        %v790 = vpack.c.b16 %v776, %v775
        %v791 = vpack.c.b16 %v778, %v777
        %v792 = vpack.c.b16 %v780, %v779
        %v793 = vpack.c.b16 %v782, %v781
        %v794 = vpack.c.b16 %v784, %v783
        %v795 = vpack.c.b16 %v786, %v785
        %v796 = vpack.c.b16 %v788, %v787
        %805 = vmatprep.subr.bf16.mxu0 0
        %806 = vmatpush1.bf16.msra.mxu0 %v796
        %807 = vmatprep.subr.bf16.mxu0 0
        %808 = vmatpush1.bf16.msra.mxu0 %v795
        %809 = vmatprep.subr.bf16.mxu0 0
        %810 = vmatpush1.bf16.msra.mxu0 %v794
        %811 = vmatprep.subr.bf16.mxu0 0
        %812 = vmatpush1.bf16.msra.mxu0 %v793
        %813 = vmatprep.subr.bf16.mxu0 0
        %814 = vmatpush1.bf16.msra.mxu0 %v792
        %815 = vmatprep.subr.bf16.mxu0 0
        %816 = vmatpush1.bf16.msra.mxu0 %v791
        %817 = vmatprep.subr.bf16.mxu0 0
        %818 = vmatpush1.bf16.msra.mxu0 %v790
        %819 = vmatprep.subr.bf16.mxu0 0
        %820 = vmatpush1.bf16.msra.mxu0 %v789
        %821 = vmatprep.subr.bf16.mxu0 0
        %822 = vmatpush2.bf16.msra.mxu0 0
        %823 = vmatprep.subr.bf16.mxu0 0
        %824 = vmatpush2.bf16.msra.mxu0 0
        %825 = vmatprep.subr.bf16.mxu0 0
        %826 = vmatpush2.bf16.msra.mxu0 0
        %827 = vmatprep.subr.bf16.mxu0 0
        %828 = vmatpush2.bf16.msra.mxu0 0
        %829 = vmatprep.subr.bf16.mxu0 0
        %830 = vmatpush2.bf16.msra.mxu0 0
        %831 = vmatprep.subr.bf16.mxu0 0
        %832 = vmatpush2.bf16.msra.mxu0 0
        %833 = vmatprep.subr.bf16.mxu0 0
        %834 = vmatpush2.bf16.msra.mxu0 0
        %835 = vmatprep.subr.bf16.mxu0 0
        %836 = vmatpush2.bf16.msra.mxu0 0
        %837 = vmatprep.mubr.bf16.mxu0 0
        %838 = vmatmul.mubr.bf16.gmra.mxu0 %v546
        %v839 = vpop.f32.mrf.mxu0
        %v840 = vadd.f32 0.0, %v839
        %v841 = vpop.f32.mrf.mxu0
        %v842 = vpop.f32.mrf.mxu0
        %v843 = vadd.f32 0.0, %v842
        %v844 = vpop.f32.mrf.mxu0
        %845 = vdwg.mxu0
        %v846 = vpack.c.bf16 %v633, %v630
        %v847 = vpack.c.bf16 %v738, %v735
        %vm848 = vcmask 523264
        %v850 = vsel %vm848, %v846, 0
        %v853 = vsel %vm848, %v847, 0
        %855 = vmatprep.subr.bf16.mxu0 0
        %856 = vmatpush1.bf16.xpose.msra.mxu0 0
        %857 = vmatprep.subr.bf16.mxu0 0
        %858 = vmatpush1.bf16.xpose.msra.mxu0 0
        %859 = vmatprep.subr.bf16.mxu0 0
        %860 = vmatpush1.bf16.xpose.msra.mxu0 0
        %861 = vmatprep.subr.bf16.mxu0 0
        %862 = vmatpush1.bf16.xpose.msra.mxu0 0
        %863 = vmatprep.subr.bf16.mxu0 0
        %864 = vmatpush1.bf16.xpose.msra.mxu0 0
        %865 = vmatprep.subr.bf16.mxu0 0
        %866 = vmatpush1.bf16.xpose.msra.mxu0 0
        %867 = vmatprep.subr.bf16.mxu0 0
        %868 = vmatpush1.bf16.xpose.msra.mxu0 0
        %869 = vmatprep.subr.bf16.mxu0 0
        %870 = vmatpush1.bf16.xpose.msra.mxu0 %v853
        %871 = vmatprep.subr.bf16.mxu0 0
        %872 = vmatpush2.bf16.xpose.msra.mxu0 0
        %873 = vmatprep.subr.bf16.mxu0 0
        %874 = vmatpush2.bf16.xpose.msra.mxu0 0
        %875 = vmatprep.subr.bf16.mxu0 0
        %876 = vmatpush2.bf16.xpose.msra.mxu0 0
        %877 = vmatprep.subr.bf16.mxu0 0
        %878 = vmatpush2.bf16.xpose.msra.mxu0 0
        %879 = vmatprep.subr.bf16.mxu0 0
        %880 = vmatpush2.bf16.xpose.msra.mxu0 0
        %881 = vmatprep.subr.bf16.mxu0 0
        %882 = vmatpush2.bf16.xpose.msra.mxu0 0
        %883 = vmatprep.subr.bf16.mxu0 0
        %884 = vmatpush2.bf16.xpose.msra.mxu0 0
        %885 = vmatprep.subr.bf16.mxu0 0
        %886 = vmatpush2.bf16.xpose.msra.mxu0 0
        %887 = vmatprep.mubr.bf16.mxu0 0
        %888 = vmatmul.mubr.bf16.gmra.mxu0 %v850
        %v889 = vpop.f32.mrf.mxu0
        %v890 = vadd.f32 0.0, %v889
        %v891 = vpop.f32.mrf.mxu0
        %v892 = vpop.f32.mrf.mxu0
        %v893 = vadd.f32 0.0, %v892
        %v894 = vpop.f32.mrf.mxu0
        %895 = vdwg.mxu0
        %vm896 = vcmask 130048
        %v897 = vsel %vm896, %v890, -inf
        %898 = vmax.xlane.f32.xlu0 %v897
        %v899 = vpop.xlane.xlu0 %898
        %v900 = vsel %vm896, %v893, -inf
        %901 = vmax.xlane.f32.xlu0 %v900
        %v902 = vpop.xlane.xlu0 %901
        %v903 = vsub.f32 %v890, %v899
        %v904 = vsub.f32 %v893, %v902
        %v905 = vmul.f32 %v903, 1.442695
        %v906 = vpow.pop %v905
        %v907 = vmul.f32 %v904, 1.442695
        %v908 = vpow.pop %v907
        %v909 = vsel %vm896, %v906, 0.0
        %910 = vadd.xlane.f32.xlu0 %v909
        %v911 = vpop.xlane.xlu0 %910
        %v912 = vsel %vm896, %v908, 0.0
        %913 = vadd.xlane.f32.xlu0 %v912
        %v914 = vpop.xlane.xlu0 %913
        %v915 = vpack.c.bf16 %v908, %v906
        %v916 = vpack.c.bf16 %v843, %v840
        %v918 = vsel %vm896, %v915, 0
        %920 = vmatprep.subr.bf16.mxu0 0
        %921 = vmatpush1.bf16.msra.mxu0 0
        %922 = vmatprep.subr.bf16.mxu0 0
        %923 = vmatpush1.bf16.msra.mxu0 0
        %924 = vmatprep.subr.bf16.mxu0 0
        %925 = vmatpush1.bf16.msra.mxu0 0
        %926 = vmatprep.subr.bf16.mxu0 0
        %927 = vmatpush1.bf16.msra.mxu0 0
        %928 = vmatprep.subr.bf16.mxu0 0
        %929 = vmatpush1.bf16.msra.mxu0 0
        %930 = vmatprep.subr.bf16.mxu0 0
        %931 = vmatpush1.bf16.msra.mxu0 0
        %932 = vmatprep.subr.bf16.mxu0 0
        %933 = vmatpush1.bf16.msra.mxu0 0
        %934 = vmatprep.subr.bf16.mxu0 0
        %935 = vmatpush1.bf16.msra.mxu0 %v916
        %936 = vmatprep.subr.bf16.mxu0 0
        %937 = vmatpush2.bf16.msra.mxu0 0
        %938 = vmatprep.subr.bf16.mxu0 0
        %939 = vmatpush2.bf16.msra.mxu0 0
        %940 = vmatprep.subr.bf16.mxu0 0
        %941 = vmatpush2.bf16.msra.mxu0 0
        %942 = vmatprep.subr.bf16.mxu0 0
        %943 = vmatpush2.bf16.msra.mxu0 0
        %944 = vmatprep.subr.bf16.mxu0 0
        %945 = vmatpush2.bf16.msra.mxu0 0
        %946 = vmatprep.subr.bf16.mxu0 0
        %947 = vmatpush2.bf16.msra.mxu0 0
        %948 = vmatprep.subr.bf16.mxu0 0
        %949 = vmatpush2.bf16.msra.mxu0 0
        %950 = vmatprep.subr.bf16.mxu0 0
        %951 = vmatpush2.bf16.msra.mxu0 0
        %952 = vmatprep.mubr.bf16.mxu0 0
        %953 = vmatmul.mubr.bf16.gmra.mxu0 %v918
        %v954 = vpop.f32.mrf.mxu0
        %v955 = vadd.f32 0.0, %v954
        %v956 = vpop.f32.mrf.mxu0
        %v957 = vpop.f32.mrf.mxu0
        %v958 = vadd.f32 0.0, %v957
        %v959 = vpop.f32.mrf.mxu0
        %960 = vdwg.mxu0
        %v961 = vrcp.pop %v911
        %v962 = vmul.f32 %v955, %v961
        %v963 = vrcp.pop %v914
        %v964 = vmul.f32 %v958, %v963
        %s965 = scalar_lea.vmem %s3, 64
        %v966 = vld [vmem:[%s965] sm:$0xf]
        %v967 = vld [vmem:[%s965 + $0x4] sm:$0xf]
        %v968 = vld [vmem:[%s965 + $0x8] sm:$0xf]
        %v969 = vld [vmem:[%s965 + $0xc] sm:$0xf]
        %v970 = vld [vmem:[%s965 + $0x10] sm:$0xf]
        %v971 = vld [vmem:[%s965 + $0x14] sm:$0xf]
        %v972 = vld [vmem:[%s965 + $0x18] sm:$0xf]
        %v973 = vld [vmem:[%s965 + $0x1c] sm:$0xf]
        %v974 = vld [vmem:[%s965 + $0x20] sm:$0xf]
        %v975 = vld [vmem:[%s965 + $0x24] sm:$0xf]
        %v976 = vld [vmem:[%s965 + $0x28] sm:$0xf]
        %v977 = vld [vmem:[%s965 + $0x2c] sm:$0xf]
        %v978 = vld [vmem:[%s965 + $0x30] sm:$0xf]
        %v979 = vld [vmem:[%s965 + $0x34] sm:$0xf]
        %v980 = vld [vmem:[%s965 + $0x38] sm:$0xf]
        %v981 = vld [vmem:[%s965 + $0x3c] sm:$0xf]
        %v998 = vunpack.c.l.b16 %v966
        %v999 = vunpack.c.l.b16 %v967
        %v1000 = vunpack.c.l.b16 %v968
        %v1001 = vunpack.c.l.b16 %v969
        %v1002 = vunpack.c.l.b16 %v970
        %v1003 = vunpack.c.l.b16 %v971
        %v1004 = vunpack.c.l.b16 %v972
        %v1005 = vunpack.c.l.b16 %v973
        %v1006 = vunpack.c.l.b16 %v974
        %v1007 = vunpack.c.l.b16 %v975
        %v1008 = vunpack.c.l.b16 %v976
        %v1009 = vunpack.c.l.b16 %v977
        %v1010 = vunpack.c.l.b16 %v978
        %v1011 = vunpack.c.l.b16 %v979
        %v1012 = vunpack.c.l.b16 %v980
        %v1013 = vunpack.c.l.b16 %v981
        %v1014 = vpack.c.b16 %v999, %v998
        %v1015 = vpack.c.b16 %v1001, %v1000
        %v1016 = vpack.c.b16 %v1003, %v1002
        %v1017 = vpack.c.b16 %v1005, %v1004
        %v1018 = vpack.c.b16 %v1007, %v1006
        %v1019 = vpack.c.b16 %v1009, %v1008
        %v1020 = vpack.c.b16 %v1011, %v1010
        %v1021 = vpack.c.b16 %v1013, %v1012
        %1030 = vmatprep.subr.bf16.mxu0 0
        %1031 = vmatpush1.bf16.msra.mxu0 %v1021
        %1032 = vmatprep.subr.bf16.mxu0 0
        %1033 = vmatpush1.bf16.msra.mxu0 %v1020
        %1034 = vmatprep.subr.bf16.mxu0 0
        %1035 = vmatpush1.bf16.msra.mxu0 %v1019
        %1036 = vmatprep.subr.bf16.mxu0 0
        %1037 = vmatpush1.bf16.msra.mxu0 %v1018
        %1038 = vmatprep.subr.bf16.mxu0 0
        %1039 = vmatpush1.bf16.msra.mxu0 %v1017
        %1040 = vmatprep.subr.bf16.mxu0 0
        %1041 = vmatpush1.bf16.msra.mxu0 %v1016
        %1042 = vmatprep.subr.bf16.mxu0 0
        %1043 = vmatpush1.bf16.msra.mxu0 %v1015
        %1044 = vmatprep.subr.bf16.mxu0 0
        %1045 = vmatpush1.bf16.msra.mxu0 %v1014
        %1046 = vmatprep.subr.bf16.mxu0 0
        %1047 = vmatpush2.bf16.msra.mxu0 0
        %1048 = vmatprep.subr.bf16.mxu0 0
        %1049 = vmatpush2.bf16.msra.mxu0 0
        %1050 = vmatprep.subr.bf16.mxu0 0
        %1051 = vmatpush2.bf16.msra.mxu0 0
        %1052 = vmatprep.subr.bf16.mxu0 0
        %1053 = vmatpush2.bf16.msra.mxu0 0
        %1054 = vmatprep.subr.bf16.mxu0 0
        %1055 = vmatpush2.bf16.msra.mxu0 0
        %1056 = vmatprep.subr.bf16.mxu0 0
        %1057 = vmatpush2.bf16.msra.mxu0 0
        %1058 = vmatprep.subr.bf16.mxu0 0
        %1059 = vmatpush2.bf16.msra.mxu0 0
        %1060 = vmatprep.subr.bf16.mxu0 0
        %1061 = vmatpush2.bf16.msra.mxu0 0
        %1062 = vmatprep.mubr.bf16.mxu0 0
        %1063 = vmatmul.mubr.bf16.gmra.mxu0 %v546
        %v1064 = vpop.f32.mrf.mxu0
        %v1065 = vadd.f32 0.0, %v1064
        %v1066 = vpop.f32.mrf.mxu0
        %v1067 = vpop.f32.mrf.mxu0
        %v1068 = vadd.f32 0.0, %v1067
        %v1069 = vpop.f32.mrf.mxu0
        %1070 = vdwg.mxu0
        %s1071 = scalar_lea.vmem %s4, 64
        %v1072 = vld [vmem:[%s1071] sm:$0xf]
        %v1073 = vld [vmem:[%s1071 + $0x4] sm:$0xf]
        %v1074 = vld [vmem:[%s1071 + $0x8] sm:$0xf]
        %v1075 = vld [vmem:[%s1071 + $0xc] sm:$0xf]
        %v1076 = vld [vmem:[%s1071 + $0x10] sm:$0xf]
        %v1077 = vld [vmem:[%s1071 + $0x14] sm:$0xf]
        %v1078 = vld [vmem:[%s1071 + $0x18] sm:$0xf]
        %v1079 = vld [vmem:[%s1071 + $0x1c] sm:$0xf]
        %v1080 = vld [vmem:[%s1071 + $0x20] sm:$0xf]
        %v1081 = vld [vmem:[%s1071 + $0x24] sm:$0xf]
        %v1082 = vld [vmem:[%s1071 + $0x28] sm:$0xf]
        %v1083 = vld [vmem:[%s1071 + $0x2c] sm:$0xf]
        %v1084 = vld [vmem:[%s1071 + $0x30] sm:$0xf]
        %v1085 = vld [vmem:[%s1071 + $0x34] sm:$0xf]
        %v1086 = vld [vmem:[%s1071 + $0x38] sm:$0xf]
        %v1087 = vld [vmem:[%s1071 + $0x3c] sm:$0xf]
        %v1104 = vunpack.c.l.b16 %v1072
        %v1105 = vunpack.c.l.b16 %v1073
        %v1106 = vunpack.c.l.b16 %v1074
        %v1107 = vunpack.c.l.b16 %v1075
        %v1108 = vunpack.c.l.b16 %v1076
        %v1109 = vunpack.c.l.b16 %v1077
        %v1110 = vunpack.c.l.b16 %v1078
        %v1111 = vunpack.c.l.b16 %v1079
        %v1112 = vunpack.c.l.b16 %v1080
        %v1113 = vunpack.c.l.b16 %v1081
        %v1114 = vunpack.c.l.b16 %v1082
        %v1115 = vunpack.c.l.b16 %v1083
        %v1116 = vunpack.c.l.b16 %v1084
        %v1117 = vunpack.c.l.b16 %v1085
        %v1118 = vunpack.c.l.b16 %v1086
        %v1119 = vunpack.c.l.b16 %v1087
        %v1120 = vpack.c.b16 %v1105, %v1104
        %v1121 = vpack.c.b16 %v1107, %v1106
        %v1122 = vpack.c.b16 %v1109, %v1108
        %v1123 = vpack.c.b16 %v1111, %v1110
        %v1124 = vpack.c.b16 %v1113, %v1112
        %v1125 = vpack.c.b16 %v1115, %v1114
        %v1126 = vpack.c.b16 %v1117, %v1116
        %v1127 = vpack.c.b16 %v1119, %v1118
        %1136 = vmatprep.subr.bf16.mxu0 0
        %1137 = vmatpush1.bf16.msra.mxu0 %v1127
        %1138 = vmatprep.subr.bf16.mxu0 0
        %1139 = vmatpush1.bf16.msra.mxu0 %v1126
        %1140 = vmatprep.subr.bf16.mxu0 0
        %1141 = vmatpush1.bf16.msra.mxu0 %v1125
        %1142 = vmatprep.subr.bf16.mxu0 0
        %1143 = vmatpush1.bf16.msra.mxu0 %v1124
        %1144 = vmatprep.subr.bf16.mxu0 0
        %1145 = vmatpush1.bf16.msra.mxu0 %v1123
        %1146 = vmatprep.subr.bf16.mxu0 0
        %1147 = vmatpush1.bf16.msra.mxu0 %v1122
        %1148 = vmatprep.subr.bf16.mxu0 0
        %1149 = vmatpush1.bf16.msra.mxu0 %v1121
        %1150 = vmatprep.subr.bf16.mxu0 0
        %1151 = vmatpush1.bf16.msra.mxu0 %v1120
        %1152 = vmatprep.subr.bf16.mxu0 0
        %1153 = vmatpush2.bf16.msra.mxu0 0
        %1154 = vmatprep.subr.bf16.mxu0 0
        %1155 = vmatpush2.bf16.msra.mxu0 0
        %1156 = vmatprep.subr.bf16.mxu0 0
        %1157 = vmatpush2.bf16.msra.mxu0 0
        %1158 = vmatprep.subr.bf16.mxu0 0
        %1159 = vmatpush2.bf16.msra.mxu0 0
        %1160 = vmatprep.subr.bf16.mxu0 0
        %1161 = vmatpush2.bf16.msra.mxu0 0
        %1162 = vmatprep.subr.bf16.mxu0 0
        %1163 = vmatpush2.bf16.msra.mxu0 0
        %1164 = vmatprep.subr.bf16.mxu0 0
        %1165 = vmatpush2.bf16.msra.mxu0 0
        %1166 = vmatprep.subr.bf16.mxu0 0
        %1167 = vmatpush2.bf16.msra.mxu0 0
        %1168 = vmatprep.mubr.bf16.mxu0 0
        %1169 = vmatmul.mubr.bf16.gmra.mxu0 %v546
        %v1170 = vpop.f32.mrf.mxu0
        %v1171 = vadd.f32 0.0, %v1170
        %v1172 = vpop.f32.mrf.mxu0
        %v1173 = vpop.f32.mrf.mxu0
        %v1174 = vadd.f32 0.0, %v1173
        %v1175 = vpop.f32.mrf.mxu0
        %1176 = vdwg.mxu0
        %s1177 = scalar_lea.vmem %s5, 64
        %v1178 = vld [vmem:[%s1177] sm:$0xf]
        %v1179 = vld [vmem:[%s1177 + $0x4] sm:$0xf]
        %v1180 = vld [vmem:[%s1177 + $0x8] sm:$0xf]
        %v1181 = vld [vmem:[%s1177 + $0xc] sm:$0xf]
        %v1182 = vld [vmem:[%s1177 + $0x10] sm:$0xf]
        %v1183 = vld [vmem:[%s1177 + $0x14] sm:$0xf]
        %v1184 = vld [vmem:[%s1177 + $0x18] sm:$0xf]
        %v1185 = vld [vmem:[%s1177 + $0x1c] sm:$0xf]
        %v1186 = vld [vmem:[%s1177 + $0x20] sm:$0xf]
        %v1187 = vld [vmem:[%s1177 + $0x24] sm:$0xf]
        %v1188 = vld [vmem:[%s1177 + $0x28] sm:$0xf]
        %v1189 = vld [vmem:[%s1177 + $0x2c] sm:$0xf]
        %v1190 = vld [vmem:[%s1177 + $0x30] sm:$0xf]
        %v1191 = vld [vmem:[%s1177 + $0x34] sm:$0xf]
        %v1192 = vld [vmem:[%s1177 + $0x38] sm:$0xf]
        %v1193 = vld [vmem:[%s1177 + $0x3c] sm:$0xf]
        %v1210 = vunpack.c.l.b16 %v1178
        %v1211 = vunpack.c.l.b16 %v1179
        %v1212 = vunpack.c.l.b16 %v1180
        %v1213 = vunpack.c.l.b16 %v1181
        %v1214 = vunpack.c.l.b16 %v1182
        %v1215 = vunpack.c.l.b16 %v1183
        %v1216 = vunpack.c.l.b16 %v1184
        %v1217 = vunpack.c.l.b16 %v1185
        %v1218 = vunpack.c.l.b16 %v1186
        %v1219 = vunpack.c.l.b16 %v1187
        %v1220 = vunpack.c.l.b16 %v1188
        %v1221 = vunpack.c.l.b16 %v1189
        %v1222 = vunpack.c.l.b16 %v1190
        %v1223 = vunpack.c.l.b16 %v1191
        %v1224 = vunpack.c.l.b16 %v1192
        %v1225 = vunpack.c.l.b16 %v1193
        %v1226 = vpack.c.b16 %v1211, %v1210
        %v1227 = vpack.c.b16 %v1213, %v1212
        %v1228 = vpack.c.b16 %v1215, %v1214
        %v1229 = vpack.c.b16 %v1217, %v1216
        %v1230 = vpack.c.b16 %v1219, %v1218
        %v1231 = vpack.c.b16 %v1221, %v1220
        %v1232 = vpack.c.b16 %v1223, %v1222
        %v1233 = vpack.c.b16 %v1225, %v1224
        %1242 = vmatprep.subr.bf16.mxu0 0
        %1243 = vmatpush1.bf16.msra.mxu0 %v1233
        %1244 = vmatprep.subr.bf16.mxu0 0
        %1245 = vmatpush1.bf16.msra.mxu0 %v1232
        %1246 = vmatprep.subr.bf16.mxu0 0
        %1247 = vmatpush1.bf16.msra.mxu0 %v1231
        %1248 = vmatprep.subr.bf16.mxu0 0
        %1249 = vmatpush1.bf16.msra.mxu0 %v1230
        %1250 = vmatprep.subr.bf16.mxu0 0
        %1251 = vmatpush1.bf16.msra.mxu0 %v1229
        %1252 = vmatprep.subr.bf16.mxu0 0
        %1253 = vmatpush1.bf16.msra.mxu0 %v1228
        %1254 = vmatprep.subr.bf16.mxu0 0
        %1255 = vmatpush1.bf16.msra.mxu0 %v1227
        %1256 = vmatprep.subr.bf16.mxu0 0
        %1257 = vmatpush1.bf16.msra.mxu0 %v1226
        %1258 = vmatprep.subr.bf16.mxu0 0
        %1259 = vmatpush2.bf16.msra.mxu0 0
        %1260 = vmatprep.subr.bf16.mxu0 0
        %1261 = vmatpush2.bf16.msra.mxu0 0
        %1262 = vmatprep.subr.bf16.mxu0 0
        %1263 = vmatpush2.bf16.msra.mxu0 0
        %1264 = vmatprep.subr.bf16.mxu0 0
        %1265 = vmatpush2.bf16.msra.mxu0 0
        %1266 = vmatprep.subr.bf16.mxu0 0
        %1267 = vmatpush2.bf16.msra.mxu0 0
        %1268 = vmatprep.subr.bf16.mxu0 0
        %1269 = vmatpush2.bf16.msra.mxu0 0
        %1270 = vmatprep.subr.bf16.mxu0 0
        %1271 = vmatpush2.bf16.msra.mxu0 0
        %1272 = vmatprep.subr.bf16.mxu0 0
        %1273 = vmatpush2.bf16.msra.mxu0 0
        %1274 = vmatprep.mubr.bf16.mxu0 0
        %1275 = vmatmul.mubr.bf16.gmra.mxu0 %v546
        %v1276 = vpop.f32.mrf.mxu0
        %v1277 = vadd.f32 0.0, %v1276
        %v1278 = vpop.f32.mrf.mxu0
        %v1279 = vpop.f32.mrf.mxu0
        %v1280 = vadd.f32 0.0, %v1279
        %v1281 = vpop.f32.mrf.mxu0
        %1282 = vdwg.mxu0
        %v1283 = vpack.c.bf16 %v1068, %v1065
        %v1284 = vpack.c.bf16 %v1174, %v1171
        %v1286 = vsel %vm848, %v1283, 0
        %v1289 = vsel %vm848, %v1284, 0
        %1291 = vmatprep.subr.bf16.mxu0 0
        %1292 = vmatpush1.bf16.xpose.msra.mxu0 0
        %1293 = vmatprep.subr.bf16.mxu0 0
        %1294 = vmatpush1.bf16.xpose.msra.mxu0 0
        %1295 = vmatprep.subr.bf16.mxu0 0
        %1296 = vmatpush1.bf16.xpose.msra.mxu0 0
        %1297 = vmatprep.subr.bf16.mxu0 0
        %1298 = vmatpush1.bf16.xpose.msra.mxu0 0
        %1299 = vmatprep.subr.bf16.mxu0 0
        %1300 = vmatpush1.bf16.xpose.msra.mxu0 0
        %1301 = vmatprep.subr.bf16.mxu0 0
        %1302 = vmatpush1.bf16.xpose.msra.mxu0 0
        %1303 = vmatprep.subr.bf16.mxu0 0
        %1304 = vmatpush1.bf16.xpose.msra.mxu0 0
        %1305 = vmatprep.subr.bf16.mxu0 0
        %1306 = vmatpush1.bf16.xpose.msra.mxu0 %v1289
        %1307 = vmatprep.subr.bf16.mxu0 0
        %1308 = vmatpush2.bf16.xpose.msra.mxu0 0
        %1309 = vmatprep.subr.bf16.mxu0 0
        %1310 = vmatpush2.bf16.xpose.msra.mxu0 0
        %1311 = vmatprep.subr.bf16.mxu0 0
        %1312 = vmatpush2.bf16.xpose.msra.mxu0 0
        %1313 = vmatprep.subr.bf16.mxu0 0
        %1314 = vmatpush2.bf16.xpose.msra.mxu0 0
        %1315 = vmatprep.subr.bf16.mxu0 0
        %1316 = vmatpush2.bf16.xpose.msra.mxu0 0
        %1317 = vmatprep.subr.bf16.mxu0 0
        %1318 = vmatpush2.bf16.xpose.msra.mxu0 0
        %1319 = vmatprep.subr.bf16.mxu0 0
        %1320 = vmatpush2.bf16.xpose.msra.mxu0 0
        %1321 = vmatprep.subr.bf16.mxu0 0
        %1322 = vmatpush2.bf16.xpose.msra.mxu0 0
        %1323 = vmatprep.mubr.bf16.mxu0 0
        %1324 = vmatmul.mubr.bf16.gmra.mxu0 %v1286
        %v1325 = vpop.f32.mrf.mxu0
        %v1326 = vadd.f32 0.0, %v1325
        %v1327 = vpop.f32.mrf.mxu0
        %v1328 = vpop.f32.mrf.mxu0
        %v1329 = vadd.f32 0.0, %v1328
        %v1330 = vpop.f32.mrf.mxu0
        %1331 = vdwg.mxu0
        %v1332 = vsel %vm896, %v1326, -inf
        %1333 = vmax.xlane.f32.xlu0 %v1332
        %v1334 = vpop.xlane.xlu0 %1333
        %v1335 = vsel %vm896, %v1329, -inf
        %1336 = vmax.xlane.f32.xlu0 %v1335
        %v1337 = vpop.xlane.xlu0 %1336
        %v1338 = vsub.f32 %v1326, %v1334
        %v1339 = vsub.f32 %v1329, %v1337
        %v1340 = vmul.f32 %v1338, 1.442695
        %v1341 = vpow.pop %v1340
        %v1342 = vmul.f32 %v1339, 1.442695
        %v1343 = vpow.pop %v1342
        %v1344 = vsel %vm896, %v1341, 0.0
        %1345 = vadd.xlane.f32.xlu0 %v1344
        %v1346 = vpop.xlane.xlu0 %1345
        %v1347 = vsel %vm896, %v1343, 0.0
        %1348 = vadd.xlane.f32.xlu0 %v1347
        %v1349 = vpop.xlane.xlu0 %1348
        %v1350 = vpack.c.bf16 %v1343, %v1341
        %v1351 = vpack.c.bf16 %v1280, %v1277
        %v1353 = vsel %vm896, %v1350, 0
        %1355 = vmatprep.subr.bf16.mxu0 0
        %1356 = vmatpush1.bf16.msra.mxu0 0
        %1357 = vmatprep.subr.bf16.mxu0 0
        %1358 = vmatpush1.bf16.msra.mxu0 0
        %1359 = vmatprep.subr.bf16.mxu0 0
        %1360 = vmatpush1.bf16.msra.mxu0 0
        %1361 = vmatprep.subr.bf16.mxu0 0
        %1362 = vmatpush1.bf16.msra.mxu0 0
        %1363 = vmatprep.subr.bf16.mxu0 0
        %1364 = vmatpush1.bf16.msra.mxu0 0
        %1365 = vmatprep.subr.bf16.mxu0 0
        %1366 = vmatpush1.bf16.msra.mxu0 0
        %1367 = vmatprep.subr.bf16.mxu0 0
        %1368 = vmatpush1.bf16.msra.mxu0 0
        %1369 = vmatprep.subr.bf16.mxu0 0
        %1370 = vmatpush1.bf16.msra.mxu0 %v1351
        %1371 = vmatprep.subr.bf16.mxu0 0
        %1372 = vmatpush2.bf16.msra.mxu0 0
        %1373 = vmatprep.subr.bf16.mxu0 0
        %1374 = vmatpush2.bf16.msra.mxu0 0
        %1375 = vmatprep.subr.bf16.mxu0 0
        %1376 = vmatpush2.bf16.msra.mxu0 0
        %1377 = vmatprep.subr.bf16.mxu0 0
        %1378 = vmatpush2.bf16.msra.mxu0 0
        %1379 = vmatprep.subr.bf16.mxu0 0
        %1380 = vmatpush2.bf16.msra.mxu0 0
        %1381 = vmatprep.subr.bf16.mxu0 0
        %1382 = vmatpush2.bf16.msra.mxu0 0
        %1383 = vmatprep.subr.bf16.mxu0 0
        %1384 = vmatpush2.bf16.msra.mxu0 0
        %1385 = vmatprep.subr.bf16.mxu0 0
        %1386 = vmatpush2.bf16.msra.mxu0 0
        %1387 = vmatprep.mubr.bf16.mxu0 0
        %1388 = vmatmul.mubr.bf16.gmra.mxu0 %v1353
        %v1389 = vpop.f32.mrf.mxu0
        %v1390 = vadd.f32 0.0, %v1389
        %v1391 = vpop.f32.mrf.mxu0
        %v1392 = vpop.f32.mrf.mxu0
        %v1393 = vadd.f32 0.0, %v1392
        %v1394 = vpop.f32.mrf.mxu0
        %1395 = vdwg.mxu0
        %v1396 = vrcp.pop %v1346
        %v1397 = vmul.f32 %v1390, %v1396
        %v1398 = vrcp.pop %v1349
        %v1399 = vmul.f32 %v1393, %v1398
        %1402 = vrot.lane.b32.xlu0 %v1397, 64
        %v1403 = vpop.permute.xlu0 %1402
        %1404 = vrot.lane.b32.xlu0 %v1399, 64
        %v1405 = vpop.permute.xlu0 %1404
        %v1408 = vsel %vm848, %v962, %v1403
        %v1409 = vsel %vm848, %v964, %v1405
        %v1410 = vld [vmem:[%s6] sm:$0xf]
        %v1411 = vld [vmem:[%s6 + $0x4] sm:$0xf]
        %v1412 = vld [vmem:[%s6 + $0x8] sm:$0xf]
        %v1413 = vld [vmem:[%s6 + $0xc] sm:$0xf]
        %v1414 = vld [vmem:[%s6 + $0x10] sm:$0xf]
        %v1415 = vld [vmem:[%s6 + $0x14] sm:$0xf]
        %v1416 = vld [vmem:[%s6 + $0x18] sm:$0xf]
        %v1417 = vld [vmem:[%s6 + $0x1c] sm:$0xf]
        %v1418 = vld [vmem:[%s6 + $0x20] sm:$0xf]
        %v1419 = vld [vmem:[%s6 + $0x24] sm:$0xf]
        %v1420 = vld [vmem:[%s6 + $0x28] sm:$0xf]
        %v1421 = vld [vmem:[%s6 + $0x2c] sm:$0xf]
        %v1422 = vld [vmem:[%s6 + $0x30] sm:$0xf]
        %v1423 = vld [vmem:[%s6 + $0x34] sm:$0xf]
        %v1424 = vld [vmem:[%s6 + $0x38] sm:$0xf]
        %v1425 = vld [vmem:[%s6 + $0x3c] sm:$0xf]
        %v1426 = vpack.c.bf16 %v1409, %v1408
        %v1427 = vld [vmem:[%s7] sm:$0x1]
        %v1429 = vlaneseq
        %v1430 = vshrl.u32 %v1429, 7
        %v1431 = vsub.s32 0, %v1430
        %v1432 = vrot.slane %v1427, %v1431
        %v1450 = vunpack.c.l.b16 %v1410
        %v1451 = vunpack.c.l.b16 %v1411
        %v1452 = vunpack.c.l.b16 %v1412
        %v1453 = vunpack.c.l.b16 %v1413
        %v1454 = vunpack.c.l.b16 %v1414
        %v1455 = vunpack.c.l.b16 %v1415
        %v1456 = vunpack.c.l.b16 %v1416
        %v1457 = vunpack.c.l.b16 %v1417
        %v1458 = vunpack.c.l.b16 %v1418
        %v1459 = vunpack.c.l.b16 %v1419
        %v1460 = vunpack.c.l.b16 %v1420
        %v1461 = vunpack.c.l.b16 %v1421
        %v1462 = vunpack.c.l.b16 %v1422
        %v1463 = vunpack.c.l.b16 %v1423
        %v1464 = vunpack.c.l.b16 %v1424
        %v1465 = vunpack.c.l.b16 %v1425
        %v1466 = vpack.c.b16 %v1451, %v1450
        %v1467 = vpack.c.b16 %v1453, %v1452
        %v1468 = vpack.c.b16 %v1455, %v1454
        %v1469 = vpack.c.b16 %v1457, %v1456
        %v1470 = vpack.c.b16 %v1459, %v1458
        %v1471 = vpack.c.b16 %v1461, %v1460
        %v1472 = vpack.c.b16 %v1463, %v1462
        %v1473 = vpack.c.b16 %v1465, %v1464
        %1482 = vmatprep.subr.bf16.mxu0 0
        %1483 = vmatpush1.bf16.msra.mxu0 %v1473
        %1484 = vmatprep.subr.bf16.mxu0 0
        %1485 = vmatpush1.bf16.msra.mxu0 %v1472
        %1486 = vmatprep.subr.bf16.mxu0 0
        %1487 = vmatpush1.bf16.msra.mxu0 %v1471
        %1488 = vmatprep.subr.bf16.mxu0 0
        %1489 = vmatpush1.bf16.msra.mxu0 %v1470
        %1490 = vmatprep.subr.bf16.mxu0 0
        %1491 = vmatpush1.bf16.msra.mxu0 %v1469
        %1492 = vmatprep.subr.bf16.mxu0 0
        %1493 = vmatpush1.bf16.msra.mxu0 %v1468
        %1494 = vmatprep.subr.bf16.mxu0 0
        %1495 = vmatpush1.bf16.msra.mxu0 %v1467
        %1496 = vmatprep.subr.bf16.mxu0 0
        %1497 = vmatpush1.bf16.msra.mxu0 %v1466
        %1498 = vmatprep.subr.bf16.mxu0 0
        %1499 = vmatpush2.bf16.msra.mxu0 0
        %1500 = vmatprep.subr.bf16.mxu0 0
        %1501 = vmatpush2.bf16.msra.mxu0 0
        %1502 = vmatprep.subr.bf16.mxu0 0
        %1503 = vmatpush2.bf16.msra.mxu0 0
        %1504 = vmatprep.subr.bf16.mxu0 0
        %1505 = vmatpush2.bf16.msra.mxu0 0
        %1506 = vmatprep.subr.bf16.mxu0 0
        %1507 = vmatpush2.bf16.msra.mxu0 0
        %1508 = vmatprep.subr.bf16.mxu0 0
        %1509 = vmatpush2.bf16.msra.mxu0 0
        %1510 = vmatprep.subr.bf16.mxu0 0
        %1511 = vmatpush2.bf16.msra.mxu0 0
        %1512 = vmatprep.subr.bf16.mxu0 0
        %1513 = vmatpush2.bf16.msra.mxu0 0
        %1514 = vmatprep.mubr.bf16.mxu0 0
        %1515 = vmatmul.mubr.bf16.gmra.mxu0 %v1426
        %v1516 = vpop.f32.mrf.mxu0
        %v1517 = vadd.f32 %v1432, %v1516
        %v1518 = vpop.f32.mrf.mxu0
        %v1519 = vpop.f32.mrf.mxu0
        %v1520 = vadd.f32 %v1432, %v1519
        %v1521 = vpop.f32.mrf.mxu0
        %1522 = vdwg.mxu0
        %v1523 = vadd.f32 %v487, %v1517
        %v1524 = vadd.f32 %v488, %v1520
        %v1525 = vld [vmem:[%s8] sm:$0x1]
        %v1526 = vld [vmem:[%s9] sm:$0x1]
        %1527 = vadd.xlane.f32.xlu0 %v1523
        %v1528 = vpop.xlane.xlu0 %1527
        %1529 = vadd.xlane.f32.xlu0 %v1524
        %v1530 = vpop.xlane.xlu0 %1529
        %v1531 = vmul.f32 %v1528, %v495
        %v1532 = vmul.f32 %v1530, %v495
        %v1533 = vsub.f32 %v1523, %v1531
        %v1534 = vsub.f32 %v1524, %v1532
        %v1535 = vmul.f32 %v1533, %v1533
        %v1536 = vmul.f32 %v1534, %v1534
        %1537 = vadd.xlane.f32.xlu0 %v1535
        %v1538 = vpop.xlane.xlu0 %1537
        %1539 = vadd.xlane.f32.xlu0 %v1536
        %v1540 = vpop.xlane.xlu0 %1539
        %v1541 = vmul.f32 %v1538, %v495
        %v1542 = vmul.f32 %v1540, %v495
        %v1543 = vadd.f32 %v1541, 1e-05
        %v1544 = vadd.f32 %v1542, 1e-05
        %v1545 = vrsqrt.pop %v1543
        %v1546 = vrsqrt.pop %v1544
        %v1547 = vmul.f32 %v1533, %v1545
        %v1548 = vmul.f32 %v1534, %v1546
        %v1550 = vlaneseq
        %v1551 = vshrl.u32 %v1550, 7
        %v1552 = vsub.s32 0, %v1551
        %v1553 = vrot.slane %v1525, %v1552
        %v1555 = vmul.f32 %v1547, %v1553
        %v1556 = vmul.f32 %v1548, %v1553
        %v1558 = vlaneseq
        %v1559 = vshrl.u32 %v1558, 7
        %v1560 = vsub.s32 0, %v1559
        %v1561 = vrot.slane %v1526, %v1560
        %v1563 = vadd.f32 %v1555, %v1561
        %v1564 = vadd.f32 %v1556, %v1561
        %v1565 = vld [vmem:[%s10] sm:$0xff]
        %v1566 = vld [vmem:[%s10 + $0x8] sm:$0xff]
        %v1567 = vld [vmem:[%s10 + $0x10] sm:$0xff]
        %v1568 = vld [vmem:[%s10 + $0x18] sm:$0xff]
        %v1569 = vld [vmem:[%s10 + $0x20] sm:$0xff]
        %v1570 = vld [vmem:[%s10 + $0x28] sm:$0xff]
        %v1571 = vld [vmem:[%s10 + $0x30] sm:$0xff]
        %v1572 = vld [vmem:[%s10 + $0x38] sm:$0xff]
        %v1573 = vld [vmem:[%s10 + $0x40] sm:$0xff]
        %v1574 = vld [vmem:[%s10 + $0x48] sm:$0xff]
        %v1575 = vld [vmem:[%s10 + $0x50] sm:$0xff]
        %v1576 = vld [vmem:[%s10 + $0x58] sm:$0xff]
        %v1577 = vld [vmem:[%s10 + $0x60] sm:$0xff]
        %v1578 = vld [vmem:[%s10 + $0x68] sm:$0xff]
        %v1579 = vld [vmem:[%s10 + $0x70] sm:$0xff]
        %v1580 = vld [vmem:[%s10 + $0x78] sm:$0xff]
        %v1581 = vld [vmem:[%s10 + $0x80] sm:$0xff]
        %v1582 = vld [vmem:[%s10 + $0x88] sm:$0xff]
        %v1583 = vld [vmem:[%s10 + $0x90] sm:$0xff]
        %v1584 = vld [vmem:[%s10 + $0x98] sm:$0xff]
        %v1585 = vld [vmem:[%s10 + $0xa0] sm:$0xff]
        %v1586 = vld [vmem:[%s10 + $0xa8] sm:$0xff]
        %v1587 = vld [vmem:[%s10 + $0xb0] sm:$0xff]
        %v1588 = vld [vmem:[%s10 + $0xb8] sm:$0xff]
        %v1589 = vld [vmem:[%s10 + $0xc0] sm:$0xff]
        %v1590 = vld [vmem:[%s10 + $0xc8] sm:$0xff]
        %v1591 = vld [vmem:[%s10 + $0xd0] sm:$0xff]
        %v1592 = vld [vmem:[%s10 + $0xd8] sm:$0xff]
        %v1593 = vld [vmem:[%s10 + $0xe0] sm:$0xff]
        %v1594 = vld [vmem:[%s10 + $0xe8] sm:$0xff]
        %v1595 = vld [vmem:[%s10 + $0xf0] sm:$0xff]
        %v1596 = vld [vmem:[%s10 + $0xf8] sm:$0xff]
        %v1597 = vpack.c.bf16 %v1564, %v1563
        %v1598 = vld [vmem:[%s11] sm:$0xf]
        %v1600 = vlaneseq
        %v1601 = vshrl.u32 %v1600, 7
        %v1602 = vsub.s32 0, %v1601
        %v1603 = vrot.slane %v1598, %v1602
        %v1604 = vlaneseq
        %v1605 = vshrl.u32 %v1604, 7
        %v1606 = vsub.s32 1, %v1605
        %v1607 = vrot.slane %v1598, %v1606
        %v1608 = vlaneseq
        %v1609 = vshrl.u32 %v1608, 7
        %v1610 = vsub.s32 2, %v1609
        %v1611 = vrot.slane %v1598, %v1610
        %v1612 = vlaneseq
        %v1613 = vshrl.u32 %v1612, 7
        %v1614 = vsub.s32 3, %v1613
        %v1615 = vrot.slane %v1598, %v1614
        %v1652 = vunpack.c.l.b16 %v1565
        %v1653 = vunpack.c.h.b16 %v1565
        %v1654 = vunpack.c.l.b16 %v1566
        %v1655 = vunpack.c.h.b16 %v1566
        %v1656 = vunpack.c.l.b16 %v1567
        %v1657 = vunpack.c.h.b16 %v1567
        %v1658 = vunpack.c.l.b16 %v1568
        %v1659 = vunpack.c.h.b16 %v1568
        %v1660 = vunpack.c.l.b16 %v1569
        %v1661 = vunpack.c.h.b16 %v1569
        %v1662 = vunpack.c.l.b16 %v1570
        %v1663 = vunpack.c.h.b16 %v1570
        %v1664 = vunpack.c.l.b16 %v1571
        %v1665 = vunpack.c.h.b16 %v1571
        %v1666 = vunpack.c.l.b16 %v1572
        %v1667 = vunpack.c.h.b16 %v1572
        %v1668 = vunpack.c.l.b16 %v1573
        %v1669 = vunpack.c.h.b16 %v1573
        %v1670 = vunpack.c.l.b16 %v1574
        %v1671 = vunpack.c.h.b16 %v1574
        %v1672 = vunpack.c.l.b16 %v1575
        %v1673 = vunpack.c.h.b16 %v1575
        %v1674 = vunpack.c.l.b16 %v1576
        %v1675 = vunpack.c.h.b16 %v1576
        %v1676 = vunpack.c.l.b16 %v1577
        %v1677 = vunpack.c.h.b16 %v1577
        %v1678 = vunpack.c.l.b16 %v1578
        %v1679 = vunpack.c.h.b16 %v1578
        %v1680 = vunpack.c.l.b16 %v1579
        %v1681 = vunpack.c.h.b16 %v1579
        %v1682 = vunpack.c.l.b16 %v1580
        %v1683 = vunpack.c.h.b16 %v1580
        %v1684 = vunpack.c.l.b16 %v1581
        %v1685 = vunpack.c.h.b16 %v1581
        %v1686 = vunpack.c.l.b16 %v1582
        %v1687 = vunpack.c.h.b16 %v1582
        %v1688 = vunpack.c.l.b16 %v1583
        %v1689 = vunpack.c.h.b16 %v1583
        %v1690 = vunpack.c.l.b16 %v1584
        %v1691 = vunpack.c.h.b16 %v1584
        %v1692 = vunpack.c.l.b16 %v1585
        %v1693 = vunpack.c.h.b16 %v1585
        %v1694 = vunpack.c.l.b16 %v1586
        %v1695 = vunpack.c.h.b16 %v1586
        %v1696 = vunpack.c.l.b16 %v1587
        %v1697 = vunpack.c.h.b16 %v1587
        %v1698 = vunpack.c.l.b16 %v1588
        %v1699 = vunpack.c.h.b16 %v1588
        %v1700 = vunpack.c.l.b16 %v1589
        %v1701 = vunpack.c.h.b16 %v1589
        %v1702 = vunpack.c.l.b16 %v1590
        %v1703 = vunpack.c.h.b16 %v1590
        %v1704 = vunpack.c.l.b16 %v1591
        %v1705 = vunpack.c.h.b16 %v1591
        %v1706 = vunpack.c.l.b16 %v1592
        %v1707 = vunpack.c.h.b16 %v1592
        %v1708 = vunpack.c.l.b16 %v1593
        %v1709 = vunpack.c.h.b16 %v1593
        %v1710 = vunpack.c.l.b16 %v1594
        %v1711 = vunpack.c.h.b16 %v1594
        %v1712 = vunpack.c.l.b16 %v1595
        %v1713 = vunpack.c.h.b16 %v1595
        %v1714 = vunpack.c.l.b16 %v1596
        %v1715 = vunpack.c.h.b16 %v1596
        %v1716 = vpack.c.b16 %v1656, %v1652
        %v1717 = vpack.c.b16 %v1657, %v1653
        %v1718 = vpack.c.b16 %v1658, %v1654
        %v1719 = vpack.c.b16 %v1659, %v1655
        %v1720 = vpack.c.b16 %v1664, %v1660
        %v1721 = vpack.c.b16 %v1665, %v1661
        %v1722 = vpack.c.b16 %v1666, %v1662
        %v1723 = vpack.c.b16 %v1667, %v1663
        %v1724 = vpack.c.b16 %v1672, %v1668
        %v1725 = vpack.c.b16 %v1673, %v1669
        %v1726 = vpack.c.b16 %v1674, %v1670
        %v1727 = vpack.c.b16 %v1675, %v1671
        %v1728 = vpack.c.b16 %v1680, %v1676
        %v1729 = vpack.c.b16 %v1681, %v1677
        %v1730 = vpack.c.b16 %v1682, %v1678
        %v1731 = vpack.c.b16 %v1683, %v1679
        %v1732 = vpack.c.b16 %v1688, %v1684
        %v1733 = vpack.c.b16 %v1689, %v1685
        %v1734 = vpack.c.b16 %v1690, %v1686
        %v1735 = vpack.c.b16 %v1691, %v1687
        %v1736 = vpack.c.b16 %v1696, %v1692
        %v1737 = vpack.c.b16 %v1697, %v1693
        %v1738 = vpack.c.b16 %v1698, %v1694
        %v1739 = vpack.c.b16 %v1699, %v1695
        %v1740 = vpack.c.b16 %v1704, %v1700
        %v1741 = vpack.c.b16 %v1705, %v1701
        %v1742 = vpack.c.b16 %v1706, %v1702
        %v1743 = vpack.c.b16 %v1707, %v1703
        %v1744 = vpack.c.b16 %v1712, %v1708
        %v1745 = vpack.c.b16 %v1713, %v1709
        %v1746 = vpack.c.b16 %v1714, %v1710
        %v1747 = vpack.c.b16 %v1715, %v1711
        %1780 = vmatprep.subr.bf16.mxu0 %v1745
        %1781 = vmatpush1.bf16.msra.mxu0 %v1744
        %1782 = vmatprep.subr.bf16.mxu0 %v1741
        %1783 = vmatpush1.bf16.msra.mxu0 %v1740
        %1784 = vmatprep.subr.bf16.mxu0 %v1737
        %1785 = vmatpush1.bf16.msra.mxu0 %v1736
        %1786 = vmatprep.subr.bf16.mxu0 %v1733
        %1787 = vmatpush1.bf16.msra.mxu0 %v1732
        %1788 = vmatprep.subr.bf16.mxu0 %v1729
        %1789 = vmatpush1.bf16.msra.mxu0 %v1728
        %1790 = vmatprep.subr.bf16.mxu0 %v1725
        %1791 = vmatpush1.bf16.msra.mxu0 %v1724
        %1792 = vmatprep.subr.bf16.mxu0 %v1721
        %1793 = vmatpush1.bf16.msra.mxu0 %v1720
        %1794 = vmatprep.subr.bf16.mxu0 %v1717
        %1795 = vmatpush1.bf16.msra.mxu0 %v1716
        %1796 = vmatprep.subr.bf16.mxu0 0
        %1797 = vmatpush2.bf16.msra.mxu0 0
        %1798 = vmatprep.subr.bf16.mxu0 0
        %1799 = vmatpush2.bf16.msra.mxu0 0
        %1800 = vmatprep.subr.bf16.mxu0 0
        %1801 = vmatpush2.bf16.msra.mxu0 0
        %1802 = vmatprep.subr.bf16.mxu0 0
        %1803 = vmatpush2.bf16.msra.mxu0 0
        %1804 = vmatprep.subr.bf16.mxu0 0
        %1805 = vmatpush2.bf16.msra.mxu0 0
        %1806 = vmatprep.subr.bf16.mxu0 0
        %1807 = vmatpush2.bf16.msra.mxu0 0
        %1808 = vmatprep.subr.bf16.mxu0 0
        %1809 = vmatpush2.bf16.msra.mxu0 0
        %1810 = vmatprep.subr.bf16.mxu0 0
        %1811 = vmatpush2.bf16.msra.mxu0 0
        %1812 = vmatprep.mubr.bf16.mxu0 0
        %1813 = vmatmul.mubr.bf16.gmra.mxu0 %v1597
        %v1814 = vpop.f32.mrf.mxu0
        %v1815 = vadd.f32 %v1603, %v1814
        %v1816 = vpop.f32.mrf.mxu0
        %v1817 = vadd.f32 %v1607, %v1816
        %v1818 = vpop.f32.mrf.mxu0
        %v1819 = vadd.f32 %v1603, %v1818
        %v1820 = vpop.f32.mrf.mxu0
        %v1821 = vadd.f32 %v1607, %v1820
        %1822 = vdwg.mxu0
        %1823 = vmatprep.subr.bf16.mxu0 %v1747
        %1824 = vmatpush1.bf16.msra.mxu0 %v1746
        %1825 = vmatprep.subr.bf16.mxu0 %v1743
        %1826 = vmatpush1.bf16.msra.mxu0 %v1742
        %1827 = vmatprep.subr.bf16.mxu0 %v1739
        %1828 = vmatpush1.bf16.msra.mxu0 %v1738
        %1829 = vmatprep.subr.bf16.mxu0 %v1735
        %1830 = vmatpush1.bf16.msra.mxu0 %v1734
        %1831 = vmatprep.subr.bf16.mxu0 %v1731
        %1832 = vmatpush1.bf16.msra.mxu0 %v1730
        %1833 = vmatprep.subr.bf16.mxu0 %v1727
        %1834 = vmatpush1.bf16.msra.mxu0 %v1726
        %1835 = vmatprep.subr.bf16.mxu0 %v1723
        %1836 = vmatpush1.bf16.msra.mxu0 %v1722
        %1837 = vmatprep.subr.bf16.mxu0 %v1719
        %1838 = vmatpush1.bf16.msra.mxu0 %v1718
        %1839 = vmatprep.subr.bf16.mxu0 0
        %1840 = vmatpush2.bf16.msra.mxu0 0
        %1841 = vmatprep.subr.bf16.mxu0 0
        %1842 = vmatpush2.bf16.msra.mxu0 0
        %1843 = vmatprep.subr.bf16.mxu0 0
        %1844 = vmatpush2.bf16.msra.mxu0 0
        %1845 = vmatprep.subr.bf16.mxu0 0
        %1846 = vmatpush2.bf16.msra.mxu0 0
        %1847 = vmatprep.subr.bf16.mxu0 0
        %1848 = vmatpush2.bf16.msra.mxu0 0
        %1849 = vmatprep.subr.bf16.mxu0 0
        %1850 = vmatpush2.bf16.msra.mxu0 0
        %1851 = vmatprep.subr.bf16.mxu0 0
        %1852 = vmatpush2.bf16.msra.mxu0 0
        %1853 = vmatprep.subr.bf16.mxu0 0
        %1854 = vmatpush2.bf16.msra.mxu0 0
        %1855 = vmatprep.mubr.bf16.mxu0 0
        %1856 = vmatmul.mubr.bf16.gmra.mxu0 %v1597
        %v1857 = vpop.f32.mrf.mxu0
        %v1858 = vadd.f32 %v1611, %v1857
        %v1859 = vpop.f32.mrf.mxu0
        %v1860 = vadd.f32 %v1615, %v1859
        %v1861 = vpop.f32.mrf.mxu0
        %v1862 = vadd.f32 %v1611, %v1861
        %v1863 = vpop.f32.mrf.mxu0
        %v1864 = vadd.f32 %v1615, %v1863
        %1865 = vdwg.mxu0
        %v1866 = vmax.f32 %v1815, 0.0
        %v1867 = vmax.f32 %v1817, 0.0
        %v1868 = vmax.f32 %v1858, 0.0
        %v1869 = vmax.f32 %v1860, 0.0
        %v1870 = vmax.f32 %v1819, 0.0
        %v1871 = vmax.f32 %v1821, 0.0
        %v1872 = vmax.f32 %v1862, 0.0
        %v1873 = vmax.f32 %v1864, 0.0
        %v1874 = vld [vmem:[%s12] sm:$0xf]
        %v1875 = vld [vmem:[%s12 + $0x4] sm:$0xf]
        %v1876 = vld [vmem:[%s12 + $0x8] sm:$0xf]
        %v1877 = vld [vmem:[%s12 + $0xc] sm:$0xf]
        %v1878 = vld [vmem:[%s12 + $0x10] sm:$0xf]
        %v1879 = vld [vmem:[%s12 + $0x14] sm:$0xf]
        %v1880 = vld [vmem:[%s12 + $0x18] sm:$0xf]
        %v1881 = vld [vmem:[%s12 + $0x1c] sm:$0xf]
        %v1882 = vld [vmem:[%s12 + $0x20] sm:$0xf]
        %v1883 = vld [vmem:[%s12 + $0x24] sm:$0xf]
        %v1884 = vld [vmem:[%s12 + $0x28] sm:$0xf]
        %v1885 = vld [vmem:[%s12 + $0x2c] sm:$0xf]
        %v1886 = vld [vmem:[%s12 + $0x30] sm:$0xf]
        %v1887 = vld [vmem:[%s12 + $0x34] sm:$0xf]
        %v1888 = vld [vmem:[%s12 + $0x38] sm:$0xf]
        %v1889 = vld [vmem:[%s12 + $0x3c] sm:$0xf]
        %v1890 = vld [vmem:[%s12 + $0x40] sm:$0xf]
        %v1891 = vld [vmem:[%s12 + $0x44] sm:$0xf]
        %v1892 = vld [vmem:[%s12 + $0x48] sm:$0xf]
        %v1893 = vld [vmem:[%s12 + $0x4c] sm:$0xf]
        %v1894 = vld [vmem:[%s12 + $0x50] sm:$0xf]
        %v1895 = vld [vmem:[%s12 + $0x54] sm:$0xf]
        %v1896 = vld [vmem:[%s12 + $0x58] sm:$0xf]
        %v1897 = vld [vmem:[%s12 + $0x5c] sm:$0xf]
        %v1898 = vld [vmem:[%s12 + $0x60] sm:$0xf]
        %v1899 = vld [vmem:[%s12 + $0x64] sm:$0xf]
        %v1900 = vld [vmem:[%s12 + $0x68] sm:$0xf]
        %v1901 = vld [vmem:[%s12 + $0x6c] sm:$0xf]
        %v1902 = vld [vmem:[%s12 + $0x70] sm:$0xf]
        %v1903 = vld [vmem:[%s12 + $0x74] sm:$0xf]
        %v1904 = vld [vmem:[%s12 + $0x78] sm:$0xf]
        %v1905 = vld [vmem:[%s12 + $0x7c] sm:$0xf]
        %v1906 = vld [vmem:[%s12 + $0x80] sm:$0xf]
        %v1907 = vld [vmem:[%s12 + $0x84] sm:$0xf]
        %v1908 = vld [vmem:[%s12 + $0x88] sm:$0xf]
        %v1909 = vld [vmem:[%s12 + $0x8c] sm:$0xf]
        %v1910 = vld [vmem:[%s12 + $0x90] sm:$0xf]
        %v1911 = vld [vmem:[%s12 + $0x94] sm:$0xf]
        %v1912 = vld [vmem:[%s12 + $0x98] sm:$0xf]
        %v1913 = vld [vmem:[%s12 + $0x9c] sm:$0xf]
        %v1914 = vld [vmem:[%s12 + $0xa0] sm:$0xf]
        %v1915 = vld [vmem:[%s12 + $0xa4] sm:$0xf]
        %v1916 = vld [vmem:[%s12 + $0xa8] sm:$0xf]
        %v1917 = vld [vmem:[%s12 + $0xac] sm:$0xf]
        %v1918 = vld [vmem:[%s12 + $0xb0] sm:$0xf]
        %v1919 = vld [vmem:[%s12 + $0xb4] sm:$0xf]
        %v1920 = vld [vmem:[%s12 + $0xb8] sm:$0xf]
        %v1921 = vld [vmem:[%s12 + $0xbc] sm:$0xf]
        %v1922 = vld [vmem:[%s12 + $0xc0] sm:$0xf]
        %v1923 = vld [vmem:[%s12 + $0xc4] sm:$0xf]
        %v1924 = vld [vmem:[%s12 + $0xc8] sm:$0xf]
        %v1925 = vld [vmem:[%s12 + $0xcc] sm:$0xf]
        %v1926 = vld [vmem:[%s12 + $0xd0] sm:$0xf]
        %v1927 = vld [vmem:[%s12 + $0xd4] sm:$0xf]
        %v1928 = vld [vmem:[%s12 + $0xd8] sm:$0xf]
        %v1929 = vld [vmem:[%s12 + $0xdc] sm:$0xf]
        %v1930 = vld [vmem:[%s12 + $0xe0] sm:$0xf]
        %v1931 = vld [vmem:[%s12 + $0xe4] sm:$0xf]
        %v1932 = vld [vmem:[%s12 + $0xe8] sm:$0xf]
        %v1933 = vld [vmem:[%s12 + $0xec] sm:$0xf]
        %v1934 = vld [vmem:[%s12 + $0xf0] sm:$0xf]
        %v1935 = vld [vmem:[%s12 + $0xf4] sm:$0xf]
        %v1936 = vld [vmem:[%s12 + $0xf8] sm:$0xf]
        %v1937 = vld [vmem:[%s12 + $0xfc] sm:$0xf]
        %v1938 = vpack.c.bf16 %v1870, %v1866
        %v1939 = vpack.c.bf16 %v1871, %v1867
        %v1940 = vpack.c.bf16 %v1872, %v1868
        %v1941 = vpack.c.bf16 %v1873, %v1869
        %v1942 = vld [vmem:[%s13] sm:$0x1]
        %v1944 = vlaneseq
        %v1945 = vshrl.u32 %v1944, 7
        %v1946 = vsub.s32 0, %v1945
        %v1947 = vrot.slane %v1942, %v1946
        %v2013 = vunpack.c.l.b16 %v1874
        %v2014 = vunpack.c.l.b16 %v1875
        %v2015 = vunpack.c.l.b16 %v1876
        %v2016 = vunpack.c.l.b16 %v1877
        %v2017 = vunpack.c.l.b16 %v1878
        %v2018 = vunpack.c.l.b16 %v1879
        %v2019 = vunpack.c.l.b16 %v1880
        %v2020 = vunpack.c.l.b16 %v1881
        %v2021 = vunpack.c.l.b16 %v1882
        %v2022 = vunpack.c.l.b16 %v1883
        %v2023 = vunpack.c.l.b16 %v1884
        %v2024 = vunpack.c.l.b16 %v1885
        %v2025 = vunpack.c.l.b16 %v1886
        %v2026 = vunpack.c.l.b16 %v1887
        %v2027 = vunpack.c.l.b16 %v1888
        %v2028 = vunpack.c.l.b16 %v1889
        %v2029 = vunpack.c.l.b16 %v1890
        %v2030 = vunpack.c.l.b16 %v1891
        %v2031 = vunpack.c.l.b16 %v1892
        %v2032 = vunpack.c.l.b16 %v1893
        %v2033 = vunpack.c.l.b16 %v1894
        %v2034 = vunpack.c.l.b16 %v1895
        %v2035 = vunpack.c.l.b16 %v1896
        %v2036 = vunpack.c.l.b16 %v1897
        %v2037 = vunpack.c.l.b16 %v1898
        %v2038 = vunpack.c.l.b16 %v1899
        %v2039 = vunpack.c.l.b16 %v1900
        %v2040 = vunpack.c.l.b16 %v1901
        %v2041 = vunpack.c.l.b16 %v1902
        %v2042 = vunpack.c.l.b16 %v1903
        %v2043 = vunpack.c.l.b16 %v1904
        %v2044 = vunpack.c.l.b16 %v1905
        %v2045 = vunpack.c.l.b16 %v1906
        %v2046 = vunpack.c.l.b16 %v1907
        %v2047 = vunpack.c.l.b16 %v1908
        %v2048 = vunpack.c.l.b16 %v1909
        %v2049 = vunpack.c.l.b16 %v1910
        %v2050 = vunpack.c.l.b16 %v1911
        %v2051 = vunpack.c.l.b16 %v1912
        %v2052 = vunpack.c.l.b16 %v1913
        %v2053 = vunpack.c.l.b16 %v1914
        %v2054 = vunpack.c.l.b16 %v1915
        %v2055 = vunpack.c.l.b16 %v1916
        %v2056 = vunpack.c.l.b16 %v1917
        %v2057 = vunpack.c.l.b16 %v1918
        %v2058 = vunpack.c.l.b16 %v1919
        %v2059 = vunpack.c.l.b16 %v1920
        %v2060 = vunpack.c.l.b16 %v1921
        %v2061 = vunpack.c.l.b16 %v1922
        %v2062 = vunpack.c.l.b16 %v1923
        %v2063 = vunpack.c.l.b16 %v1924
        %v2064 = vunpack.c.l.b16 %v1925
        %v2065 = vunpack.c.l.b16 %v1926
        %v2066 = vunpack.c.l.b16 %v1927
        %v2067 = vunpack.c.l.b16 %v1928
        %v2068 = vunpack.c.l.b16 %v1929
        %v2069 = vunpack.c.l.b16 %v1930
        %v2070 = vunpack.c.l.b16 %v1931
        %v2071 = vunpack.c.l.b16 %v1932
        %v2072 = vunpack.c.l.b16 %v1933
        %v2073 = vunpack.c.l.b16 %v1934
        %v2074 = vunpack.c.l.b16 %v1935
        %v2075 = vunpack.c.l.b16 %v1936
        %v2076 = vunpack.c.l.b16 %v1937
        %v2077 = vpack.c.b16 %v2014, %v2013
        %v2078 = vpack.c.b16 %v2016, %v2015
        %v2079 = vpack.c.b16 %v2018, %v2017
        %v2080 = vpack.c.b16 %v2020, %v2019
        %v2081 = vpack.c.b16 %v2022, %v2021
        %v2082 = vpack.c.b16 %v2024, %v2023
        %v2083 = vpack.c.b16 %v2026, %v2025
        %v2084 = vpack.c.b16 %v2028, %v2027
        %v2085 = vpack.c.b16 %v2030, %v2029
        %v2086 = vpack.c.b16 %v2032, %v2031
        %v2087 = vpack.c.b16 %v2034, %v2033
        %v2088 = vpack.c.b16 %v2036, %v2035
        %v2089 = vpack.c.b16 %v2038, %v2037
        %v2090 = vpack.c.b16 %v2040, %v2039
        %v2091 = vpack.c.b16 %v2042, %v2041
        %v2092 = vpack.c.b16 %v2044, %v2043
        %v2093 = vpack.c.b16 %v2046, %v2045
        %v2094 = vpack.c.b16 %v2048, %v2047
        %v2095 = vpack.c.b16 %v2050, %v2049
        %v2096 = vpack.c.b16 %v2052, %v2051
        %v2097 = vpack.c.b16 %v2054, %v2053
        %v2098 = vpack.c.b16 %v2056, %v2055
        %v2099 = vpack.c.b16 %v2058, %v2057
        %v2100 = vpack.c.b16 %v2060, %v2059
        %v2101 = vpack.c.b16 %v2062, %v2061
        %v2102 = vpack.c.b16 %v2064, %v2063
        %v2103 = vpack.c.b16 %v2066, %v2065
        %v2104 = vpack.c.b16 %v2068, %v2067
        %v2105 = vpack.c.b16 %v2070, %v2069
        %v2106 = vpack.c.b16 %v2072, %v2071
        %v2107 = vpack.c.b16 %v2074, %v2073
        %v2108 = vpack.c.b16 %v2076, %v2075
        %2141 = vmatprep.subr.bf16.mxu0 0
        %2142 = vmatpush1.bf16.msra.mxu0 %v2084
        %2143 = vmatprep.subr.bf16.mxu0 0
        %2144 = vmatpush1.bf16.msra.mxu0 %v2083
        %2145 = vmatprep.subr.bf16.mxu0 0
        %2146 = vmatpush1.bf16.msra.mxu0 %v2082
        %2147 = vmatprep.subr.bf16.mxu0 0
        %2148 = vmatpush1.bf16.msra.mxu0 %v2081
        %2149 = vmatprep.subr.bf16.mxu0 0
        %2150 = vmatpush1.bf16.msra.mxu0 %v2080
        %2151 = vmatprep.subr.bf16.mxu0 0
        %2152 = vmatpush1.bf16.msra.mxu0 %v2079
        %2153 = vmatprep.subr.bf16.mxu0 0
        %2154 = vmatpush1.bf16.msra.mxu0 %v2078
        %2155 = vmatprep.subr.bf16.mxu0 0
        %2156 = vmatpush1.bf16.msra.mxu0 %v2077
        %2157 = vmatprep.subr.bf16.mxu0 0
        %2158 = vmatpush2.bf16.msra.mxu0 %v2092
        %2159 = vmatprep.subr.bf16.mxu0 0
        %2160 = vmatpush2.bf16.msra.mxu0 %v2091
        %2161 = vmatprep.subr.bf16.mxu0 0
        %2162 = vmatpush2.bf16.msra.mxu0 %v2090
        %2163 = vmatprep.subr.bf16.mxu0 0
        %2164 = vmatpush2.bf16.msra.mxu0 %v2089
        %2165 = vmatprep.subr.bf16.mxu0 0
        %2166 = vmatpush2.bf16.msra.mxu0 %v2088
        %2167 = vmatprep.subr.bf16.mxu0 0
        %2168 = vmatpush2.bf16.msra.mxu0 %v2087
        %2169 = vmatprep.subr.bf16.mxu0 0
        %2170 = vmatpush2.bf16.msra.mxu0 %v2086
        %2171 = vmatprep.subr.bf16.mxu0 0
        %2172 = vmatpush2.bf16.msra.mxu0 %v2085
        %2173 = vmatprep.mubr.bf16.mxu0 %v1939
        %2174 = vmatmul.mubr.bf16.gmra.mxu0 %v1938
        %v2175 = vpop.f32.mrf.mxu0
        %v2176 = vadd.f32 %v1947, %v2175
        %v2177 = vpop.f32.mrf.mxu0
        %v2178 = vpop.f32.mrf.mxu0
        %v2179 = vadd.f32 %v1947, %v2178
        %v2180 = vpop.f32.mrf.mxu0
        %2181 = vdwg.mxu0
        %2182 = vmatprep.subr.bf16.mxu0 0
        %2183 = vmatpush1.bf16.msra.mxu0 %v2100
        %2184 = vmatprep.subr.bf16.mxu0 0
        %2185 = vmatpush1.bf16.msra.mxu0 %v2099
        %2186 = vmatprep.subr.bf16.mxu0 0
        %2187 = vmatpush1.bf16.msra.mxu0 %v2098
        %2188 = vmatprep.subr.bf16.mxu0 0
        %2189 = vmatpush1.bf16.msra.mxu0 %v2097
        %2190 = vmatprep.subr.bf16.mxu0 0
        %2191 = vmatpush1.bf16.msra.mxu0 %v2096
        %2192 = vmatprep.subr.bf16.mxu0 0
        %2193 = vmatpush1.bf16.msra.mxu0 %v2095
        %2194 = vmatprep.subr.bf16.mxu0 0
        %2195 = vmatpush1.bf16.msra.mxu0 %v2094
        %2196 = vmatprep.subr.bf16.mxu0 0
        %2197 = vmatpush1.bf16.msra.mxu0 %v2093
        %2198 = vmatprep.subr.bf16.mxu0 0
        %2199 = vmatpush2.bf16.msra.mxu0 %v2108
        %2200 = vmatprep.subr.bf16.mxu0 0
        %2201 = vmatpush2.bf16.msra.mxu0 %v2107
        %2202 = vmatprep.subr.bf16.mxu0 0
        %2203 = vmatpush2.bf16.msra.mxu0 %v2106
        %2204 = vmatprep.subr.bf16.mxu0 0
        %2205 = vmatpush2.bf16.msra.mxu0 %v2105
        %2206 = vmatprep.subr.bf16.mxu0 0
        %2207 = vmatpush2.bf16.msra.mxu0 %v2104
        %2208 = vmatprep.subr.bf16.mxu0 0
        %2209 = vmatpush2.bf16.msra.mxu0 %v2103
        %2210 = vmatprep.subr.bf16.mxu0 0
        %2211 = vmatpush2.bf16.msra.mxu0 %v2102
        %2212 = vmatprep.subr.bf16.mxu0 0
        %2213 = vmatpush2.bf16.msra.mxu0 %v2101
        %2214 = vmatprep.mubr.bf16.mxu0 %v1941
        %2215 = vmatmul.mubr.bf16.gmra.mxu0 %v1940
        %v2216 = vpop.f32.mrf.mxu0
        %v2217 = vadd.f32 %v2176, %v2216
        %v2218 = vpop.f32.mrf.mxu0
        %v2219 = vpop.f32.mrf.mxu0
        %v2220 = vadd.f32 %v2179, %v2219
        %v2221 = vpop.f32.mrf.mxu0
        %2222 = vdwg.mxu0
        %v2223 = vadd.f32 %v1523, %v2217
        %v2224 = vadd.f32 %v1524, %v2220
        %2225 = vst [vmem:[%s485] sm:$0xff] %v2223
        %2226 = vst [vmem:[%s485 + $0x8] sm:$0xff] %v2224
        %s2227 = sand.u32 %s338, 1
        %s2228 = scalar_lea.sflag [#allocation4], %s2227
        %s2229 = sand.u32 %s338, 1
        %s2230 = smul.addr %s2229, 16
        %s2231 = scalar_lea.vmem [#allocation5], %s2230
        // Predicated region
        $region81: #{tpu_custom_call.1} parent=75 // pred_check
          %p2232 = pneg %p348
        $region82: #{tpu_custom_call.1} parent=75 // pred_check_branch
          %2234 = sbr.rel (%p2232) target = $region84
        $region83: #{tpu_custom_call.1} parent=75 // pred_region
          %s2236 = ssub.s32 256, 256
          %2237 = vsyncadd %s2228, %s2236
          %s2238 = smul.addr %s31, 2
          %s2239 = smul.addr %s2238, 128
          %s2240 = scalar_lea.hbm %s14, %s2239
          %s2241 = sshll.u32 %s2231, 4
          %s2242 = int_to_ptr.vmem [resolvable:$true] %s2241
          %2247 = dma.vmem_to_hbm [thread:$0]  %s2242, 256, %s2240, %s2228, 128, 128, 8
        $region84: #{tpu_custom_call.1} parent=75 // pred_fallthru
          _
      $region76: #{tpu_custom_call.1} parent=5 // pred_fallthru
        _
      %p2248 = scmp.le.s32.totalorder 2, %s26
      // Predicated region
      $region85: #{tpu_custom_call.1} parent=5 // pred_check
        %p2249 = pneg %p2248
      $region86: #{tpu_custom_call.1} parent=5 // pred_check_branch
        %2251 = sbr.rel (%p2249) target = $region88
      $region87: #{tpu_custom_call.1} parent=5 // pred_region
        %s2252 = ssub.s32 %s26, 2
        // Predicated region
        $region89: #{tpu_custom_call.1} parent=87 // pred_check
          %p2253 = pneg %p354
        $region90: #{tpu_custom_call.1} parent=87 // pred_check_branch
          %2255 = sbr.rel (%p2253) target = $region92
        $region91: #{tpu_custom_call.1} parent=87 // pred_region
          %s2256 = sand.u32 %s339, 1
          %s2257 = scalar_lea.sflag [#allocation4], %s2256
          %s2258 = sand.u32 %s339, 1
          %s2259 = smul.addr %s2258, 16
          %s2260 = scalar_lea.vmem [#allocation5], %s2259
          %2261 = dma.done %s2257, 256
        $region92: #{tpu_custom_call.1} parent=87 // pred_fallthru
          _
      $region88: #{tpu_custom_call.1} parent=5 // pred_fallthru
        _
    $region6: #{tpu_custom_call.1} parent=1 // loop_footer
      %s30 = sadd.s32 1, %s26
    $region7: #{tpu_custom_call.1} parent=1 // loop_footer_branch
      %25 = sbr.rel target = $region3
    $region8: #{tpu_custom_call.1} parent=1 // loop_exit
      _
    %2262 = vsyncpa [#allocation3], 1
    %s2263 = scalar_lea.sflag [#allocation3], 1
    %2264 = vsyncpa %s2263, 1
    %2265 = vsyncpa [#allocation4], 1
    %s2266 = scalar_lea.sflag [#allocation4], 1
    %2267 = vsyncpa %s2266, 1

</llo_original>
